<compile_context>
chip_gen: v6e
topology: v6e:2x2x1
jax: 0.10.0
libtpu: 0.0.40
codegen_flags: <defaults>
</compile_context>

<pallas_src>
import functools

import jax
import jax.numpy as jnp
from jax.experimental import pallas as pl
from jax.experimental.pallas import tpu as pltpu

LN_EPS = 1e-5    # nn.LayerNorm default
L2_EPS = 1e-12   # F.normalize default

_PARAM_ORDER = ('pos', 'in_w', 'in_b', 'out_w', 'out_b', 'w1', 'b1', 'w2',
                'b2', 'ln1_g', 'ln1_b', 'ln2_g', 'ln2_b', 'fin_g', 'fin_b')


# ----------------------------------------------------------------- kernel ---
def _transformer_branch_kernel(
        x_ref, pos_ref,
        in_w_ref, in_b_ref, out_w_ref, out_b_ref,
        w1_ref, b1_ref, w2_ref, b2_ref,
        ln1_g_ref, ln1_b_ref, ln2_g_ref, ln2_b_ref,
        fin_g_ref, fin_b_ref,
        o_ref,
        *, B, L, D, nhead, num_layers):
    """Whole Transformer branch fused: returns the L2-normalized middle token."""
    dh = D // nhead
    scale = 1.0 / float(dh) ** 0.5

    def layer_norm(x, g, b):
        # LayerNorm over last dim, f32 statistics (PyTorch eps=1e-5).
        mu = jnp.mean(x, axis=-1, keepdims=True)
        xc = x - mu
        var = jnp.mean(xc * xc, axis=-1, keepdims=True)
        return xc * jax.lax.rsqrt(var + LN_EPS) * g + b

    # positional embedding (dropout is identity at inference)
    x = x_ref[...] + pos_ref[...][None, :, :]          # (B, L, D)
    x = x.reshape(B * L, D)

    for i in range(num_layers):                         # static unrolled loop
        # ---- self-attention ------------------------------------------------
        qkv = (jnp.dot(x, in_w_ref[i], preferred_element_type=jnp.float32)
               + in_b_ref[i])                           # (B*L, 3D)
        qkv = qkv.reshape(B, L, 3 * D)

        heads = []
        for h in range(nhead):                          # static head split
            q_h = qkv[:, :, h * dh:(h + 1) * dh] * scale            # (B, L, dh)
            k_h = qkv[:, :, D + h * dh:D + (h + 1) * dh]            # (B, L, dh)
            v_h = qkv[:, :, 2 * D + h * dh:2 * D + (h + 1) * dh]    # (B, L, dh)
            s = jnp.einsum('bqd,bkd->bqk', q_h, k_h,
                           preferred_element_type=jnp.float32)      # (B, L, L)
            s = s - jnp.max(s, axis=-1, keepdims=True)
            p = jnp.exp(s)
            p = p * pl.reciprocal(jnp.sum(p, axis=-1, keepdims=True),
                                  approx=True)
            heads.append(jnp.einsum('bqk,bkd->bqd', p, v_h,
                                    preferred_element_type=jnp.float32))
        attn = jnp.concatenate(heads, axis=-1).reshape(B * L, D)
        attn = (jnp.dot(attn, out_w_ref[i], preferred_element_type=jnp.float32)
                + out_b_ref[i])

        # ---- post-norm residual block 1 -------------------------------------
        x = layer_norm(x + attn, ln1_g_ref[i], ln1_b_ref[i])

        # ---- feed-forward (linear1 -> relu -> linear2) -----------------------
        hdd = jnp.maximum(
            jnp.dot(x, w1_ref[i], preferred_element_type=jnp.float32)
            + b1_ref[i], 0.0)
        ff = (jnp.dot(hdd, w2_ref[i], preferred_element_type=jnp.float32)
              + b2_ref[i])

        # ---- post-norm residual block 2 -------------------------------------
        x = layer_norm(x + ff, ln2_g_ref[i], ln2_b_ref[i])

    # final LayerNorm of nn.TransformerEncoder
    x = layer_norm(x, fin_g_ref[...], fin_b_ref[...])   # (B*L, D)

    # middle-token select + F.normalize(p=2, dim=1)
    mid = x.reshape(B, L, D)[:, L // 2, :]               # (B, D)
    sumsq = jnp.sum(mid * mid, axis=-1, keepdims=True)
    o_ref[...] = mid * jax.lax.rsqrt(jnp.maximum(sumsq, L2_EPS * L2_EPS))


# ---------------------------------------------------------------- wrappers ---
def transformer_branch_embed(x, params, meta):
    """One fused pallas_call: (B, L, D) -> L2-normalized middle token (B, D)."""
    B, L, D = x.shape
    kernel = functools.partial(
        _transformer_branch_kernel, B=B, L=L, D=D,
        nhead=meta['nhead'], num_layers=meta['num_layers'])
    args = (x,) + tuple(params[k] for k in _PARAM_ORDER)
    return pl.pallas_call(
        kernel,
        out_shape=jax.ShapeDtypeStruct((B, D), jnp.float32),
        in_specs=[pl.BlockSpec(memory_space=pltpu.MemorySpace.VMEM)] * len(args),
        out_specs=pl.BlockSpec(memory_space=pltpu.MemorySpace.VMEM),
    )(*args)


def _stacked_spec(arr):
    """BlockSpec selecting one branch along the leading stacked axis."""
    nd = arr.ndim
    return pl.BlockSpec(
        (None,) + tuple(arr.shape[1:]),
        lambda b, _nd=nd: (b,) + (0,) * (_nd - 1))


def transformer_branches_embed_stacked(x2, params2, meta):
    """Both branches (text+video) in ONE pallas_call with a parallel grid=(2,).

    x2: (2, B, L, D); every entry of params2 has a leading axis of size 2.
    Returns (2, B, D).  On v7x the two grid steps shard across TensorCores.
    """
    n_br, B, L, D = x2.shape
    kernel = functools.partial(
        _transformer_branch_kernel, B=B, L=L, D=D,
        nhead=meta['nhead'], num_layers=meta['num_layers'])
    args = (x2,) + tuple(params2[k] for k in _PARAM_ORDER)
    return pl.pallas_call(
        kernel,
        out_shape=jax.ShapeDtypeStruct((n_br, B, D), jnp.float32),
        grid=(n_br,),
        in_specs=[_stacked_spec(a) for a in args],
        out_specs=pl.BlockSpec((None, B, D), lambda b: (b, 0, 0)),
        compiler_params=pltpu.CompilerParams(
            dimension_semantics=("parallel",)),
    )(*args)


def _configs_match(m1, m2):
    return all(m1[k] == m2[k]
               for k in ('nhead', 'num_layers', 'length', 'd_model', 'dim_ff'))


def contra_forward(text_params, video_params, narration, video_emb, branch,
                   mask=None, *, text_meta, video_meta):
    # TODO(synk): attention mask support (ConTraModel callers pass mask=None).
    if mask is not None:
        raise NotImplementedError("attention mask is not supported")
    B = video_emb.shape[0]
    if branch == 'all':
        t_x = narration.reshape(B, text_meta['length'], -1)
        v_x = video_emb.reshape(B, video_meta['length'], -1)
        if _configs_match(text_meta, video_meta):
            x2 = jnp.stack([t_x, v_x])                               # (2,B,L,D)
            params2 = {k: jnp.stack([text_params[k], video_params[k]])
                       for k in _PARAM_ORDER}
            out = transformer_branches_embed_stacked(x2, params2, text_meta)
            return out[0], out[1]
        t = transformer_branch_embed(t_x, text_params, text_meta)
        v = transformer_branch_embed(v_x, video_params, video_meta)
        return t, v
    elif branch == 'video':
        return transformer_branch_embed(
            video_emb.reshape(B, video_meta['length'], -1), video_params, video_meta)
    elif branch == 'text':
        return transformer_branch_embed(
            narration.reshape(B, text_meta['length'], -1), text_params, text_meta)
    raise ValueError(f"unknown branch {branch!r}")


# ------------------------------------------------------------------ params ---
def init_transformer_params(key, d_model, nhead, dim_ff, num_layers, length):
    """Weights stored pre-transposed as (Din, Dout), stacked over layers."""
    keys = jax.random.split(key, num_layers + 1)
    pos = 0.001 * jax.random.normal(keys[0], (length, d_model), jnp.float32)
    in_w, out_w, w1, w2 = [], [], [], []
    for i in range(num_layers):
        lk = jax.random.split(keys[i + 1], 4)
        in_w.append(0.02 * jax.random.normal(lk[0], (d_model, 3 * d_model), jnp.float32))
        out_w.append(0.02 * jax.random.normal(lk[1], (d_model, d_model), jnp.float32))
        w1.append(0.02 * jax.random.normal(lk[2], (d_model, dim_ff), jnp.float32))
        w2.append(0.02 * jax.random.normal(lk[3], (dim_ff, d_model), jnp.float32))
    params = dict(
        pos=pos,
        in_w=jnp.stack(in_w),                                        # (nl, D, 3D)
        in_b=jnp.zeros((num_layers, 1, 3 * d_model), jnp.float32),
        out_w=jnp.stack(out_w),                                      # (nl, D, D)
        out_b=jnp.zeros((num_layers, 1, d_model), jnp.float32),
        w1=jnp.stack(w1),                                            # (nl, D, dff)
        b1=jnp.zeros((num_layers, 1, dim_ff), jnp.float32),
        w2=jnp.stack(w2),                                            # (nl, dff, D)
        b2=jnp.zeros((num_layers, 1, d_model), jnp.float32),
        ln1_g=jnp.ones((num_layers, 1, d_model), jnp.float32),
        ln1_b=jnp.zeros((num_layers, 1, d_model), jnp.float32),
        ln2_g=jnp.ones((num_layers, 1, d_model), jnp.float32),
        ln2_b=jnp.zeros((num_layers, 1, d_model), jnp.float32),
        fin_g=jnp.ones((1, d_model), jnp.float32),
        fin_b=jnp.zeros((1, d_model), jnp.float32),
    )
    meta = dict(nhead=nhead, num_layers=num_layers, length=length,
                d_model=d_model, dim_ff=dim_ff)
    return params, meta


# -------------------------------------------------------- pure-JAX reference ---
def _ref_layer_norm(x, g, b):
    mu = jnp.mean(x, axis=-1, keepdims=True)
    xc = x - mu
    var = jnp.mean(xc * xc, axis=-1, keepdims=True)
    return xc * jax.lax.rsqrt(var + LN_EPS) * g + b


def _reference_branch(x, params, meta):
    nhead, num_layers = meta['nhead'], meta['num_layers']
    B, L, D = x.shape
    dh = D // nhead
    x = (x + params['pos'][None]).reshape(B * L, D)
    for i in range(num_layers):
        qkv = (x @ params['in_w'][i] + params['in_b'][i]).reshape(B, L, 3, nhead, dh)
        q = qkv[:, :, 0].transpose(0, 2, 1, 3) / jnp.sqrt(float(dh))
        k = qkv[:, :, 1].transpose(0, 2, 1, 3)
        v = qkv[:, :, 2].transpose(0, 2, 1, 3)
        p = jax.nn.softmax(jnp.einsum('bhqd,bhkd->bhqk', q, k), axis=-1)
        o = jnp.einsum('bhqk,bhkd->bhqd', p, v).transpose(0, 2, 1, 3).reshape(B * L, D)
        attn = o @ params['out_w'][i] + params['out_b'][i]
        x = _ref_layer_norm(x + attn, params['ln1_g'][i], params['ln1_b'][i])
        h = jax.nn.relu(x @ params['w1'][i] + params['b1'][i])
        ff = h @ params['w2'][i] + params['b2'][i]
        x = _ref_layer_norm(x + ff, params['ln2_g'][i], params['ln2_b'][i])
    x = _ref_layer_norm(x, params['fin_g'], params['fin_b'])
    mid = x.reshape(B, L, D)[:, L // 2]
    n = jnp.sqrt(jnp.sum(mid * mid, axis=-1, keepdims=True))
    return mid / jnp.maximum(n, L2_EPS)


# -------------------------------------------------------------------- main ---
if __name__ == "__main__":
    B = 2
    embd_dim = 32
    nhead_text = nhead_video = 4
    dim_ff_text = dim_ff_video = 64
    nlayer_text = nlayer_video = 2
    length_text = length_video = 8

    key = jax.random.PRNGKey(0)
    k_text, k_video, k_nar, k_vid = jax.random.split(key, 4)

    text_params, text_meta = init_transformer_params(
        k_text, embd_dim, nhead_text, dim_ff_text, nlayer_text, length_text)
    video_params, video_meta = init_transformer_params(
        k_video, embd_dim, nhead_video, dim_ff_video, nlayer_video, length_video)

    narration = jax.random.normal(k_nar, (B, length_text, embd_dim), jnp.float32)
    video_emb = jax.random.normal(k_vid, (B, length_video, embd_dim), jnp.float32)

    fwd = jax.jit(
        functools.partial(contra_forward, text_meta=text_meta, video_meta=video_meta),
        static_argnames=('branch',))

    # 'all' exercises the stacked (single-launch, megacore-parallel) path.
    text_out, video_out = fwd(text_params, video_params, narration, video_emb,
                              branch='all')
    # single-branch paths (separate fused calls)
    text_only = fwd(text_params, video_params, narration, video_emb, branch='text')
    video_only = fwd(text_params, video_params, narration, video_emb, branch='video')
    jax.block_until_ready((text_out, video_out, text_only, video_only))

    assert text_out.shape == (B, embd_dim) and video_out.shape == (B, embd_dim)
    assert bool(jnp.all(jnp.isfinite(text_out))) and bool(jnp.all(jnp.isfinite(video_out)))

    # correctness vs. pure-JAX reference (approx reciprocal -> loose tolerance)
    t_ref = _reference_branch(narration, text_params, text_meta)
    v_ref = _reference_branch(video_emb, video_params, video_meta)
    assert bool(jnp.allclose(text_out, t_ref, rtol=2e-2, atol=2e-2))
    assert bool(jnp.allclose(video_out, v_ref, rtol=2e-2, atol=2e-2))
    assert bool(jnp.allclose(text_only, t_ref, rtol=2e-2, atol=2e-2))
    assert bool(jnp.allclose(video_only, v_ref, rtol=2e-2, atol=2e-2))
    # stacked path and single-branch path agree with each other
    assert bool(jnp.allclose(text_out, text_only, rtol=1e-3, atol=1e-3))
    assert bool(jnp.allclose(video_out, video_only, rtol=1e-3, atol=1e-3))

    print("KERNEL_OK")
</pallas_src>

<mosaic_0001>
module attributes {stable_mosaic.version = 11 : i64} {
  func.func @_transformer_branch_kernel(%arg0: i32, %arg1: memref<1x2x8x32xf32, #tpu.memory_space<vmem>>, %arg2: memref<1x8x32xf32, #tpu.memory_space<vmem>>, %arg3: memref<1x2x32x96xf32, #tpu.memory_space<vmem>>, %arg4: memref<1x2x1x96xf32, #tpu.memory_space<vmem>>, %arg5: memref<1x2x32x32xf32, #tpu.memory_space<vmem>>, %arg6: memref<1x2x1x32xf32, #tpu.memory_space<vmem>>, %arg7: memref<1x2x32x64xf32, #tpu.memory_space<vmem>>, %arg8: memref<1x2x1x64xf32, #tpu.memory_space<vmem>>, %arg9: memref<1x2x64x32xf32, #tpu.memory_space<vmem>>, %arg10: memref<1x2x1x32xf32, #tpu.memory_space<vmem>>, %arg11: memref<1x2x1x32xf32, #tpu.memory_space<vmem>>, %arg12: memref<1x2x1x32xf32, #tpu.memory_space<vmem>>, %arg13: memref<1x2x1x32xf32, #tpu.memory_space<vmem>>, %arg14: memref<1x2x1x32xf32, #tpu.memory_space<vmem>>, %arg15: memref<1x1x32xf32, #tpu.memory_space<vmem>>, %arg16: memref<1x1x32xf32, #tpu.memory_space<vmem>>, %arg17: memref<1x2x32xf32, #tpu.memory_space<vmem>>) attributes {dimension_semantics = [#tpu.dimension_semantics<parallel>], iteration_bounds = array<i64: 2>, scalar_prefetch = 0 : i64, scratch_operands = 0 : i64, tpu.core_type = #tpu.core_type<tc>, window_params = [{transform_indices = @transform_0, window_bounds = array<i64: 1, 2, 8, 32>}, {transform_indices = @transform_1, window_bounds = array<i64: 1, 8, 32>}, {transform_indices = @transform_2, window_bounds = array<i64: 1, 2, 32, 96>}, {transform_indices = @transform_3, window_bounds = array<i64: 1, 2, 1, 96>}, {transform_indices = @transform_4, window_bounds = array<i64: 1, 2, 32, 32>}, {transform_indices = @transform_5, window_bounds = array<i64: 1, 2, 1, 32>}, {transform_indices = @transform_6, window_bounds = array<i64: 1, 2, 32, 64>}, {transform_indices = @transform_7, window_bounds = array<i64: 1, 2, 1, 64>}, {transform_indices = @transform_8, window_bounds = array<i64: 1, 2, 64, 32>}, {transform_indices = @transform_9, window_bounds = array<i64: 1, 2, 1, 32>}, {transform_indices = @transform_10, window_bounds = array<i64: 1, 2, 1, 32>}, {transform_indices = @transform_11, window_bounds = array<i64: 1, 2, 1, 32>}, {transform_indices = @transform_12, window_bounds = array<i64: 1, 2, 1, 32>}, {transform_indices = @transform_13, window_bounds = array<i64: 1, 2, 1, 32>}, {transform_indices = @transform_14, window_bounds = array<i64: 1, 1, 32>}, {transform_indices = @transform_15, window_bounds = array<i64: 1, 1, 32>}, {transform_indices = @transform_16, window_bounds = array<i64: 1, 2, 32>}]} {
    %c0 = arith.constant 0 : index
    %c0_0 = arith.constant 0 : index
    %c0_1 = arith.constant 0 : index
    %c0_2 = arith.constant 0 : index
    %0 = vector.load %arg1[%c0, %c0_0, %c0_1, %c0_2] : memref<1x2x8x32xf32, #tpu.memory_space<vmem>>, vector<1x2x8x32xf32>
    %1 = vector.shape_cast %0 : vector<1x2x8x32xf32> to vector<2x8x32xf32>
    %c0_3 = arith.constant 0 : index
    %c0_4 = arith.constant 0 : index
    %c0_5 = arith.constant 0 : index
    %2 = vector.load %arg2[%c0_3, %c0_4, %c0_5] : memref<1x8x32xf32, #tpu.memory_space<vmem>>, vector<1x8x32xf32>
    %3 = vector.shape_cast %2 : vector<1x8x32xf32> to vector<8x32xf32>
    %4 = vector.shape_cast %3 : vector<8x32xf32> to vector<1x8x32xf32>
    %5 = vector.broadcast %4 : vector<1x8x32xf32> to vector<2x8x32xf32>
    %6 = arith.addf %1, %5 : vector<2x8x32xf32>
    %7 = vector.shape_cast %6 : vector<2x8x32xf32> to vector<16x32xf32>
    %c0_6 = arith.constant 0 : index
    %c0_7 = arith.constant 0 : index
    %c0_8 = arith.constant 0 : index
    %c0_9 = arith.constant 0 : index
    %8 = vector.load %arg3[%c0_6, %c0_7, %c0_8, %c0_9] : memref<1x2x32x96xf32, #tpu.memory_space<vmem>>, vector<1x1x32x96xf32>
    %9 = vector.shape_cast %8 : vector<1x1x32x96xf32> to vector<32x96xf32>
    %cst = arith.constant dense<0.000000e+00> : vector<16x96xf32>
    %10 = tpu.matmul %7, %9, %cst {dimension_numbers = #tpu.dot_dimension_numbers<[1], [0], [0], [1], [0, 0, 1, 1], [], []>} : vector<16x32xf32>, vector<32x96xf32>, vector<16x96xf32> -> vector<16x96xf32>
    %c0_10 = arith.constant 0 : index
    %c0_11 = arith.constant 0 : index
    %c0_12 = arith.constant 0 : index
    %c0_13 = arith.constant 0 : index
    %11 = vector.load %arg4[%c0_10, %c0_11, %c0_12, %c0_13] : memref<1x2x1x96xf32, #tpu.memory_space<vmem>>, vector<1x1x1x96xf32>
    %12 = vector.shape_cast %11 : vector<1x1x1x96xf32> to vector<1x96xf32>
    %13 = vector.broadcast %12 : vector<1x96xf32> to vector<16x96xf32>
    %14 = arith.addf %10, %13 : vector<16x96xf32>
    %15 = vector.shape_cast %14 : vector<16x96xf32> to vector<2x8x96xf32>
    %16 = vector.extract_strided_slice %15 {offsets = [0, 0, 0], sizes = [2, 8, 8], strides = [1, 1, 1]} : vector<2x8x96xf32> to vector<2x8x8xf32>
    %cst_14 = arith.constant 0.353553385 : f32
    %17 = vector.broadcast %cst_14 : f32 to vector<2x8x8xf32>
    %18 = arith.mulf %16, %17 : vector<2x8x8xf32>
    %19 = vector.extract_strided_slice %15 {offsets = [0, 0, 32], sizes = [2, 8, 8], strides = [1, 1, 1]} : vector<2x8x96xf32> to vector<2x8x8xf32>
    %20 = vector.extract_strided_slice %15 {offsets = [0, 0, 64], sizes = [2, 8, 8], strides = [1, 1, 1]} : vector<2x8x96xf32> to vector<2x8x8xf32>
    "tpu.trace_start"() <{level = 10 : i32, message = "bqd,bkd->bqk"}> : () -> ()
    %cst_15 = arith.constant dense<0.000000e+00> : vector<2x8x8xf32>
    %21 = tpu.matmul %18, %19, %cst_15 {dimension_numbers = #tpu.dot_dimension_numbers<[2], [2], [1], [1], [0, 0, 0, 1, 1, 1], [0], [0]>} : vector<2x8x8xf32>, vector<2x8x8xf32>, vector<2x8x8xf32> -> vector<2x8x8xf32>
    "tpu.trace_stop"() : () -> ()
    %cst_16 = arith.constant dense<0xFF800000> : vector<2x8xf32>
    %22 = vector.multi_reduction <maximumf>, %21, %cst_16 [2] : vector<2x8x8xf32> to vector<2x8xf32>
    %23 = vector.shape_cast %22 : vector<2x8xf32> to vector<2x8x1xf32>
    %24 = vector.broadcast %23 : vector<2x8x1xf32> to vector<2x8x8xf32>
    %25 = arith.subf %21, %24 : vector<2x8x8xf32>
    %26 = math.exp %25 : vector<2x8x8xf32>
    %cst_17 = arith.constant dense<0.000000e+00> : vector<2x8xf32>
    %27 = vector.multi_reduction <add>, %26, %cst_17 [2] : vector<2x8x8xf32> to vector<2x8xf32>
    %28 = vector.shape_cast %27 : vector<2x8xf32> to vector<2x8x1xf32>
    %29 = tpu.reciprocal %28 {approx = true} : vector<2x8x1xf32> -> vector<2x8x1xf32>
    %30 = vector.broadcast %29 : vector<2x8x1xf32> to vector<2x8x8xf32>
    %31 = arith.mulf %26, %30 : vector<2x8x8xf32>
    "tpu.trace_start"() <{level = 10 : i32, message = "bqk,bkd->bqd"}> : () -> ()
    %cst_18 = arith.constant dense<0.000000e+00> : vector<2x8x8xf32>
    %32 = tpu.matmul %31, %20, %cst_18 {dimension_numbers = #tpu.dot_dimension_numbers<[2], [1], [1], [2], [0, 0, 0, 1, 1, 2], [0], [0]>} : vector<2x8x8xf32>, vector<2x8x8xf32>, vector<2x8x8xf32> -> vector<2x8x8xf32>
    "tpu.trace_stop"() : () -> ()
    %33 = vector.extract_strided_slice %15 {offsets = [0, 0, 8], sizes = [2, 8, 8], strides = [1, 1, 1]} : vector<2x8x96xf32> to vector<2x8x8xf32>
    %cst_19 = arith.constant 0.353553385 : f32
    %34 = vector.broadcast %cst_19 : f32 to vector<2x8x8xf32>
    %35 = arith.mulf %33, %34 : vector<2x8x8xf32>
    %36 = vector.extract_strided_slice %15 {offsets = [0, 0, 40], sizes = [2, 8, 8], strides = [1, 1, 1]} : vector<2x8x96xf32> to vector<2x8x8xf32>
    %37 = vector.extract_strided_slice %15 {offsets = [0, 0, 72], sizes = [2, 8, 8], strides = [1, 1, 1]} : vector<2x8x96xf32> to vector<2x8x8xf32>
    "tpu.trace_start"() <{level = 10 : i32, message = "bqd,bkd->bqk"}> : () -> ()
    %cst_20 = arith.constant dense<0.000000e+00> : vector<2x8x8xf32>
    %38 = tpu.matmul %35, %36, %cst_20 {dimension_numbers = #tpu.dot_dimension_numbers<[2], [2], [1], [1], [0, 0, 0, 1, 1, 1], [0], [0]>} : vector<2x8x8xf32>, vector<2x8x8xf32>, vector<2x8x8xf32> -> vector<2x8x8xf32>
    "tpu.trace_stop"() : () -> ()
    %cst_21 = arith.constant dense<0xFF800000> : vector<2x8xf32>
    %39 = vector.multi_reduction <maximumf>, %38, %cst_21 [2] : vector<2x8x8xf32> to vector<2x8xf32>
    %40 = vector.shape_cast %39 : vector<2x8xf32> to vector<2x8x1xf32>
    %41 = vector.broadcast %40 : vector<2x8x1xf32> to vector<2x8x8xf32>
    %42 = arith.subf %38, %41 : vector<2x8x8xf32>
    %43 = math.exp %42 : vector<2x8x8xf32>
    %cst_22 = arith.constant dense<0.000000e+00> : vector<2x8xf32>
    %44 = vector.multi_reduction <add>, %43, %cst_22 [2] : vector<2x8x8xf32> to vector<2x8xf32>
    %45 = vector.shape_cast %44 : vector<2x8xf32> to vector<2x8x1xf32>
    %46 = tpu.reciprocal %45 {approx = true} : vector<2x8x1xf32> -> vector<2x8x1xf32>
    %47 = vector.broadcast %46 : vector<2x8x1xf32> to vector<2x8x8xf32>
    %48 = arith.mulf %43, %47 : vector<2x8x8xf32>
    "tpu.trace_start"() <{level = 10 : i32, message = "bqk,bkd->bqd"}> : () -> ()
    %cst_23 = arith.constant dense<0.000000e+00> : vector<2x8x8xf32>
    %49 = tpu.matmul %48, %37, %cst_23 {dimension_numbers = #tpu.dot_dimension_numbers<[2], [1], [1], [2], [0, 0, 0, 1, 1, 2], [0], [0]>} : vector<2x8x8xf32>, vector<2x8x8xf32>, vector<2x8x8xf32> -> vector<2x8x8xf32>
    "tpu.trace_stop"() : () -> ()
    %50 = vector.extract_strided_slice %15 {offsets = [0, 0, 16], sizes = [2, 8, 8], strides = [1, 1, 1]} : vector<2x8x96xf32> to vector<2x8x8xf32>
    %cst_24 = arith.constant 0.353553385 : f32
    %51 = vector.broadcast %cst_24 : f32 to vector<2x8x8xf32>
    %52 = arith.mulf %50, %51 : vector<2x8x8xf32>
    %53 = vector.extract_strided_slice %15 {offsets = [0, 0, 48], sizes = [2, 8, 8], strides = [1, 1, 1]} : vector<2x8x96xf32> to vector<2x8x8xf32>
    %54 = vector.extract_strided_slice %15 {offsets = [0, 0, 80], sizes = [2, 8, 8], strides = [1, 1, 1]} : vector<2x8x96xf32> to vector<2x8x8xf32>
    "tpu.trace_start"() <{level = 10 : i32, message = "bqd,bkd->bqk"}> : () -> ()
    %cst_25 = arith.constant dense<0.000000e+00> : vector<2x8x8xf32>
    %55 = tpu.matmul %52, %53, %cst_25 {dimension_numbers = #tpu.dot_dimension_numbers<[2], [2], [1], [1], [0, 0, 0, 1, 1, 1], [0], [0]>} : vector<2x8x8xf32>, vector<2x8x8xf32>, vector<2x8x8xf32> -> vector<2x8x8xf32>
    "tpu.trace_stop"() : () -> ()
    %cst_26 = arith.constant dense<0xFF800000> : vector<2x8xf32>
    %56 = vector.multi_reduction <maximumf>, %55, %cst_26 [2] : vector<2x8x8xf32> to vector<2x8xf32>
    %57 = vector.shape_cast %56 : vector<2x8xf32> to vector<2x8x1xf32>
    %58 = vector.broadcast %57 : vector<2x8x1xf32> to vector<2x8x8xf32>
    %59 = arith.subf %55, %58 : vector<2x8x8xf32>
    %60 = math.exp %59 : vector<2x8x8xf32>
    %cst_27 = arith.constant dense<0.000000e+00> : vector<2x8xf32>
    %61 = vector.multi_reduction <add>, %60, %cst_27 [2] : vector<2x8x8xf32> to vector<2x8xf32>
    %62 = vector.shape_cast %61 : vector<2x8xf32> to vector<2x8x1xf32>
    %63 = tpu.reciprocal %62 {approx = true} : vector<2x8x1xf32> -> vector<2x8x1xf32>
    %64 = vector.broadcast %63 : vector<2x8x1xf32> to vector<2x8x8xf32>
    %65 = arith.mulf %60, %64 : vector<2x8x8xf32>
    "tpu.trace_start"() <{level = 10 : i32, message = "bqk,bkd->bqd"}> : () -> ()
    %cst_28 = arith.constant dense<0.000000e+00> : vector<2x8x8xf32>
    %66 = tpu.matmul %65, %54, %cst_28 {dimension_numbers = #tpu.dot_dimension_numbers<[2], [1], [1], [2], [0, 0, 0, 1, 1, 2], [0], [0]>} : vector<2x8x8xf32>, vector<2x8x8xf32>, vector<2x8x8xf32> -> vector<2x8x8xf32>
    "tpu.trace_stop"() : () -> ()
    %67 = vector.extract_strided_slice %15 {offsets = [0, 0, 24], sizes = [2, 8, 8], strides = [1, 1, 1]} : vector<2x8x96xf32> to vector<2x8x8xf32>
    %cst_29 = arith.constant 0.353553385 : f32
    %68 = vector.broadcast %cst_29 : f32 to vector<2x8x8xf32>
    %69 = arith.mulf %67, %68 : vector<2x8x8xf32>
    %70 = vector.extract_strided_slice %15 {offsets = [0, 0, 56], sizes = [2, 8, 8], strides = [1, 1, 1]} : vector<2x8x96xf32> to vector<2x8x8xf32>
    %71 = vector.extract_strided_slice %15 {offsets = [0, 0, 88], sizes = [2, 8, 8], strides = [1, 1, 1]} : vector<2x8x96xf32> to vector<2x8x8xf32>
    "tpu.trace_start"() <{level = 10 : i32, message = "bqd,bkd->bqk"}> : () -> ()
    %cst_30 = arith.constant dense<0.000000e+00> : vector<2x8x8xf32>
    %72 = tpu.matmul %69, %70, %cst_30 {dimension_numbers = #tpu.dot_dimension_numbers<[2], [2], [1], [1], [0, 0, 0, 1, 1, 1], [0], [0]>} : vector<2x8x8xf32>, vector<2x8x8xf32>, vector<2x8x8xf32> -> vector<2x8x8xf32>
    "tpu.trace_stop"() : () -> ()
    %cst_31 = arith.constant dense<0xFF800000> : vector<2x8xf32>
    %73 = vector.multi_reduction <maximumf>, %72, %cst_31 [2] : vector<2x8x8xf32> to vector<2x8xf32>
    %74 = vector.shape_cast %73 : vector<2x8xf32> to vector<2x8x1xf32>
    %75 = vector.broadcast %74 : vector<2x8x1xf32> to vector<2x8x8xf32>
    %76 = arith.subf %72, %75 : vector<2x8x8xf32>
    %77 = math.exp %76 : vector<2x8x8xf32>
    %cst_32 = arith.constant dense<0.000000e+00> : vector<2x8xf32>
    %78 = vector.multi_reduction <add>, %77, %cst_32 [2] : vector<2x8x8xf32> to vector<2x8xf32>
    %79 = vector.shape_cast %78 : vector<2x8xf32> to vector<2x8x1xf32>
    %80 = tpu.reciprocal %79 {approx = true} : vector<2x8x1xf32> -> vector<2x8x1xf32>
    %81 = vector.broadcast %80 : vector<2x8x1xf32> to vector<2x8x8xf32>
    %82 = arith.mulf %77, %81 : vector<2x8x8xf32>
    "tpu.trace_start"() <{level = 10 : i32, message = "bqk,bkd->bqd"}> : () -> ()
    %cst_33 = arith.constant dense<0.000000e+00> : vector<2x8x8xf32>
    %83 = tpu.matmul %82, %71, %cst_33 {dimension_numbers = #tpu.dot_dimension_numbers<[2], [1], [1], [2], [0, 0, 0, 1, 1, 2], [0], [0]>} : vector<2x8x8xf32>, vector<2x8x8xf32>, vector<2x8x8xf32> -> vector<2x8x8xf32>
    "tpu.trace_stop"() : () -> ()
    %84 = tpu.concatenate %32, %49, %66, %83 in 2 : vector<2x8x8xf32>, vector<2x8x8xf32>, vector<2x8x8xf32>, vector<2x8x8xf32> -> vector<2x8x32xf32>
    %85 = vector.shape_cast %84 : vector<2x8x32xf32> to vector<16x32xf32>
    %c0_34 = arith.constant 0 : index
    %c0_35 = arith.constant 0 : index
    %c0_36 = arith.constant 0 : index
    %c0_37 = arith.constant 0 : index
    %86 = vector.load %arg5[%c0_34, %c0_35, %c0_36, %c0_37] : memref<1x2x32x32xf32, #tpu.memory_space<vmem>>, vector<1x1x32x32xf32>
    %87 = vector.shape_cast %86 : vector<1x1x32x32xf32> to vector<32x32xf32>
    %cst_38 = arith.constant dense<0.000000e+00> : vector<16x32xf32>
    %88 = tpu.matmul %85, %87, %cst_38 {dimension_numbers = #tpu.dot_dimension_numbers<[1], [0], [0], [1], [0, 0, 1, 1], [], []>} : vector<16x32xf32>, vector<32x32xf32>, vector<16x32xf32> -> vector<16x32xf32>
    %c0_39 = arith.constant 0 : index
    %c0_40 = arith.constant 0 : index
    %c0_41 = arith.constant 0 : index
    %c0_42 = arith.constant 0 : index
    %89 = vector.load %arg6[%c0_39, %c0_40, %c0_41, %c0_42] : memref<1x2x1x32xf32, #tpu.memory_space<vmem>>, vector<1x1x1x32xf32>
    %90 = vector.shape_cast %89 : vector<1x1x1x32xf32> to vector<1x32xf32>
    %91 = vector.broadcast %90 : vector<1x32xf32> to vector<16x32xf32>
    %92 = arith.addf %88, %91 : vector<16x32xf32>
    %93 = arith.addf %7, %92 : vector<16x32xf32>
    %c0_43 = arith.constant 0 : index
    %c0_44 = arith.constant 0 : index
    %c0_45 = arith.constant 0 : index
    %c0_46 = arith.constant 0 : index
    %94 = vector.load %arg11[%c0_43, %c0_44, %c0_45, %c0_46] : memref<1x2x1x32xf32, #tpu.memory_space<vmem>>, vector<1x1x1x32xf32>
    %95 = vector.shape_cast %94 : vector<1x1x1x32xf32> to vector<1x32xf32>
    %c0_47 = arith.constant 0 : index
    %c0_48 = arith.constant 0 : index
    %c0_49 = arith.constant 0 : index
    %c0_50 = arith.constant 0 : index
    %96 = vector.load %arg12[%c0_47, %c0_48, %c0_49, %c0_50] : memref<1x2x1x32xf32, #tpu.memory_space<vmem>>, vector<1x1x1x32xf32>
    %97 = vector.shape_cast %96 : vector<1x1x1x32xf32> to vector<1x32xf32>
    %cst_51 = arith.constant dense<0.000000e+00> : vector<16xf32>
    %98 = vector.multi_reduction <add>, %93, %cst_51 [1] : vector<16x32xf32> to vector<16xf32>
    %99 = vector.shape_cast %98 : vector<16xf32> to vector<16x1xf32>
    %cst_52 = arith.constant 3.200000e+01 : f32
    %100 = vector.broadcast %cst_52 : f32 to vector<16x1xf32>
    %101 = arith.divf %99, %100 : vector<16x1xf32>
    %102 = vector.broadcast %101 : vector<16x1xf32> to vector<16x32xf32>
    %103 = arith.subf %93, %102 : vector<16x32xf32>
    %104 = arith.mulf %103, %103 : vector<16x32xf32>
    %cst_53 = arith.constant dense<0.000000e+00> : vector<16xf32>
    %105 = vector.multi_reduction <add>, %104, %cst_53 [1] : vector<16x32xf32> to vector<16xf32>
    %106 = vector.shape_cast %105 : vector<16xf32> to vector<16x1xf32>
    %cst_54 = arith.constant 3.200000e+01 : f32
    %107 = vector.broadcast %cst_54 : f32 to vector<16x1xf32>
    %108 = arith.divf %106, %107 : vector<16x1xf32>
    %cst_55 = arith.constant 9.99999974E-6 : f32
    %109 = vector.broadcast %cst_55 : f32 to vector<16x1xf32>
    %110 = arith.addf %108, %109 : vector<16x1xf32>
    %111 = math.rsqrt %110 : vector<16x1xf32>
    %112 = vector.broadcast %111 : vector<16x1xf32> to vector<16x32xf32>
    %113 = arith.mulf %103, %112 : vector<16x32xf32>
    %114 = vector.broadcast %95 : vector<1x32xf32> to vector<16x32xf32>
    %115 = arith.mulf %113, %114 : vector<16x32xf32>
    %116 = vector.broadcast %97 : vector<1x32xf32> to vector<16x32xf32>
    %117 = arith.addf %115, %116 : vector<16x32xf32>
    %c0_56 = arith.constant 0 : index
    %c0_57 = arith.constant 0 : index
    %c0_58 = arith.constant 0 : index
    %c0_59 = arith.constant 0 : index
    %118 = vector.load %arg7[%c0_56, %c0_57, %c0_58, %c0_59] : memref<1x2x32x64xf32, #tpu.memory_space<vmem>>, vector<1x1x32x64xf32>
    %119 = vector.shape_cast %118 : vector<1x1x32x64xf32> to vector<32x64xf32>
    %cst_60 = arith.constant dense<0.000000e+00> : vector<16x64xf32>
    %120 = tpu.matmul %117, %119, %cst_60 {dimension_numbers = #tpu.dot_dimension_numbers<[1], [0], [0], [1], [0, 0, 1, 1], [], []>} : vector<16x32xf32>, vector<32x64xf32>, vector<16x64xf32> -> vector<16x64xf32>
    %c0_61 = arith.constant 0 : index
    %c0_62 = arith.constant 0 : index
    %c0_63 = arith.constant 0 : index
    %c0_64 = arith.constant 0 : index
    %121 = vector.load %arg8[%c0_61, %c0_62, %c0_63, %c0_64] : memref<1x2x1x64xf32, #tpu.memory_space<vmem>>, vector<1x1x1x64xf32>
    %122 = vector.shape_cast %121 : vector<1x1x1x64xf32> to vector<1x64xf32>
    %123 = vector.broadcast %122 : vector<1x64xf32> to vector<16x64xf32>
    %124 = arith.addf %120, %123 : vector<16x64xf32>
    %cst_65 = arith.constant 0.000000e+00 : f32
    %125 = vector.broadcast %cst_65 : f32 to vector<16x64xf32>
    %126 = arith.maximumf %124, %125 : vector<16x64xf32>
    %c0_66 = arith.constant 0 : index
    %c0_67 = arith.constant 0 : index
    %c0_68 = arith.constant 0 : index
    %c0_69 = arith.constant 0 : index
    %127 = vector.load %arg9[%c0_66, %c0_67, %c0_68, %c0_69] : memref<1x2x64x32xf32, #tpu.memory_space<vmem>>, vector<1x1x64x32xf32>
    %128 = vector.shape_cast %127 : vector<1x1x64x32xf32> to vector<64x32xf32>
    %cst_70 = arith.constant dense<0.000000e+00> : vector<16x32xf32>
    %129 = tpu.matmul %126, %128, %cst_70 {dimension_numbers = #tpu.dot_dimension_numbers<[1], [0], [0], [1], [0, 0, 1, 1], [], []>} : vector<16x64xf32>, vector<64x32xf32>, vector<16x32xf32> -> vector<16x32xf32>
    %c0_71 = arith.constant 0 : index
    %c0_72 = arith.constant 0 : index
    %c0_73 = arith.constant 0 : index
    %c0_74 = arith.constant 0 : index
    %130 = vector.load %arg10[%c0_71, %c0_72, %c0_73, %c0_74] : memref<1x2x1x32xf32, #tpu.memory_space<vmem>>, vector<1x1x1x32xf32>
    %131 = vector.shape_cast %130 : vector<1x1x1x32xf32> to vector<1x32xf32>
    %132 = vector.broadcast %131 : vector<1x32xf32> to vector<16x32xf32>
    %133 = arith.addf %129, %132 : vector<16x32xf32>
    %134 = arith.addf %117, %133 : vector<16x32xf32>
    %c0_75 = arith.constant 0 : index
    %c0_76 = arith.constant 0 : index
    %c0_77 = arith.constant 0 : index
    %c0_78 = arith.constant 0 : index
    %135 = vector.load %arg13[%c0_75, %c0_76, %c0_77, %c0_78] : memref<1x2x1x32xf32, #tpu.memory_space<vmem>>, vector<1x1x1x32xf32>
    %136 = vector.shape_cast %135 : vector<1x1x1x32xf32> to vector<1x32xf32>
    %c0_79 = arith.constant 0 : index
    %c0_80 = arith.constant 0 : index
    %c0_81 = arith.constant 0 : index
    %c0_82 = arith.constant 0 : index
    %137 = vector.load %arg14[%c0_79, %c0_80, %c0_81, %c0_82] : memref<1x2x1x32xf32, #tpu.memory_space<vmem>>, vector<1x1x1x32xf32>
    %138 = vector.shape_cast %137 : vector<1x1x1x32xf32> to vector<1x32xf32>
    %cst_83 = arith.constant dense<0.000000e+00> : vector<16xf32>
    %139 = vector.multi_reduction <add>, %134, %cst_83 [1] : vector<16x32xf32> to vector<16xf32>
    %140 = vector.shape_cast %139 : vector<16xf32> to vector<16x1xf32>
    %cst_84 = arith.constant 3.200000e+01 : f32
    %141 = vector.broadcast %cst_84 : f32 to vector<16x1xf32>
    %142 = arith.divf %140, %141 : vector<16x1xf32>
    %143 = vector.broadcast %142 : vector<16x1xf32> to vector<16x32xf32>
    %144 = arith.subf %134, %143 : vector<16x32xf32>
    %145 = arith.mulf %144, %144 : vector<16x32xf32>
    %cst_85 = arith.constant dense<0.000000e+00> : vector<16xf32>
    %146 = vector.multi_reduction <add>, %145, %cst_85 [1] : vector<16x32xf32> to vector<16xf32>
    %147 = vector.shape_cast %146 : vector<16xf32> to vector<16x1xf32>
    %cst_86 = arith.constant 3.200000e+01 : f32
    %148 = vector.broadcast %cst_86 : f32 to vector<16x1xf32>
    %149 = arith.divf %147, %148 : vector<16x1xf32>
    %cst_87 = arith.constant 9.99999974E-6 : f32
    %150 = vector.broadcast %cst_87 : f32 to vector<16x1xf32>
    %151 = arith.addf %149, %150 : vector<16x1xf32>
    %152 = math.rsqrt %151 : vector<16x1xf32>
    %153 = vector.broadcast %152 : vector<16x1xf32> to vector<16x32xf32>
    %154 = arith.mulf %144, %153 : vector<16x32xf32>
    %155 = vector.broadcast %136 : vector<1x32xf32> to vector<16x32xf32>
    %156 = arith.mulf %154, %155 : vector<16x32xf32>
    %157 = vector.broadcast %138 : vector<1x32xf32> to vector<16x32xf32>
    %158 = arith.addf %156, %157 : vector<16x32xf32>
    %c0_88 = arith.constant 0 : index
    %c1 = arith.constant 1 : index
    %c0_89 = arith.constant 0 : index
    %c0_90 = arith.constant 0 : index
    %159 = vector.load %arg3[%c0_88, %c1, %c0_89, %c0_90] : memref<1x2x32x96xf32, #tpu.memory_space<vmem>>, vector<1x1x32x96xf32>
    %160 = vector.shape_cast %159 : vector<1x1x32x96xf32> to vector<32x96xf32>
    %cst_91 = arith.constant dense<0.000000e+00> : vector<16x96xf32>
    %161 = tpu.matmul %158, %160, %cst_91 {dimension_numbers = #tpu.dot_dimension_numbers<[1], [0], [0], [1], [0, 0, 1, 1], [], []>} : vector<16x32xf32>, vector<32x96xf32>, vector<16x96xf32> -> vector<16x96xf32>
    %c0_92 = arith.constant 0 : index
    %c1_93 = arith.constant 1 : index
    %c0_94 = arith.constant 0 : index
    %c0_95 = arith.constant 0 : index
    %162 = vector.load %arg4[%c0_92, %c1_93, %c0_94, %c0_95] : memref<1x2x1x96xf32, #tpu.memory_space<vmem>>, vector<1x1x1x96xf32>
    %163 = vector.shape_cast %162 : vector<1x1x1x96xf32> to vector<1x96xf32>
    %164 = vector.broadcast %163 : vector<1x96xf32> to vector<16x96xf32>
    %165 = arith.addf %161, %164 : vector<16x96xf32>
    %166 = vector.shape_cast %165 : vector<16x96xf32> to vector<2x8x96xf32>
    %167 = vector.extract_strided_slice %166 {offsets = [0, 0, 0], sizes = [2, 8, 8], strides = [1, 1, 1]} : vector<2x8x96xf32> to vector<2x8x8xf32>
    %cst_96 = arith.constant 0.353553385 : f32
    %168 = vector.broadcast %cst_96 : f32 to vector<2x8x8xf32>
    %169 = arith.mulf %167, %168 : vector<2x8x8xf32>
    %170 = vector.extract_strided_slice %166 {offsets = [0, 0, 32], sizes = [2, 8, 8], strides = [1, 1, 1]} : vector<2x8x96xf32> to vector<2x8x8xf32>
    %171 = vector.extract_strided_slice %166 {offsets = [0, 0, 64], sizes = [2, 8, 8], strides = [1, 1, 1]} : vector<2x8x96xf32> to vector<2x8x8xf32>
    "tpu.trace_start"() <{level = 10 : i32, message = "bqd,bkd->bqk"}> : () -> ()
    %cst_97 = arith.constant dense<0.000000e+00> : vector<2x8x8xf32>
    %172 = tpu.matmul %169, %170, %cst_97 {dimension_numbers = #tpu.dot_dimension_numbers<[2], [2], [1], [1], [0, 0, 0, 1, 1, 1], [0], [0]>} : vector<2x8x8xf32>, vector<2x8x8xf32>, vector<2x8x8xf32> -> vector<2x8x8xf32>
    "tpu.trace_stop"() : () -> ()
    %cst_98 = arith.constant dense<0xFF800000> : vector<2x8xf32>
    %173 = vector.multi_reduction <maximumf>, %172, %cst_98 [2] : vector<2x8x8xf32> to vector<2x8xf32>
    %174 = vector.shape_cast %173 : vector<2x8xf32> to vector<2x8x1xf32>
    %175 = vector.broadcast %174 : vector<2x8x1xf32> to vector<2x8x8xf32>
    %176 = arith.subf %172, %175 : vector<2x8x8xf32>
    %177 = math.exp %176 : vector<2x8x8xf32>
    %cst_99 = arith.constant dense<0.000000e+00> : vector<2x8xf32>
    %178 = vector.multi_reduction <add>, %177, %cst_99 [2] : vector<2x8x8xf32> to vector<2x8xf32>
    %179 = vector.shape_cast %178 : vector<2x8xf32> to vector<2x8x1xf32>
    %180 = tpu.reciprocal %179 {approx = true} : vector<2x8x1xf32> -> vector<2x8x1xf32>
    %181 = vector.broadcast %180 : vector<2x8x1xf32> to vector<2x8x8xf32>
    %182 = arith.mulf %177, %181 : vector<2x8x8xf32>
    "tpu.trace_start"() <{level = 10 : i32, message = "bqk,bkd->bqd"}> : () -> ()
    %cst_100 = arith.constant dense<0.000000e+00> : vector<2x8x8xf32>
    %183 = tpu.matmul %182, %171, %cst_100 {dimension_numbers = #tpu.dot_dimension_numbers<[2], [1], [1], [2], [0, 0, 0, 1, 1, 2], [0], [0]>} : vector<2x8x8xf32>, vector<2x8x8xf32>, vector<2x8x8xf32> -> vector<2x8x8xf32>
    "tpu.trace_stop"() : () -> ()
    %184 = vector.extract_strided_slice %166 {offsets = [0, 0, 8], sizes = [2, 8, 8], strides = [1, 1, 1]} : vector<2x8x96xf32> to vector<2x8x8xf32>
    %cst_101 = arith.constant 0.353553385 : f32
    %185 = vector.broadcast %cst_101 : f32 to vector<2x8x8xf32>
    %186 = arith.mulf %184, %185 : vector<2x8x8xf32>
    %187 = vector.extract_strided_slice %166 {offsets = [0, 0, 40], sizes = [2, 8, 8], strides = [1, 1, 1]} : vector<2x8x96xf32> to vector<2x8x8xf32>
    %188 = vector.extract_strided_slice %166 {offsets = [0, 0, 72], sizes = [2, 8, 8], strides = [1, 1, 1]} : vector<2x8x96xf32> to vector<2x8x8xf32>
    "tpu.trace_start"() <{level = 10 : i32, message = "bqd,bkd->bqk"}> : () -> ()
    %cst_102 = arith.constant dense<0.000000e+00> : vector<2x8x8xf32>
    %189 = tpu.matmul %186, %187, %cst_102 {dimension_numbers = #tpu.dot_dimension_numbers<[2], [2], [1], [1], [0, 0, 0, 1, 1, 1], [0], [0]>} : vector<2x8x8xf32>, vector<2x8x8xf32>, vector<2x8x8xf32> -> vector<2x8x8xf32>
    "tpu.trace_stop"() : () -> ()
    %cst_103 = arith.constant dense<0xFF800000> : vector<2x8xf32>
    %190 = vector.multi_reduction <maximumf>, %189, %cst_103 [2] : vector<2x8x8xf32> to vector<2x8xf32>
    %191 = vector.shape_cast %190 : vector<2x8xf32> to vector<2x8x1xf32>
    %192 = vector.broadcast %191 : vector<2x8x1xf32> to vector<2x8x8xf32>
    %193 = arith.subf %189, %192 : vector<2x8x8xf32>
    %194 = math.exp %193 : vector<2x8x8xf32>
    %cst_104 = arith.constant dense<0.000000e+00> : vector<2x8xf32>
    %195 = vector.multi_reduction <add>, %194, %cst_104 [2] : vector<2x8x8xf32> to vector<2x8xf32>
    %196 = vector.shape_cast %195 : vector<2x8xf32> to vector<2x8x1xf32>
    %197 = tpu.reciprocal %196 {approx = true} : vector<2x8x1xf32> -> vector<2x8x1xf32>
    %198 = vector.broadcast %197 : vector<2x8x1xf32> to vector<2x8x8xf32>
    %199 = arith.mulf %194, %198 : vector<2x8x8xf32>
    "tpu.trace_start"() <{level = 10 : i32, message = "bqk,bkd->bqd"}> : () -> ()
    %cst_105 = arith.constant dense<0.000000e+00> : vector<2x8x8xf32>
    %200 = tpu.matmul %199, %188, %cst_105 {dimension_numbers = #tpu.dot_dimension_numbers<[2], [1], [1], [2], [0, 0, 0, 1, 1, 2], [0], [0]>} : vector<2x8x8xf32>, vector<2x8x8xf32>, vector<2x8x8xf32> -> vector<2x8x8xf32>
    "tpu.trace_stop"() : () -> ()
    %201 = vector.extract_strided_slice %166 {offsets = [0, 0, 16], sizes = [2, 8, 8], strides = [1, 1, 1]} : vector<2x8x96xf32> to vector<2x8x8xf32>
    %cst_106 = arith.constant 0.353553385 : f32
    %202 = vector.broadcast %cst_106 : f32 to vector<2x8x8xf32>
    %203 = arith.mulf %201, %202 : vector<2x8x8xf32>
    %204 = vector.extract_strided_slice %166 {offsets = [0, 0, 48], sizes = [2, 8, 8], strides = [1, 1, 1]} : vector<2x8x96xf32> to vector<2x8x8xf32>
    %205 = vector.extract_strided_slice %166 {offsets = [0, 0, 80], sizes = [2, 8, 8], strides = [1, 1, 1]} : vector<2x8x96xf32> to vector<2x8x8xf32>
    "tpu.trace_start"() <{level = 10 : i32, message = "bqd,bkd->bqk"}> : () -> ()
    %cst_107 = arith.constant dense<0.000000e+00> : vector<2x8x8xf32>
    %206 = tpu.matmul %203, %204, %cst_107 {dimension_numbers = #tpu.dot_dimension_numbers<[2], [2], [1], [1], [0, 0, 0, 1, 1, 1], [0], [0]>} : vector<2x8x8xf32>, vector<2x8x8xf32>, vector<2x8x8xf32> -> vector<2x8x8xf32>
    "tpu.trace_stop"() : () -> ()
    %cst_108 = arith.constant dense<0xFF800000> : vector<2x8xf32>
    %207 = vector.multi_reduction <maximumf>, %206, %cst_108 [2] : vector<2x8x8xf32> to vector<2x8xf32>
    %208 = vector.shape_cast %207 : vector<2x8xf32> to vector<2x8x1xf32>
    %209 = vector.broadcast %208 : vector<2x8x1xf32> to vector<2x8x8xf32>
    %210 = arith.subf %206, %209 : vector<2x8x8xf32>
    %211 = math.exp %210 : vector<2x8x8xf32>
    %cst_109 = arith.constant dense<0.000000e+00> : vector<2x8xf32>
    %212 = vector.multi_reduction <add>, %211, %cst_109 [2] : vector<2x8x8xf32> to vector<2x8xf32>
    %213 = vector.shape_cast %212 : vector<2x8xf32> to vector<2x8x1xf32>
    %214 = tpu.reciprocal %213 {approx = true} : vector<2x8x1xf32> -> vector<2x8x1xf32>
    %215 = vector.broadcast %214 : vector<2x8x1xf32> to vector<2x8x8xf32>
    %216 = arith.mulf %211, %215 : vector<2x8x8xf32>
    "tpu.trace_start"() <{level = 10 : i32, message = "bqk,bkd->bqd"}> : () -> ()
    %cst_110 = arith.constant dense<0.000000e+00> : vector<2x8x8xf32>
    %217 = tpu.matmul %216, %205, %cst_110 {dimension_numbers = #tpu.dot_dimension_numbers<[2], [1], [1], [2], [0, 0, 0, 1, 1, 2], [0], [0]>} : vector<2x8x8xf32>, vector<2x8x8xf32>, vector<2x8x8xf32> -> vector<2x8x8xf32>
    "tpu.trace_stop"() : () -> ()
    %218 = vector.extract_strided_slice %166 {offsets = [0, 0, 24], sizes = [2, 8, 8], strides = [1, 1, 1]} : vector<2x8x96xf32> to vector<2x8x8xf32>
    %cst_111 = arith.constant 0.353553385 : f32
    %219 = vector.broadcast %cst_111 : f32 to vector<2x8x8xf32>
    %220 = arith.mulf %218, %219 : vector<2x8x8xf32>
    %221 = vector.extract_strided_slice %166 {offsets = [0, 0, 56], sizes = [2, 8, 8], strides = [1, 1, 1]} : vector<2x8x96xf32> to vector<2x8x8xf32>
    %222 = vector.extract_strided_slice %166 {offsets = [0, 0, 88], sizes = [2, 8, 8], strides = [1, 1, 1]} : vector<2x8x96xf32> to vector<2x8x8xf32>
    "tpu.trace_start"() <{level = 10 : i32, message = "bqd,bkd->bqk"}> : () -> ()
    %cst_112 = arith.constant dense<0.000000e+00> : vector<2x8x8xf32>
    %223 = tpu.matmul %220, %221, %cst_112 {dimension_numbers = #tpu.dot_dimension_numbers<[2], [2], [1], [1], [0, 0, 0, 1, 1, 1], [0], [0]>} : vector<2x8x8xf32>, vector<2x8x8xf32>, vector<2x8x8xf32> -> vector<2x8x8xf32>
    "tpu.trace_stop"() : () -> ()
    %cst_113 = arith.constant dense<0xFF800000> : vector<2x8xf32>
    %224 = vector.multi_reduction <maximumf>, %223, %cst_113 [2] : vector<2x8x8xf32> to vector<2x8xf32>
    %225 = vector.shape_cast %224 : vector<2x8xf32> to vector<2x8x1xf32>
    %226 = vector.broadcast %225 : vector<2x8x1xf32> to vector<2x8x8xf32>
    %227 = arith.subf %223, %226 : vector<2x8x8xf32>
    %228 = math.exp %227 : vector<2x8x8xf32>
    %cst_114 = arith.constant dense<0.000000e+00> : vector<2x8xf32>
    %229 = vector.multi_reduction <add>, %228, %cst_114 [2] : vector<2x8x8xf32> to vector<2x8xf32>
    %230 = vector.shape_cast %229 : vector<2x8xf32> to vector<2x8x1xf32>
    %231 = tpu.reciprocal %230 {approx = true} : vector<2x8x1xf32> -> vector<2x8x1xf32>
    %232 = vector.broadcast %231 : vector<2x8x1xf32> to vector<2x8x8xf32>
    %233 = arith.mulf %228, %232 : vector<2x8x8xf32>
    "tpu.trace_start"() <{level = 10 : i32, message = "bqk,bkd->bqd"}> : () -> ()
    %cst_115 = arith.constant dense<0.000000e+00> : vector<2x8x8xf32>
    %234 = tpu.matmul %233, %222, %cst_115 {dimension_numbers = #tpu.dot_dimension_numbers<[2], [1], [1], [2], [0, 0, 0, 1, 1, 2], [0], [0]>} : vector<2x8x8xf32>, vector<2x8x8xf32>, vector<2x8x8xf32> -> vector<2x8x8xf32>
    "tpu.trace_stop"() : () -> ()
    %235 = tpu.concatenate %183, %200, %217, %234 in 2 : vector<2x8x8xf32>, vector<2x8x8xf32>, vector<2x8x8xf32>, vector<2x8x8xf32> -> vector<2x8x32xf32>
    %236 = vector.shape_cast %235 : vector<2x8x32xf32> to vector<16x32xf32>
    %c0_116 = arith.constant 0 : index
    %c1_117 = arith.constant 1 : index
    %c0_118 = arith.constant 0 : index
    %c0_119 = arith.constant 0 : index
    %237 = vector.load %arg5[%c0_116, %c1_117, %c0_118, %c0_119] : memref<1x2x32x32xf32, #tpu.memory_space<vmem>>, vector<1x1x32x32xf32>
    %238 = vector.shape_cast %237 : vector<1x1x32x32xf32> to vector<32x32xf32>
    %cst_120 = arith.constant dense<0.000000e+00> : vector<16x32xf32>
    %239 = tpu.matmul %236, %238, %cst_120 {dimension_numbers = #tpu.dot_dimension_numbers<[1], [0], [0], [1], [0, 0, 1, 1], [], []>} : vector<16x32xf32>, vector<32x32xf32>, vector<16x32xf32> -> vector<16x32xf32>
    %c0_121 = arith.constant 0 : index
    %c1_122 = arith.constant 1 : index
    %c0_123 = arith.constant 0 : index
    %c0_124 = arith.constant 0 : index
    %240 = vector.load %arg6[%c0_121, %c1_122, %c0_123, %c0_124] : memref<1x2x1x32xf32, #tpu.memory_space<vmem>>, vector<1x1x1x32xf32>
    %241 = vector.shape_cast %240 : vector<1x1x1x32xf32> to vector<1x32xf32>
    %242 = vector.broadcast %241 : vector<1x32xf32> to vector<16x32xf32>
    %243 = arith.addf %239, %242 : vector<16x32xf32>
    %244 = arith.addf %158, %243 : vector<16x32xf32>
    %c0_125 = arith.constant 0 : index
    %c1_126 = arith.constant 1 : index
    %c0_127 = arith.constant 0 : index
    %c0_128 = arith.constant 0 : index
    %245 = vector.load %arg11[%c0_125, %c1_126, %c0_127, %c0_128] : memref<1x2x1x32xf32, #tpu.memory_space<vmem>>, vector<1x1x1x32xf32>
    %246 = vector.shape_cast %245 : vector<1x1x1x32xf32> to vector<1x32xf32>
    %c0_129 = arith.constant 0 : index
    %c1_130 = arith.constant 1 : index
    %c0_131 = arith.constant 0 : index
    %c0_132 = arith.constant 0 : index
    %247 = vector.load %arg12[%c0_129, %c1_130, %c0_131, %c0_132] : memref<1x2x1x32xf32, #tpu.memory_space<vmem>>, vector<1x1x1x32xf32>
    %248 = vector.shape_cast %247 : vector<1x1x1x32xf32> to vector<1x32xf32>
    %cst_133 = arith.constant dense<0.000000e+00> : vector<16xf32>
    %249 = vector.multi_reduction <add>, %244, %cst_133 [1] : vector<16x32xf32> to vector<16xf32>
    %250 = vector.shape_cast %249 : vector<16xf32> to vector<16x1xf32>
    %cst_134 = arith.constant 3.200000e+01 : f32
    %251 = vector.broadcast %cst_134 : f32 to vector<16x1xf32>
    %252 = arith.divf %250, %251 : vector<16x1xf32>
    %253 = vector.broadcast %252 : vector<16x1xf32> to vector<16x32xf32>
    %254 = arith.subf %244, %253 : vector<16x32xf32>
    %255 = arith.mulf %254, %254 : vector<16x32xf32>
    %cst_135 = arith.constant dense<0.000000e+00> : vector<16xf32>
    %256 = vector.multi_reduction <add>, %255, %cst_135 [1] : vector<16x32xf32> to vector<16xf32>
    %257 = vector.shape_cast %256 : vector<16xf32> to vector<16x1xf32>
    %cst_136 = arith.constant 3.200000e+01 : f32
    %258 = vector.broadcast %cst_136 : f32 to vector<16x1xf32>
    %259 = arith.divf %257, %258 : vector<16x1xf32>
    %cst_137 = arith.constant 9.99999974E-6 : f32
    %260 = vector.broadcast %cst_137 : f32 to vector<16x1xf32>
    %261 = arith.addf %259, %260 : vector<16x1xf32>
    %262 = math.rsqrt %261 : vector<16x1xf32>
    %263 = vector.broadcast %262 : vector<16x1xf32> to vector<16x32xf32>
    %264 = arith.mulf %254, %263 : vector<16x32xf32>
    %265 = vector.broadcast %246 : vector<1x32xf32> to vector<16x32xf32>
    %266 = arith.mulf %264, %265 : vector<16x32xf32>
    %267 = vector.broadcast %248 : vector<1x32xf32> to vector<16x32xf32>
    %268 = arith.addf %266, %267 : vector<16x32xf32>
    %c0_138 = arith.constant 0 : index
    %c1_139 = arith.constant 1 : index
    %c0_140 = arith.constant 0 : index
    %c0_141 = arith.constant 0 : index
    %269 = vector.load %arg7[%c0_138, %c1_139, %c0_140, %c0_141] : memref<1x2x32x64xf32, #tpu.memory_space<vmem>>, vector<1x1x32x64xf32>
    %270 = vector.shape_cast %269 : vector<1x1x32x64xf32> to vector<32x64xf32>
    %cst_142 = arith.constant dense<0.000000e+00> : vector<16x64xf32>
    %271 = tpu.matmul %268, %270, %cst_142 {dimension_numbers = #tpu.dot_dimension_numbers<[1], [0], [0], [1], [0, 0, 1, 1], [], []>} : vector<16x32xf32>, vector<32x64xf32>, vector<16x64xf32> -> vector<16x64xf32>
    %c0_143 = arith.constant 0 : index
    %c1_144 = arith.constant 1 : index
    %c0_145 = arith.constant 0 : index
    %c0_146 = arith.constant 0 : index
    %272 = vector.load %arg8[%c0_143, %c1_144, %c0_145, %c0_146] : memref<1x2x1x64xf32, #tpu.memory_space<vmem>>, vector<1x1x1x64xf32>
    %273 = vector.shape_cast %272 : vector<1x1x1x64xf32> to vector<1x64xf32>
    %274 = vector.broadcast %273 : vector<1x64xf32> to vector<16x64xf32>
    %275 = arith.addf %271, %274 : vector<16x64xf32>
    %cst_147 = arith.constant 0.000000e+00 : f32
    %276 = vector.broadcast %cst_147 : f32 to vector<16x64xf32>
    %277 = arith.maximumf %275, %276 : vector<16x64xf32>
    %c0_148 = arith.constant 0 : index
    %c1_149 = arith.constant 1 : index
    %c0_150 = arith.constant 0 : index
    %c0_151 = arith.constant 0 : index
    %278 = vector.load %arg9[%c0_148, %c1_149, %c0_150, %c0_151] : memref<1x2x64x32xf32, #tpu.memory_space<vmem>>, vector<1x1x64x32xf32>
    %279 = vector.shape_cast %278 : vector<1x1x64x32xf32> to vector<64x32xf32>
    %cst_152 = arith.constant dense<0.000000e+00> : vector<16x32xf32>
    %280 = tpu.matmul %277, %279, %cst_152 {dimension_numbers = #tpu.dot_dimension_numbers<[1], [0], [0], [1], [0, 0, 1, 1], [], []>} : vector<16x64xf32>, vector<64x32xf32>, vector<16x32xf32> -> vector<16x32xf32>
    %c0_153 = arith.constant 0 : index
    %c1_154 = arith.constant 1 : index
    %c0_155 = arith.constant 0 : index
    %c0_156 = arith.constant 0 : index
    %281 = vector.load %arg10[%c0_153, %c1_154, %c0_155, %c0_156] : memref<1x2x1x32xf32, #tpu.memory_space<vmem>>, vector<1x1x1x32xf32>
    %282 = vector.shape_cast %281 : vector<1x1x1x32xf32> to vector<1x32xf32>
    %283 = vector.broadcast %282 : vector<1x32xf32> to vector<16x32xf32>
    %284 = arith.addf %280, %283 : vector<16x32xf32>
    %285 = arith.addf %268, %284 : vector<16x32xf32>
    %c0_157 = arith.constant 0 : index
    %c1_158 = arith.constant 1 : index
    %c0_159 = arith.constant 0 : index
    %c0_160 = arith.constant 0 : index
    %286 = vector.load %arg13[%c0_157, %c1_158, %c0_159, %c0_160] : memref<1x2x1x32xf32, #tpu.memory_space<vmem>>, vector<1x1x1x32xf32>
    %287 = vector.shape_cast %286 : vector<1x1x1x32xf32> to vector<1x32xf32>
    %c0_161 = arith.constant 0 : index
    %c1_162 = arith.constant 1 : index
    %c0_163 = arith.constant 0 : index
    %c0_164 = arith.constant 0 : index
    %288 = vector.load %arg14[%c0_161, %c1_162, %c0_163, %c0_164] : memref<1x2x1x32xf32, #tpu.memory_space<vmem>>, vector<1x1x1x32xf32>
    %289 = vector.shape_cast %288 : vector<1x1x1x32xf32> to vector<1x32xf32>
    %cst_165 = arith.constant dense<0.000000e+00> : vector<16xf32>
    %290 = vector.multi_reduction <add>, %285, %cst_165 [1] : vector<16x32xf32> to vector<16xf32>
    %291 = vector.shape_cast %290 : vector<16xf32> to vector<16x1xf32>
    %cst_166 = arith.constant 3.200000e+01 : f32
    %292 = vector.broadcast %cst_166 : f32 to vector<16x1xf32>
    %293 = arith.divf %291, %292 : vector<16x1xf32>
    %294 = vector.broadcast %293 : vector<16x1xf32> to vector<16x32xf32>
    %295 = arith.subf %285, %294 : vector<16x32xf32>
    %296 = arith.mulf %295, %295 : vector<16x32xf32>
    %cst_167 = arith.constant dense<0.000000e+00> : vector<16xf32>
    %297 = vector.multi_reduction <add>, %296, %cst_167 [1] : vector<16x32xf32> to vector<16xf32>
    %298 = vector.shape_cast %297 : vector<16xf32> to vector<16x1xf32>
    %cst_168 = arith.constant 3.200000e+01 : f32
    %299 = vector.broadcast %cst_168 : f32 to vector<16x1xf32>
    %300 = arith.divf %298, %299 : vector<16x1xf32>
    %cst_169 = arith.constant 9.99999974E-6 : f32
    %301 = vector.broadcast %cst_169 : f32 to vector<16x1xf32>
    %302 = arith.addf %300, %301 : vector<16x1xf32>
    %303 = math.rsqrt %302 : vector<16x1xf32>
    %304 = vector.broadcast %303 : vector<16x1xf32> to vector<16x32xf32>
    %305 = arith.mulf %295, %304 : vector<16x32xf32>
    %306 = vector.broadcast %287 : vector<1x32xf32> to vector<16x32xf32>
    %307 = arith.mulf %305, %306 : vector<16x32xf32>
    %308 = vector.broadcast %289 : vector<1x32xf32> to vector<16x32xf32>
    %309 = arith.addf %307, %308 : vector<16x32xf32>
    %c0_170 = arith.constant 0 : index
    %c0_171 = arith.constant 0 : index
    %c0_172 = arith.constant 0 : index
    %310 = vector.load %arg15[%c0_170, %c0_171, %c0_172] : memref<1x1x32xf32, #tpu.memory_space<vmem>>, vector<1x1x32xf32>
    %311 = vector.shape_cast %310 : vector<1x1x32xf32> to vector<1x32xf32>
    %c0_173 = arith.constant 0 : index
    %c0_174 = arith.constant 0 : index
    %c0_175 = arith.constant 0 : index
    %312 = vector.load %arg16[%c0_173, %c0_174, %c0_175] : memref<1x1x32xf32, #tpu.memory_space<vmem>>, vector<1x1x32xf32>
    %313 = vector.shape_cast %312 : vector<1x1x32xf32> to vector<1x32xf32>
    %cst_176 = arith.constant dense<0.000000e+00> : vector<16xf32>
    %314 = vector.multi_reduction <add>, %309, %cst_176 [1] : vector<16x32xf32> to vector<16xf32>
    %315 = vector.shape_cast %314 : vector<16xf32> to vector<16x1xf32>
    %cst_177 = arith.constant 3.200000e+01 : f32
    %316 = vector.broadcast %cst_177 : f32 to vector<16x1xf32>
    %317 = arith.divf %315, %316 : vector<16x1xf32>
    %318 = vector.broadcast %317 : vector<16x1xf32> to vector<16x32xf32>
    %319 = arith.subf %309, %318 : vector<16x32xf32>
    %320 = arith.mulf %319, %319 : vector<16x32xf32>
    %cst_178 = arith.constant dense<0.000000e+00> : vector<16xf32>
    %321 = vector.multi_reduction <add>, %320, %cst_178 [1] : vector<16x32xf32> to vector<16xf32>
    %322 = vector.shape_cast %321 : vector<16xf32> to vector<16x1xf32>
    %cst_179 = arith.constant 3.200000e+01 : f32
    %323 = vector.broadcast %cst_179 : f32 to vector<16x1xf32>
    %324 = arith.divf %322, %323 : vector<16x1xf32>
    %cst_180 = arith.constant 9.99999974E-6 : f32
    %325 = vector.broadcast %cst_180 : f32 to vector<16x1xf32>
    %326 = arith.addf %324, %325 : vector<16x1xf32>
    %327 = math.rsqrt %326 : vector<16x1xf32>
    %328 = vector.broadcast %327 : vector<16x1xf32> to vector<16x32xf32>
    %329 = arith.mulf %319, %328 : vector<16x32xf32>
    %330 = vector.broadcast %311 : vector<1x32xf32> to vector<16x32xf32>
    %331 = arith.mulf %329, %330 : vector<16x32xf32>
    %332 = vector.broadcast %313 : vector<1x32xf32> to vector<16x32xf32>
    %333 = arith.addf %331, %332 : vector<16x32xf32>
    %334 = vector.shape_cast %333 : vector<16x32xf32> to vector<2x8x32xf32>
    %335 = vector.extract_strided_slice %334 {offsets = [0, 4, 0], sizes = [2, 1, 32], strides = [1, 1, 1]} : vector<2x8x32xf32> to vector<2x1x32xf32>
    %336 = vector.shape_cast %335 : vector<2x1x32xf32> to vector<2x32xf32>
    %337 = arith.mulf %336, %336 : vector<2x32xf32>
    %cst_181 = arith.constant dense<0.000000e+00> : vector<2xf32>
    %338 = vector.multi_reduction <add>, %337, %cst_181 [1] : vector<2x32xf32> to vector<2xf32>
    %339 = vector.shape_cast %338 : vector<2xf32> to vector<2x1xf32>
    %cst_182 = arith.constant 1.000000e-24 : f32
    %340 = vector.broadcast %cst_182 : f32 to vector<2x1xf32>
    %341 = arith.maximumf %339, %340 : vector<2x1xf32>
    %342 = math.rsqrt %341 : vector<2x1xf32>
    %343 = vector.broadcast %342 : vector<2x1xf32> to vector<2x32xf32>
    %344 = arith.mulf %336, %343 : vector<2x32xf32>
    %c0_183 = arith.constant 0 : index
    %c0_184 = arith.constant 0 : index
    %c0_185 = arith.constant 0 : index
    %345 = vector.load %arg17[%c0_183, %c0_184, %c0_185] : memref<1x2x32xf32, #tpu.memory_space<vmem>>, vector<1x2x32xf32>
    %346 = vector.shape_cast %345 : vector<1x2x32xf32> to vector<2x32xf32>
    %347 = vector.shape_cast %344 : vector<2x32xf32> to vector<1x2x32xf32>
    tpu.vector_store %arg17[%c0_183, %c0_184, %c0_185], %347 {strides = array<i32>} : memref<1x2x32xf32, #tpu.memory_space<vmem>>, vector<1x2x32xf32>,
    return
  }
  func.func @transform_0(%arg0: i32) -> (i32, i32, i32, i32) {
    %c0_i32 = arith.constant 0 : i32
    %c0_i32_0 = arith.constant 0 : i32
    %c0_i32_1 = arith.constant 0 : i32
    %c0_i32_2 = arith.constant 0 : i32
    return %arg0, %c0_i32, %c0_i32_0, %c0_i32_1 : i32, i32, i32, i32
  }
  func.func @transform_1(%arg0: i32) -> (i32, i32, i32) {
    %c0_i32 = arith.constant 0 : i32
    %c0_i32_0 = arith.constant 0 : i32
    %c0_i32_1 = arith.constant 0 : i32
    return %arg0, %c0_i32, %c0_i32_0 : i32, i32, i32
  }
  func.func @transform_2(%arg0: i32) -> (i32, i32, i32, i32) {
    %c0_i32 = arith.constant 0 : i32
    %c0_i32_0 = arith.constant 0 : i32
    %c0_i32_1 = arith.constant 0 : i32
    %c0_i32_2 = arith.constant 0 : i32
    return %arg0, %c0_i32, %c0_i32_0, %c0_i32_1 : i32, i32, i32, i32
  }
  func.func @transform_3(%arg0: i32) -> (i32, i32, i32, i32) {
    %c0_i32 = arith.constant 0 : i32
    %c0_i32_0 = arith.constant 0 : i32
    %c0_i32_1 = arith.constant 0 : i32
    %c0_i32_2 = arith.constant 0 : i32
    return %arg0, %c0_i32, %c0_i32_0, %c0_i32_1 : i32, i32, i32, i32
  }
  func.func @transform_4(%arg0: i32) -> (i32, i32, i32, i32) {
    %c0_i32 = arith.constant 0 : i32
    %c0_i32_0 = arith.constant 0 : i32
    %c0_i32_1 = arith.constant 0 : i32
    %c0_i32_2 = arith.constant 0 : i32
    return %arg0, %c0_i32, %c0_i32_0, %c0_i32_1 : i32, i32, i32, i32
  }
  func.func @transform_5(%arg0: i32) -> (i32, i32, i32, i32) {
    %c0_i32 = arith.constant 0 : i32
    %c0_i32_0 = arith.constant 0 : i32
    %c0_i32_1 = arith.constant 0 : i32
    %c0_i32_2 = arith.constant 0 : i32
    return %arg0, %c0_i32, %c0_i32_0, %c0_i32_1 : i32, i32, i32, i32
  }
  func.func @transform_6(%arg0: i32) -> (i32, i32, i32, i32) {
    %c0_i32 = arith.constant 0 : i32
    %c0_i32_0 = arith.constant 0 : i32
    %c0_i32_1 = arith.constant 0 : i32
    %c0_i32_2 = arith.constant 0 : i32
    return %arg0, %c0_i32, %c0_i32_0, %c0_i32_1 : i32, i32, i32, i32
  }
  func.func @transform_7(%arg0: i32) -> (i32, i32, i32, i32) {
    %c0_i32 = arith.constant 0 : i32
    %c0_i32_0 = arith.constant 0 : i32
    %c0_i32_1 = arith.constant 0 : i32
    %c0_i32_2 = arith.constant 0 : i32
    return %arg0, %c0_i32, %c0_i32_0, %c0_i32_1 : i32, i32, i32, i32
  }
  func.func @transform_8(%arg0: i32) -> (i32, i32, i32, i32) {
    %c0_i32 = arith.constant 0 : i32
    %c0_i32_0 = arith.constant 0 : i32
    %c0_i32_1 = arith.constant 0 : i32
    %c0_i32_2 = arith.constant 0 : i32
    return %arg0, %c0_i32, %c0_i32_0, %c0_i32_1 : i32, i32, i32, i32
  }
  func.func @transform_9(%arg0: i32) -> (i32, i32, i32, i32) {
    %c0_i32 = arith.constant 0 : i32
    %c0_i32_0 = arith.constant 0 : i32
    %c0_i32_1 = arith.constant 0 : i32
    %c0_i32_2 = arith.constant 0 : i32
    return %arg0, %c0_i32, %c0_i32_0, %c0_i32_1 : i32, i32, i32, i32
  }
  func.func @transform_10(%arg0: i32) -> (i32, i32, i32, i32) {
    %c0_i32 = arith.constant 0 : i32
    %c0_i32_0 = arith.constant 0 : i32
    %c0_i32_1 = arith.constant 0 : i32
    %c0_i32_2 = arith.constant 0 : i32
    return %arg0, %c0_i32, %c0_i32_0, %c0_i32_1 : i32, i32, i32, i32
  }
  func.func @transform_11(%arg0: i32) -> (i32, i32, i32, i32) {
    %c0_i32 = arith.constant 0 : i32
    %c0_i32_0 = arith.constant 0 : i32
    %c0_i32_1 = arith.constant 0 : i32
    %c0_i32_2 = arith.constant 0 : i32
    return %arg0, %c0_i32, %c0_i32_0, %c0_i32_1 : i32, i32, i32, i32
  }
  func.func @transform_12(%arg0: i32) -> (i32, i32, i32, i32) {
    %c0_i32 = arith.constant 0 : i32
    %c0_i32_0 = arith.constant 0 : i32
    %c0_i32_1 = arith.constant 0 : i32
    %c0_i32_2 = arith.constant 0 : i32
    return %arg0, %c0_i32, %c0_i32_0, %c0_i32_1 : i32, i32, i32, i32
  }
  func.func @transform_13(%arg0: i32) -> (i32, i32, i32, i32) {
    %c0_i32 = arith.constant 0 : i32
    %c0_i32_0 = arith.constant 0 : i32
    %c0_i32_1 = arith.constant 0 : i32
    %c0_i32_2 = arith.constant 0 : i32
    return %arg0, %c0_i32, %c0_i32_0, %c0_i32_1 : i32, i32, i32, i32
  }
  func.func @transform_14(%arg0: i32) -> (i32, i32, i32) {
    %c0_i32 = arith.constant 0 : i32
    %c0_i32_0 = arith.constant 0 : i32
    %c0_i32_1 = arith.constant 0 : i32
    return %arg0, %c0_i32, %c0_i32_0 : i32, i32, i32
  }
  func.func @transform_15(%arg0: i32) -> (i32, i32, i32) {
    %c0_i32 = arith.constant 0 : i32
    %c0_i32_0 = arith.constant 0 : i32
    %c0_i32_1 = arith.constant 0 : i32
    return %arg0, %c0_i32, %c0_i32_0 : i32, i32, i32
  }
  func.func @transform_16(%arg0: i32) -> (i32, i32, i32) {
    %c0_i32 = arith.constant 0 : i32
    %c0_i32_0 = arith.constant 0 : i32
    %c0_i32_1 = arith.constant 0 : i32
    return %arg0, %c0_i32, %c0_i32_0 : i32, i32, i32
  }
}

</mosaic_0001>

<llo_original>
// kernel: contra_forward.1
$region0: #{contra_forward.1}
  #allocation0 [shape = 'u32[]', space=smem, size = 0x4, offset = 0x4, fixed_abs, tag = 'smem constant byte address 0x4 - core index']
  #allocation1 [shape = 'u32[144,128]{1,0:T(1,128)}', space=vmem, size = 0x12000, scoped, tag = 'internal scratch']
  %s0 = inlined_call_operand.vmem [shape: f32[2,2,8,32], index: 0, kind: input, shape index: {}]
  %s1 = inlined_call_operand.vmem [shape: f32[2,8,32], index: 1, kind: input, shape index: {}]
  %s2 = inlined_call_operand.vmem [shape: f32[2,2,32,96], index: 2, kind: input, shape index: {}]
  %s3 = inlined_call_operand.vmem [shape: f32[2,2,1,96], index: 3, kind: input, shape index: {}]
  %s4 = inlined_call_operand.vmem [shape: f32[2,2,32,32], index: 4, kind: input, shape index: {}]
  %s5 = inlined_call_operand.vmem [shape: f32[2,2,1,32], index: 5, kind: input, shape index: {}]
  %s6 = inlined_call_operand.vmem [shape: f32[2,2,32,64], index: 6, kind: input, shape index: {}]
  %s7 = inlined_call_operand.vmem [shape: f32[2,2,1,64], index: 7, kind: input, shape index: {}]
  %s8 = inlined_call_operand.vmem [shape: f32[2,2,64,32], index: 8, kind: input, shape index: {}]
  %s9 = inlined_call_operand.vmem [shape: f32[2,2,1,32], index: 9, kind: input, shape index: {}]
  %s10 = inlined_call_operand.vmem [shape: f32[2,2,1,32], index: 10, kind: input, shape index: {}]
  %s11 = inlined_call_operand.vmem [shape: f32[2,2,1,32], index: 11, kind: input, shape index: {}]
  %s12 = inlined_call_operand.vmem [shape: f32[2,2,1,32], index: 12, kind: input, shape index: {}]
  %s13 = inlined_call_operand.vmem [shape: f32[2,2,1,32], index: 13, kind: input, shape index: {}]
  %s14 = inlined_call_operand.vmem [shape: f32[2,1,32], index: 14, kind: input, shape index: {}]
  %s15 = inlined_call_operand.vmem [shape: f32[2,1,32], index: 15, kind: input, shape index: {}]
  %s16 = inlined_call_operand.vmem [shape: f32[2,2,32], index: 16, kind: output, shape index: {}]
  %s17 = sld [smem:[#allocation0]]
  $region97: #{contra_forward.1} parent=0
    _
  %s19 = ssub.s32 1, %s17
  %s20 = scalar_select 0, %s19, %s17
  loop: start=0, step=1, limit=4
  $region2: #{contra_forward.1} parent=0 // loop_pre_header
    _
  $region3: #{contra_forward.1} parent=0 // loop_header
    %s22 = sphi 0, %s26
    %p23 = scmp.ge.s32.totalorder %s22, 4
    %s32 = sphi 0, %s34
    %s35 = sphi 0, %s32
    %s36 = sphi 0, %s35
    %s52 = sphi 0, %s36
    %s58 = sphi 0, %s60
    %s61 = sphi 0, %s58
    %s62 = sphi 0, %s61
    %s78 = sphi 0, %s62
    %s84 = sphi 0, %s86
    %s87 = sphi 0, %s84
    %s88 = sphi 0, %s87
    %s104 = sphi 0, %s88
    %s110 = sphi 0, %s112
    %s113 = sphi 0, %s110
    %s114 = sphi 0, %s113
    %s130 = sphi 0, %s114
    %s136 = sphi 0, %s138
    %s139 = sphi 0, %s136
    %s140 = sphi 0, %s139
    %s156 = sphi 0, %s140
    %s162 = sphi 0, %s164
    %s165 = sphi 0, %s162
    %s166 = sphi 0, %s165
    %s182 = sphi 0, %s166
    %s188 = sphi 0, %s190
    %s191 = sphi 0, %s188
    %s192 = sphi 0, %s191
    %s208 = sphi 0, %s192
    %s214 = sphi 0, %s216
    %s217 = sphi 0, %s214
    %s218 = sphi 0, %s217
    %s234 = sphi 0, %s218
    %s240 = sphi 0, %s242
    %s243 = sphi 0, %s240
    %s244 = sphi 0, %s243
    %s260 = sphi 0, %s244
    %s266 = sphi 0, %s268
    %s269 = sphi 0, %s266
    %s270 = sphi 0, %s269
    %s286 = sphi 0, %s270
    %s292 = sphi 0, %s294
    %s295 = sphi 0, %s292
    %s296 = sphi 0, %s295
    %s312 = sphi 0, %s296
    %s318 = sphi 0, %s320
    %s321 = sphi 0, %s318
    %s322 = sphi 0, %s321
    %s338 = sphi 0, %s322
    %s344 = sphi 0, %s346
    %s347 = sphi 0, %s344
    %s348 = sphi 0, %s347
    %s364 = sphi 0, %s348
    %s370 = sphi 0, %s372
    %s373 = sphi 0, %s370
    %s374 = sphi 0, %s373
    %s390 = sphi 0, %s374
    %s396 = sphi 0, %s398
    %s399 = sphi 0, %s396
    %s400 = sphi 0, %s399
    %s416 = sphi 0, %s400
    %s422 = sphi 0, %s424
    %s425 = sphi 0, %s422
    %s426 = sphi 0, %s425
    %s442 = sphi 0, %s426
    %s448 = sphi 0, %s450
    %s451 = sphi 0, %s448
    %s452 = sphi 0, %s451
    %s468 = sphi 0, %s452
  $region4: #{contra_forward.1} parent=0 // loop_header_branch
    %25 = sbr.rel (%p23) target = $region8
  $region5: #{contra_forward.1} parent=0 // loop_body
    %s27 = ssub.s32 %s22, 1
    %s28 = ssub.s32 %s22, 2
    %s29 = sadd.s32 %s22, 1
    %s30 = ssub.s32 %s22, %s29
    %p31 = scmp.eq.s32.totalorder %s30, 0
    %s33 = sadd.s32 %s32, 1
    %s34 = scalar_select %p31, %s32, %s33
    %p37 = pneg %p31
    %p38 = scmp.eq.s32.totalorder %s22, 1
    %p39 = por %p37, %p38
    %p40 = scmp.ne.s32.totalorder %s32, %s35
    %p41 = scmp.eq.s32.totalorder %s22, 0
    %p42 = por %p40, %p41
    %p43 = scmp.ne.s32.totalorder %s32, %s35
    %p44 = scmp.eq.s32.totalorder %s27, 1
    %p45 = por %p43, %p44
    %p46 = scmp.ne.s32.totalorder %s35, %s36
    %p47 = scmp.eq.s32.totalorder %s27, 0
    %p48 = por %p46, %p47
    %p49 = scmp.ne.s32.totalorder %s35, %s36
    %p50 = scmp.eq.s32.totalorder %s28, 1
    %p51 = por %p49, %p50
    %p53 = scmp.ne.s32.totalorder %s36, %s52
    %p54 = scmp.eq.s32.totalorder %s28, 0
    %p55 = por %p53, %p54
    %s56 = ssub.s32 %s22, %s29
    %p57 = scmp.eq.s32.totalorder %s56, 0
    %s59 = sadd.s32 %s58, 1
    %s60 = scalar_select %p57, %s58, %s59
    %p63 = pneg %p57
    %p64 = scmp.eq.s32.totalorder %s22, 1
    %p65 = por %p63, %p64
    %p66 = scmp.ne.s32.totalorder %s58, %s61
    %p67 = scmp.eq.s32.totalorder %s22, 0
    %p68 = por %p66, %p67
    %p69 = scmp.ne.s32.totalorder %s58, %s61
    %p70 = scmp.eq.s32.totalorder %s27, 1
    %p71 = por %p69, %p70
    %p72 = scmp.ne.s32.totalorder %s61, %s62
    %p73 = scmp.eq.s32.totalorder %s27, 0
    %p74 = por %p72, %p73
    %p75 = scmp.ne.s32.totalorder %s61, %s62
    %p76 = scmp.eq.s32.totalorder %s28, 1
    %p77 = por %p75, %p76
    %p79 = scmp.ne.s32.totalorder %s62, %s78
    %p80 = scmp.eq.s32.totalorder %s28, 0
    %p81 = por %p79, %p80
    %s82 = ssub.s32 %s22, %s29
    %p83 = scmp.eq.s32.totalorder %s82, 0
    %s85 = sadd.s32 %s84, 1
    %s86 = scalar_select %p83, %s84, %s85
    %p89 = pneg %p83
    %p90 = scmp.eq.s32.totalorder %s22, 1
    %p91 = por %p89, %p90
    %p92 = scmp.ne.s32.totalorder %s84, %s87
    %p93 = scmp.eq.s32.totalorder %s22, 0
    %p94 = por %p92, %p93
    %p95 = scmp.ne.s32.totalorder %s84, %s87
    %p96 = scmp.eq.s32.totalorder %s27, 1
    %p97 = por %p95, %p96
    %p98 = scmp.ne.s32.totalorder %s87, %s88
    %p99 = scmp.eq.s32.totalorder %s27, 0
    %p100 = por %p98, %p99
    %p101 = scmp.ne.s32.totalorder %s87, %s88
    %p102 = scmp.eq.s32.totalorder %s28, 1
    %p103 = por %p101, %p102
    %p105 = scmp.ne.s32.totalorder %s88, %s104
    %p106 = scmp.eq.s32.totalorder %s28, 0
    %p107 = por %p105, %p106
    %s108 = ssub.s32 %s22, %s29
    %p109 = scmp.eq.s32.totalorder %s108, 0
    %s111 = sadd.s32 %s110, 1
    %s112 = scalar_select %p109, %s110, %s111
    %p115 = pneg %p109
    %p116 = scmp.eq.s32.totalorder %s22, 1
    %p117 = por %p115, %p116
    %p118 = scmp.ne.s32.totalorder %s110, %s113
    %p119 = scmp.eq.s32.totalorder %s22, 0
    %p120 = por %p118, %p119
    %p121 = scmp.ne.s32.totalorder %s110, %s113
    %p122 = scmp.eq.s32.totalorder %s27, 1
    %p123 = por %p121, %p122
    %p124 = scmp.ne.s32.totalorder %s113, %s114
    %p125 = scmp.eq.s32.totalorder %s27, 0
    %p126 = por %p124, %p125
    %p127 = scmp.ne.s32.totalorder %s113, %s114
    %p128 = scmp.eq.s32.totalorder %s28, 1
    %p129 = por %p127, %p128
    %p131 = scmp.ne.s32.totalorder %s114, %s130
    %p132 = scmp.eq.s32.totalorder %s28, 0
    %p133 = por %p131, %p132
    %s134 = ssub.s32 %s22, %s29
    %p135 = scmp.eq.s32.totalorder %s134, 0
    %s137 = sadd.s32 %s136, 1
    %s138 = scalar_select %p135, %s136, %s137
    %p141 = pneg %p135
    %p142 = scmp.eq.s32.totalorder %s22, 1
    %p143 = por %p141, %p142
    %p144 = scmp.ne.s32.totalorder %s136, %s139
    %p145 = scmp.eq.s32.totalorder %s22, 0
    %p146 = por %p144, %p145
    %p147 = scmp.ne.s32.totalorder %s136, %s139
    %p148 = scmp.eq.s32.totalorder %s27, 1
    %p149 = por %p147, %p148
    %p150 = scmp.ne.s32.totalorder %s139, %s140
    %p151 = scmp.eq.s32.totalorder %s27, 0
    %p152 = por %p150, %p151
    %p153 = scmp.ne.s32.totalorder %s139, %s140
    %p154 = scmp.eq.s32.totalorder %s28, 1
    %p155 = por %p153, %p154
    %p157 = scmp.ne.s32.totalorder %s140, %s156
    %p158 = scmp.eq.s32.totalorder %s28, 0
    %p159 = por %p157, %p158
    %s160 = ssub.s32 %s22, %s29
    %p161 = scmp.eq.s32.totalorder %s160, 0
    %s163 = sadd.s32 %s162, 1
    %s164 = scalar_select %p161, %s162, %s163
    %p167 = pneg %p161
    %p168 = scmp.eq.s32.totalorder %s22, 1
    %p169 = por %p167, %p168
    %p170 = scmp.ne.s32.totalorder %s162, %s165
    %p171 = scmp.eq.s32.totalorder %s22, 0
    %p172 = por %p170, %p171
    %p173 = scmp.ne.s32.totalorder %s162, %s165
    %p174 = scmp.eq.s32.totalorder %s27, 1
    %p175 = por %p173, %p174
    %p176 = scmp.ne.s32.totalorder %s165, %s166
    %p177 = scmp.eq.s32.totalorder %s27, 0
    %p178 = por %p176, %p177
    %p179 = scmp.ne.s32.totalorder %s165, %s166
    %p180 = scmp.eq.s32.totalorder %s28, 1
    %p181 = por %p179, %p180
    %p183 = scmp.ne.s32.totalorder %s166, %s182
    %p184 = scmp.eq.s32.totalorder %s28, 0
    %p185 = por %p183, %p184
    %s186 = ssub.s32 %s22, %s29
    %p187 = scmp.eq.s32.totalorder %s186, 0
    %s189 = sadd.s32 %s188, 1
    %s190 = scalar_select %p187, %s188, %s189
    %p193 = pneg %p187
    %p194 = scmp.eq.s32.totalorder %s22, 1
    %p195 = por %p193, %p194
    %p196 = scmp.ne.s32.totalorder %s188, %s191
    %p197 = scmp.eq.s32.totalorder %s22, 0
    %p198 = por %p196, %p197
    %p199 = scmp.ne.s32.totalorder %s188, %s191
    %p200 = scmp.eq.s32.totalorder %s27, 1
    %p201 = por %p199, %p200
    %p202 = scmp.ne.s32.totalorder %s191, %s192
    %p203 = scmp.eq.s32.totalorder %s27, 0
    %p204 = por %p202, %p203
    %p205 = scmp.ne.s32.totalorder %s191, %s192
    %p206 = scmp.eq.s32.totalorder %s28, 1
    %p207 = por %p205, %p206
    %p209 = scmp.ne.s32.totalorder %s192, %s208
    %p210 = scmp.eq.s32.totalorder %s28, 0
    %p211 = por %p209, %p210
    %s212 = ssub.s32 %s22, %s29
    %p213 = scmp.eq.s32.totalorder %s212, 0
    %s215 = sadd.s32 %s214, 1
    %s216 = scalar_select %p213, %s214, %s215
    %p219 = pneg %p213
    %p220 = scmp.eq.s32.totalorder %s22, 1
    %p221 = por %p219, %p220
    %p222 = scmp.ne.s32.totalorder %s214, %s217
    %p223 = scmp.eq.s32.totalorder %s22, 0
    %p224 = por %p222, %p223
    %p225 = scmp.ne.s32.totalorder %s214, %s217
    %p226 = scmp.eq.s32.totalorder %s27, 1
    %p227 = por %p225, %p226
    %p228 = scmp.ne.s32.totalorder %s217, %s218
    %p229 = scmp.eq.s32.totalorder %s27, 0
    %p230 = por %p228, %p229
    %p231 = scmp.ne.s32.totalorder %s217, %s218
    %p232 = scmp.eq.s32.totalorder %s28, 1
    %p233 = por %p231, %p232
    %p235 = scmp.ne.s32.totalorder %s218, %s234
    %p236 = scmp.eq.s32.totalorder %s28, 0
    %p237 = por %p235, %p236
    %s238 = ssub.s32 %s22, %s29
    %p239 = scmp.eq.s32.totalorder %s238, 0
    %s241 = sadd.s32 %s240, 1
    %s242 = scalar_select %p239, %s240, %s241
    %p245 = pneg %p239
    %p246 = scmp.eq.s32.totalorder %s22, 1
    %p247 = por %p245, %p246
    %p248 = scmp.ne.s32.totalorder %s240, %s243
    %p249 = scmp.eq.s32.totalorder %s22, 0
    %p250 = por %p248, %p249
    %p251 = scmp.ne.s32.totalorder %s240, %s243
    %p252 = scmp.eq.s32.totalorder %s27, 1
    %p253 = por %p251, %p252
    %p254 = scmp.ne.s32.totalorder %s243, %s244
    %p255 = scmp.eq.s32.totalorder %s27, 0
    %p256 = por %p254, %p255
    %p257 = scmp.ne.s32.totalorder %s243, %s244
    %p258 = scmp.eq.s32.totalorder %s28, 1
    %p259 = por %p257, %p258
    %p261 = scmp.ne.s32.totalorder %s244, %s260
    %p262 = scmp.eq.s32.totalorder %s28, 0
    %p263 = por %p261, %p262
    %s264 = ssub.s32 %s22, %s29
    %p265 = scmp.eq.s32.totalorder %s264, 0
    %s267 = sadd.s32 %s266, 1
    %s268 = scalar_select %p265, %s266, %s267
    %p271 = pneg %p265
    %p272 = scmp.eq.s32.totalorder %s22, 1
    %p273 = por %p271, %p272
    %p274 = scmp.ne.s32.totalorder %s266, %s269
    %p275 = scmp.eq.s32.totalorder %s22, 0
    %p276 = por %p274, %p275
    %p277 = scmp.ne.s32.totalorder %s266, %s269
    %p278 = scmp.eq.s32.totalorder %s27, 1
    %p279 = por %p277, %p278
    %p280 = scmp.ne.s32.totalorder %s269, %s270
    %p281 = scmp.eq.s32.totalorder %s27, 0
    %p282 = por %p280, %p281
    %p283 = scmp.ne.s32.totalorder %s269, %s270
    %p284 = scmp.eq.s32.totalorder %s28, 1
    %p285 = por %p283, %p284
    %p287 = scmp.ne.s32.totalorder %s270, %s286
    %p288 = scmp.eq.s32.totalorder %s28, 0
    %p289 = por %p287, %p288
    %s290 = ssub.s32 %s22, %s29
    %p291 = scmp.eq.s32.totalorder %s290, 0
    %s293 = sadd.s32 %s292, 1
    %s294 = scalar_select %p291, %s292, %s293
    %p297 = pneg %p291
    %p298 = scmp.eq.s32.totalorder %s22, 1
    %p299 = por %p297, %p298
    %p300 = scmp.ne.s32.totalorder %s292, %s295
    %p301 = scmp.eq.s32.totalorder %s22, 0
    %p302 = por %p300, %p301
    %p303 = scmp.ne.s32.totalorder %s292, %s295
    %p304 = scmp.eq.s32.totalorder %s27, 1
    %p305 = por %p303, %p304
    %p306 = scmp.ne.s32.totalorder %s295, %s296
    %p307 = scmp.eq.s32.totalorder %s27, 0
    %p308 = por %p306, %p307
    %p309 = scmp.ne.s32.totalorder %s295, %s296
    %p310 = scmp.eq.s32.totalorder %s28, 1
    %p311 = por %p309, %p310
    %p313 = scmp.ne.s32.totalorder %s296, %s312
    %p314 = scmp.eq.s32.totalorder %s28, 0
    %p315 = por %p313, %p314
    %s316 = ssub.s32 %s22, %s29
    %p317 = scmp.eq.s32.totalorder %s316, 0
    %s319 = sadd.s32 %s318, 1
    %s320 = scalar_select %p317, %s318, %s319
    %p323 = pneg %p317
    %p324 = scmp.eq.s32.totalorder %s22, 1
    %p325 = por %p323, %p324
    %p326 = scmp.ne.s32.totalorder %s318, %s321
    %p327 = scmp.eq.s32.totalorder %s22, 0
    %p328 = por %p326, %p327
    %p329 = scmp.ne.s32.totalorder %s318, %s321
    %p330 = scmp.eq.s32.totalorder %s27, 1
    %p331 = por %p329, %p330
    %p332 = scmp.ne.s32.totalorder %s321, %s322
    %p333 = scmp.eq.s32.totalorder %s27, 0
    %p334 = por %p332, %p333
    %p335 = scmp.ne.s32.totalorder %s321, %s322
    %p336 = scmp.eq.s32.totalorder %s28, 1
    %p337 = por %p335, %p336
    %p339 = scmp.ne.s32.totalorder %s322, %s338
    %p340 = scmp.eq.s32.totalorder %s28, 0
    %p341 = por %p339, %p340
    %s342 = ssub.s32 %s22, %s29
    %p343 = scmp.eq.s32.totalorder %s342, 0
    %s345 = sadd.s32 %s344, 1
    %s346 = scalar_select %p343, %s344, %s345
    %p349 = pneg %p343
    %p350 = scmp.eq.s32.totalorder %s22, 1
    %p351 = por %p349, %p350
    %p352 = scmp.ne.s32.totalorder %s344, %s347
    %p353 = scmp.eq.s32.totalorder %s22, 0
    %p354 = por %p352, %p353
    %p355 = scmp.ne.s32.totalorder %s344, %s347
    %p356 = scmp.eq.s32.totalorder %s27, 1
    %p357 = por %p355, %p356
    %p358 = scmp.ne.s32.totalorder %s347, %s348
    %p359 = scmp.eq.s32.totalorder %s27, 0
    %p360 = por %p358, %p359
    %p361 = scmp.ne.s32.totalorder %s347, %s348
    %p362 = scmp.eq.s32.totalorder %s28, 1
    %p363 = por %p361, %p362
    %p365 = scmp.ne.s32.totalorder %s348, %s364
    %p366 = scmp.eq.s32.totalorder %s28, 0
    %p367 = por %p365, %p366
    %s368 = ssub.s32 %s22, %s29
    %p369 = scmp.eq.s32.totalorder %s368, 0
    %s371 = sadd.s32 %s370, 1
    %s372 = scalar_select %p369, %s370, %s371
    %p375 = pneg %p369
    %p376 = scmp.eq.s32.totalorder %s22, 1
    %p377 = por %p375, %p376
    %p378 = scmp.ne.s32.totalorder %s370, %s373
    %p379 = scmp.eq.s32.totalorder %s22, 0
    %p380 = por %p378, %p379
    %p381 = scmp.ne.s32.totalorder %s370, %s373
    %p382 = scmp.eq.s32.totalorder %s27, 1
    %p383 = por %p381, %p382
    %p384 = scmp.ne.s32.totalorder %s373, %s374
    %p385 = scmp.eq.s32.totalorder %s27, 0
    %p386 = por %p384, %p385
    %p387 = scmp.ne.s32.totalorder %s373, %s374
    %p388 = scmp.eq.s32.totalorder %s28, 1
    %p389 = por %p387, %p388
    %p391 = scmp.ne.s32.totalorder %s374, %s390
    %p392 = scmp.eq.s32.totalorder %s28, 0
    %p393 = por %p391, %p392
    %s394 = ssub.s32 %s22, %s29
    %p395 = scmp.eq.s32.totalorder %s394, 0
    %s397 = sadd.s32 %s396, 1
    %s398 = scalar_select %p395, %s396, %s397
    %p401 = pneg %p395
    %p402 = scmp.eq.s32.totalorder %s22, 1
    %p403 = por %p401, %p402
    %p404 = scmp.ne.s32.totalorder %s396, %s399
    %p405 = scmp.eq.s32.totalorder %s22, 0
    %p406 = por %p404, %p405
    %p407 = scmp.ne.s32.totalorder %s396, %s399
    %p408 = scmp.eq.s32.totalorder %s27, 1
    %p409 = por %p407, %p408
    %p410 = scmp.ne.s32.totalorder %s399, %s400
    %p411 = scmp.eq.s32.totalorder %s27, 0
    %p412 = por %p410, %p411
    %p413 = scmp.ne.s32.totalorder %s399, %s400
    %p414 = scmp.eq.s32.totalorder %s28, 1
    %p415 = por %p413, %p414
    %p417 = scmp.ne.s32.totalorder %s400, %s416
    %p418 = scmp.eq.s32.totalorder %s28, 0
    %p419 = por %p417, %p418
    %s420 = ssub.s32 %s22, %s29
    %p421 = scmp.eq.s32.totalorder %s420, 0
    %s423 = sadd.s32 %s422, 1
    %s424 = scalar_select %p421, %s422, %s423
    %p427 = pneg %p421
    %p428 = scmp.eq.s32.totalorder %s22, 1
    %p429 = por %p427, %p428
    %p430 = scmp.ne.s32.totalorder %s422, %s425
    %p431 = scmp.eq.s32.totalorder %s22, 0
    %p432 = por %p430, %p431
    %p433 = scmp.ne.s32.totalorder %s422, %s425
    %p434 = scmp.eq.s32.totalorder %s27, 1
    %p435 = por %p433, %p434
    %p436 = scmp.ne.s32.totalorder %s425, %s426
    %p437 = scmp.eq.s32.totalorder %s27, 0
    %p438 = por %p436, %p437
    %p439 = scmp.ne.s32.totalorder %s425, %s426
    %p440 = scmp.eq.s32.totalorder %s28, 1
    %p441 = por %p439, %p440
    %p443 = scmp.ne.s32.totalorder %s426, %s442
    %p444 = scmp.eq.s32.totalorder %s28, 0
    %p445 = por %p443, %p444
    %s446 = ssub.s32 %s22, %s29
    %p447 = scmp.eq.s32.totalorder %s446, 0
    %s449 = sadd.s32 %s448, 1
    %s450 = scalar_select %p447, %s448, %s449
    %p453 = pneg %p447
    %p454 = scmp.eq.s32.totalorder %s22, 1
    %p455 = por %p453, %p454
    %p456 = scmp.ne.s32.totalorder %s448, %s451
    %p457 = scmp.eq.s32.totalorder %s22, 0
    %p458 = por %p456, %p457
    %p459 = scmp.ne.s32.totalorder %s448, %s451
    %p460 = scmp.eq.s32.totalorder %s27, 1
    %p461 = por %p459, %p460
    %p462 = scmp.ne.s32.totalorder %s451, %s452
    %p463 = scmp.eq.s32.totalorder %s27, 0
    %p464 = por %p462, %p463
    %p465 = scmp.ne.s32.totalorder %s451, %s452
    %p466 = scmp.eq.s32.totalorder %s28, 1
    %p467 = por %p465, %p466
    %p469 = scmp.ne.s32.totalorder %s452, %s468
    %p470 = scmp.eq.s32.totalorder %s28, 0
    %p471 = por %p469, %p470
    %p472 = scmp.le.s32.totalorder 1, %s22
    %p473 = scmp.lt.s32.totalorder %s22, 3
    %p474 = pnand %p472, %p473
    %p475 = pneg %p474
    // Predicated region
    $region9: #{contra_forward.1} parent=5 // pred_check
      _
    $region10: #{contra_forward.1} parent=5 // pred_check_branch
      %477 = sbr.rel (%p474) target = $region12
    $region11: #{contra_forward.1} parent=5 // pred_region
      %s478 = ssub.s32 %s22, 1
    $region12: #{contra_forward.1} parent=5 // pred_fallthru
      _
    %p479 = scmp.lt.s32.totalorder %s22, 2
    // Predicated region
    $region13: #{contra_forward.1} parent=5 // pred_check
      %p480 = pneg %p479
    $region14: #{contra_forward.1} parent=5 // pred_check_branch
      %482 = sbr.rel (%p480) target = $region16
    $region15: #{contra_forward.1} parent=5 // pred_region
      // Predicated region
      $region17: #{contra_forward.1} parent=15 // pred_check
        %p483 = pneg %p42
      $region18: #{contra_forward.1} parent=15 // pred_check_branch
        %485 = sbr.rel (%p483) target = $region20
      $region19: #{contra_forward.1} parent=15 // pred_region
        %p486 = scmp.lt.s32.totalorder %s22, 1
        %s487 = scalar_select %p486, %s22, 1
        %s488 = smul.addr %s487, 2
        %s489 = smul.addr %s488, 8
        %s490 = scalar_lea.vmem %s0, %s489
      $region20: #{contra_forward.1} parent=15 // pred_fallthru
        _
      // Predicated region
      $region21: #{contra_forward.1} parent=15 // pred_check
        %p491 = pneg %p68
      $region22: #{contra_forward.1} parent=15 // pred_check_branch
        %493 = sbr.rel (%p491) target = $region24
      $region23: #{contra_forward.1} parent=15 // pred_region
        %p494 = scmp.lt.s32.totalorder %s22, 1
        %s495 = scalar_select %p494, %s22, 1
        %s496 = smul.addr %s495, 8
        %s497 = scalar_lea.vmem %s1, %s496
      $region24: #{contra_forward.1} parent=15 // pred_fallthru
        _
      // Predicated region
      $region25: #{contra_forward.1} parent=15 // pred_check
        %p498 = pneg %p94
      $region26: #{contra_forward.1} parent=15 // pred_check_branch
        %500 = sbr.rel (%p498) target = $region28
      $region27: #{contra_forward.1} parent=15 // pred_region
        %p501 = scmp.lt.s32.totalorder %s22, 1
        %s502 = scalar_select %p501, %s22, 1
        %s503 = smul.addr %s502, 8
        %s504 = smul.addr %s503, 8
        %s505 = scalar_lea.vmem %s2, %s504
      $region28: #{contra_forward.1} parent=15 // pred_fallthru
        _
      // Predicated region
      $region29: #{contra_forward.1} parent=15 // pred_check
        %p506 = pneg %p120
      $region30: #{contra_forward.1} parent=15 // pred_check_branch
        %508 = sbr.rel (%p506) target = $region32
      $region31: #{contra_forward.1} parent=15 // pred_region
        %p509 = scmp.lt.s32.totalorder %s22, 1
        %s510 = scalar_select %p509, %s22, 1
        %s511 = smul.addr %s510, 2
        %s512 = scalar_lea.vmem %s3, %s511
      $region32: #{contra_forward.1} parent=15 // pred_fallthru
        _
      // Predicated region
      $region33: #{contra_forward.1} parent=15 // pred_check
        %p513 = pneg %p146
      $region34: #{contra_forward.1} parent=15 // pred_check_branch
        %515 = sbr.rel (%p513) target = $region36
      $region35: #{contra_forward.1} parent=15 // pred_region
        %p516 = scmp.lt.s32.totalorder %s22, 1
        %s517 = scalar_select %p516, %s22, 1
        %s518 = smul.addr %s517, 8
        %s519 = smul.addr %s518, 8
        %s520 = scalar_lea.vmem %s4, %s519
      $region36: #{contra_forward.1} parent=15 // pred_fallthru
        _
      // Predicated region
      $region37: #{contra_forward.1} parent=15 // pred_check
        %p521 = pneg %p172
      $region38: #{contra_forward.1} parent=15 // pred_check_branch
        %523 = sbr.rel (%p521) target = $region40
      $region39: #{contra_forward.1} parent=15 // pred_region
        %p524 = scmp.lt.s32.totalorder %s22, 1
        %s525 = scalar_select %p524, %s22, 1
        %s526 = smul.addr %s525, 2
        %s527 = scalar_lea.vmem %s5, %s526
      $region40: #{contra_forward.1} parent=15 // pred_fallthru
        _
      // Predicated region
      $region41: #{contra_forward.1} parent=15 // pred_check
        %p528 = pneg %p198
      $region42: #{contra_forward.1} parent=15 // pred_check_branch
        %530 = sbr.rel (%p528) target = $region44
      $region43: #{contra_forward.1} parent=15 // pred_region
        %p531 = scmp.lt.s32.totalorder %s22, 1
        %s532 = scalar_select %p531, %s22, 1
        %s533 = smul.addr %s532, 8
        %s534 = smul.addr %s533, 8
        %s535 = scalar_lea.vmem %s6, %s534
      $region44: #{contra_forward.1} parent=15 // pred_fallthru
        _
      // Predicated region
      $region45: #{contra_forward.1} parent=15 // pred_check
        %p536 = pneg %p224
      $region46: #{contra_forward.1} parent=15 // pred_check_branch
        %538 = sbr.rel (%p536) target = $region48
      $region47: #{contra_forward.1} parent=15 // pred_region
        %p539 = scmp.lt.s32.totalorder %s22, 1
        %s540 = scalar_select %p539, %s22, 1
        %s541 = smul.addr %s540, 2
        %s542 = scalar_lea.vmem %s7, %s541
      $region48: #{contra_forward.1} parent=15 // pred_fallthru
        _
      // Predicated region
      $region49: #{contra_forward.1} parent=15 // pred_check
        %p543 = pneg %p250
      $region50: #{contra_forward.1} parent=15 // pred_check_branch
        %545 = sbr.rel (%p543) target = $region52
      $region51: #{contra_forward.1} parent=15 // pred_region
        %p546 = scmp.lt.s32.totalorder %s22, 1
        %s547 = scalar_select %p546, %s22, 1
        %s548 = smul.addr %s547, 16
        %s549 = smul.addr %s548, 8
        %s550 = scalar_lea.vmem %s8, %s549
      $region52: #{contra_forward.1} parent=15 // pred_fallthru
        _
      // Predicated region
      $region53: #{contra_forward.1} parent=15 // pred_check
        %p551 = pneg %p276
      $region54: #{contra_forward.1} parent=15 // pred_check_branch
        %553 = sbr.rel (%p551) target = $region56
      $region55: #{contra_forward.1} parent=15 // pred_region
        %p554 = scmp.lt.s32.totalorder %s22, 1
        %s555 = scalar_select %p554, %s22, 1
        %s556 = smul.addr %s555, 2
        %s557 = scalar_lea.vmem %s9, %s556
      $region56: #{contra_forward.1} parent=15 // pred_fallthru
        _
      // Predicated region
      $region57: #{contra_forward.1} parent=15 // pred_check
        %p558 = pneg %p302
      $region58: #{contra_forward.1} parent=15 // pred_check_branch
        %560 = sbr.rel (%p558) target = $region60
      $region59: #{contra_forward.1} parent=15 // pred_region
        %p561 = scmp.lt.s32.totalorder %s22, 1
        %s562 = scalar_select %p561, %s22, 1
        %s563 = smul.addr %s562, 2
        %s564 = scalar_lea.vmem %s10, %s563
      $region60: #{contra_forward.1} parent=15 // pred_fallthru
        _
      // Predicated region
      $region61: #{contra_forward.1} parent=15 // pred_check
        %p565 = pneg %p328
      $region62: #{contra_forward.1} parent=15 // pred_check_branch
        %567 = sbr.rel (%p565) target = $region64
      $region63: #{contra_forward.1} parent=15 // pred_region
        %p568 = scmp.lt.s32.totalorder %s22, 1
        %s569 = scalar_select %p568, %s22, 1
        %s570 = smul.addr %s569, 2
        %s571 = scalar_lea.vmem %s11, %s570
      $region64: #{contra_forward.1} parent=15 // pred_fallthru
        _
      // Predicated region
      $region65: #{contra_forward.1} parent=15 // pred_check
        %p572 = pneg %p354
      $region66: #{contra_forward.1} parent=15 // pred_check_branch
        %574 = sbr.rel (%p572) target = $region68
      $region67: #{contra_forward.1} parent=15 // pred_region
        %p575 = scmp.lt.s32.totalorder %s22, 1
        %s576 = scalar_select %p575, %s22, 1
        %s577 = smul.addr %s576, 2
        %s578 = scalar_lea.vmem %s12, %s577
      $region68: #{contra_forward.1} parent=15 // pred_fallthru
        _
      // Predicated region
      $region69: #{contra_forward.1} parent=15 // pred_check
        %p579 = pneg %p380
      $region70: #{contra_forward.1} parent=15 // pred_check_branch
        %581 = sbr.rel (%p579) target = $region72
      $region71: #{contra_forward.1} parent=15 // pred_region
        %p582 = scmp.lt.s32.totalorder %s22, 1
        %s583 = scalar_select %p582, %s22, 1
        %s584 = smul.addr %s583, 2
        %s585 = scalar_lea.vmem %s13, %s584
      $region72: #{contra_forward.1} parent=15 // pred_fallthru
        _
      // Predicated region
      $region73: #{contra_forward.1} parent=15 // pred_check
        %p586 = pneg %p406
      $region74: #{contra_forward.1} parent=15 // pred_check_branch
        %588 = sbr.rel (%p586) target = $region76
      $region75: #{contra_forward.1} parent=15 // pred_region
        %p589 = scmp.lt.s32.totalorder %s22, 1
        %s590 = scalar_select %p589, %s22, 1
        %s591 = scalar_lea.vmem %s14, %s590
      $region76: #{contra_forward.1} parent=15 // pred_fallthru
        _
      // Predicated region
      $region77: #{contra_forward.1} parent=15 // pred_check
        %p592 = pneg %p432
      $region78: #{contra_forward.1} parent=15 // pred_check_branch
        %594 = sbr.rel (%p592) target = $region80
      $region79: #{contra_forward.1} parent=15 // pred_region
        %p595 = scmp.lt.s32.totalorder %s22, 1
        %s596 = scalar_select %p595, %s22, 1
        %s597 = scalar_lea.vmem %s15, %s596
      $region80: #{contra_forward.1} parent=15 // pred_fallthru
        _
    $region16: #{contra_forward.1} parent=5 // pred_fallthru
      _
    %p598 = scmp.le.s32.totalorder 1, %s22
    %p599 = scmp.lt.s32.totalorder %s22, 3
    %p600 = pnand %p598, %p599
    %p601 = pneg %p600
    // Predicated region
    $region81: #{contra_forward.1} parent=5 // pred_check
      _
    $region82: #{contra_forward.1} parent=5 // pred_check_branch
      %603 = sbr.rel (%p600) target = $region84
    $region83: #{contra_forward.1} parent=5 // pred_region
      %s604 = ssub.s32 %s22, 1
      %p605 = scmp.lt.s32.totalorder %s27, 1
      %s606 = scalar_select %p605, %s27, 1
      %s607 = smul.addr %s606, 2
      %s608 = smul.addr %s607, 8
      %s609 = scalar_lea.vmem %s0, %s608
      %p610 = pneg %p48
      %p611 = pneg %p45
      %p612 = scmp.lt.s32.totalorder %s27, 1
      %s613 = scalar_select %p612, %s27, 1
      %s614 = smul.addr %s613, 8
      %s615 = scalar_lea.vmem %s1, %s614
      %p616 = pneg %p74
      %p617 = pneg %p71
      %p618 = scmp.lt.s32.totalorder %s27, 1
      %s619 = scalar_select %p618, %s27, 1
      %s620 = smul.addr %s619, 8
      %s621 = smul.addr %s620, 8
      %s622 = scalar_lea.vmem %s2, %s621
      %p623 = pneg %p100
      %p624 = pneg %p97
      %p625 = scmp.lt.s32.totalorder %s27, 1
      %s626 = scalar_select %p625, %s27, 1
      %s627 = smul.addr %s626, 2
      %s628 = scalar_lea.vmem %s3, %s627
      %p629 = pneg %p126
      %p630 = pneg %p123
      %p631 = scmp.lt.s32.totalorder %s27, 1
      %s632 = scalar_select %p631, %s27, 1
      %s633 = smul.addr %s632, 8
      %s634 = smul.addr %s633, 8
      %s635 = scalar_lea.vmem %s4, %s634
      %p636 = pneg %p152
      %p637 = pneg %p149
      %p638 = scmp.lt.s32.totalorder %s27, 1
      %s639 = scalar_select %p638, %s27, 1
      %s640 = smul.addr %s639, 2
      %s641 = scalar_lea.vmem %s5, %s640
      %p642 = pneg %p178
      %p643 = pneg %p175
      %p644 = scmp.lt.s32.totalorder %s27, 1
      %s645 = scalar_select %p644, %s27, 1
      %s646 = smul.addr %s645, 8
      %s647 = smul.addr %s646, 8
      %s648 = scalar_lea.vmem %s6, %s647
      %p649 = pneg %p204
      %p650 = pneg %p201
      %p651 = scmp.lt.s32.totalorder %s27, 1
      %s652 = scalar_select %p651, %s27, 1
      %s653 = smul.addr %s652, 2
      %s654 = scalar_lea.vmem %s7, %s653
      %p655 = pneg %p230
      %p656 = pneg %p227
      %p657 = scmp.lt.s32.totalorder %s27, 1
      %s658 = scalar_select %p657, %s27, 1
      %s659 = smul.addr %s658, 16
      %s660 = smul.addr %s659, 8
      %s661 = scalar_lea.vmem %s8, %s660
      %p662 = pneg %p256
      %p663 = pneg %p253
      %p664 = scmp.lt.s32.totalorder %s27, 1
      %s665 = scalar_select %p664, %s27, 1
      %s666 = smul.addr %s665, 2
      %s667 = scalar_lea.vmem %s9, %s666
      %p668 = pneg %p282
      %p669 = pneg %p279
      %p670 = scmp.lt.s32.totalorder %s27, 1
      %s671 = scalar_select %p670, %s27, 1
      %s672 = smul.addr %s671, 2
      %s673 = scalar_lea.vmem %s10, %s672
      %p674 = pneg %p308
      %p675 = pneg %p305
      %p676 = scmp.lt.s32.totalorder %s27, 1
      %s677 = scalar_select %p676, %s27, 1
      %s678 = smul.addr %s677, 2
      %s679 = scalar_lea.vmem %s11, %s678
      %p680 = pneg %p334
      %p681 = pneg %p331
      %p682 = scmp.lt.s32.totalorder %s27, 1
      %s683 = scalar_select %p682, %s27, 1
      %s684 = smul.addr %s683, 2
      %s685 = scalar_lea.vmem %s12, %s684
      %p686 = pneg %p360
      %p687 = pneg %p357
      %p688 = scmp.lt.s32.totalorder %s27, 1
      %s689 = scalar_select %p688, %s27, 1
      %s690 = smul.addr %s689, 2
      %s691 = scalar_lea.vmem %s13, %s690
      %p692 = pneg %p386
      %p693 = pneg %p383
      %p694 = scmp.lt.s32.totalorder %s27, 1
      %s695 = scalar_select %p694, %s27, 1
      %s696 = scalar_lea.vmem %s14, %s695
      %p697 = pneg %p412
      %p698 = pneg %p409
      %p699 = scmp.lt.s32.totalorder %s27, 1
      %s700 = scalar_select %p699, %s27, 1
      %s701 = scalar_lea.vmem %s15, %s700
      %p702 = pneg %p438
      %p703 = pneg %p435
      %p704 = pneg %p464
      %p705 = pneg %p461
      %p706 = scmp.lt.s32.totalorder %s27, 1
      %s707 = scalar_select %p706, %s27, 1
      %s708 = smul.addr %s707, 2
      %s709 = scalar_lea.vmem %s16, %s708
      %p710 = scmp.lt.s32.totalorder %s27, 1
      %s711 = scalar_select %p710, %s27, 1
      %s712 = smul.addr %s711, 2
      %s713 = smul.addr %s712, 8
      %s714 = scalar_lea.vmem %s0, %s713
      %p715 = scmp.lt.s32.totalorder %s27, 1
      %s716 = scalar_select %p715, %s27, 1
      %s717 = smul.addr %s716, 8
      %s718 = scalar_lea.vmem %s1, %s717
      %p719 = scmp.lt.s32.totalorder %s27, 1
      %s720 = scalar_select %p719, %s27, 1
      %s721 = smul.addr %s720, 8
      %s722 = smul.addr %s721, 8
      %s723 = scalar_lea.vmem %s2, %s722
      %p724 = scmp.lt.s32.totalorder %s27, 1
      %s725 = scalar_select %p724, %s27, 1
      %s726 = smul.addr %s725, 2
      %s727 = scalar_lea.vmem %s3, %s726
      %p728 = scmp.lt.s32.totalorder %s27, 1
      %s729 = scalar_select %p728, %s27, 1
      %s730 = smul.addr %s729, 8
      %s731 = smul.addr %s730, 8
      %s732 = scalar_lea.vmem %s4, %s731
      %p733 = scmp.lt.s32.totalorder %s27, 1
      %s734 = scalar_select %p733, %s27, 1
      %s735 = smul.addr %s734, 2
      %s736 = scalar_lea.vmem %s5, %s735
      %p737 = scmp.lt.s32.totalorder %s27, 1
      %s738 = scalar_select %p737, %s27, 1
      %s739 = smul.addr %s738, 8
      %s740 = smul.addr %s739, 8
      %s741 = scalar_lea.vmem %s6, %s740
      %p742 = scmp.lt.s32.totalorder %s27, 1
      %s743 = scalar_select %p742, %s27, 1
      %s744 = smul.addr %s743, 2
      %s745 = scalar_lea.vmem %s7, %s744
      %p746 = scmp.lt.s32.totalorder %s27, 1
      %s747 = scalar_select %p746, %s27, 1
      %s748 = smul.addr %s747, 16
      %s749 = smul.addr %s748, 8
      %s750 = scalar_lea.vmem %s8, %s749
      %p751 = scmp.lt.s32.totalorder %s27, 1
      %s752 = scalar_select %p751, %s27, 1
      %s753 = smul.addr %s752, 2
      %s754 = scalar_lea.vmem %s9, %s753
      %p755 = scmp.lt.s32.totalorder %s27, 1
      %s756 = scalar_select %p755, %s27, 1
      %s757 = smul.addr %s756, 2
      %s758 = scalar_lea.vmem %s10, %s757
      %p759 = scmp.lt.s32.totalorder %s27, 1
      %s760 = scalar_select %p759, %s27, 1
      %s761 = smul.addr %s760, 2
      %s762 = scalar_lea.vmem %s11, %s761
      %p763 = scmp.lt.s32.totalorder %s27, 1
      %s764 = scalar_select %p763, %s27, 1
      %s765 = smul.addr %s764, 2
      %s766 = scalar_lea.vmem %s12, %s765
      %p767 = scmp.lt.s32.totalorder %s27, 1
      %s768 = scalar_select %p767, %s27, 1
      %s769 = smul.addr %s768, 2
      %s770 = scalar_lea.vmem %s13, %s769
      %p771 = scmp.lt.s32.totalorder %s27, 1
      %s772 = scalar_select %p771, %s27, 1
      %s773 = scalar_lea.vmem %s14, %s772
      %p774 = scmp.lt.s32.totalorder %s27, 1
      %s775 = scalar_select %p774, %s27, 1
      %s776 = scalar_lea.vmem %s15, %s775
      %p777 = scmp.lt.s32.totalorder %s27, 1
      %s778 = scalar_select %p777, %s27, 1
      %s779 = smul.addr %s778, 2
      %s780 = scalar_lea.vmem %s16, %s779
      %v781 = vld [vmem:[%s714] sm:$0xff]
      %v782 = vld [vmem:[%s714 + $0x8] sm:$0xff]
      %v783 = vld [vmem:[%s718] sm:$0xff]
      %v784 = vadd.f32 %v781, %v783
      %v785 = vadd.f32 %v782, %v783
      %v786 = vld [vmem:[%s723] sm:$0xff]
      %v787 = vld [vmem:[%s723 + $0x8] sm:$0xff]
      %v788 = vld [vmem:[%s723 + $0x10] sm:$0xff]
      %v789 = vld [vmem:[%s723 + $0x18] sm:$0xff]
      %v790 = vld [vmem:[%s727] sm:$0x1]
      %v792 = vlaneseq
      %v793 = vshrl.u32 %v792, 7
      %v794 = vsub.s32 0, %v793
      %v795 = vrot.slane %v790, %v794
      %vm797 = vcmask 261120
      %v799 = vsel %vm797, %v784, 0
      %v802 = vsel %vm797, %v785, 0
      %804 = vmatprep.subr.mxu0 0.0
      %805 = vmatpush1.msra.mxu0 0.0
      %806 = vmatprep.subr.mxu0 0.0
      %807 = vmatpush1.msra.mxu0 0.0
      %808 = vmatprep.subr.mxu0 0.0
      %809 = vmatpush1.msra.mxu0 0.0
      %810 = vmatprep.subr.mxu0 0.0
      %811 = vmatpush1.msra.mxu0 0.0
      %812 = vmatprep.subr.mxu0 0.0
      %813 = vmatpush1.msra.mxu0 0.0
      %814 = vmatprep.subr.mxu0 0.0
      %815 = vmatpush1.msra.mxu0 0.0
      %816 = vmatprep.subr.mxu0 0.0
      %817 = vmatpush1.msra.mxu0 0.0
      %818 = vmatprep.subr.mxu0 0.0
      %819 = vmatpush1.msra.mxu0 0.0
      %820 = vmatprep.subr.mxu0 0.0
      %821 = vmatpush1.msra.mxu0 0.0
      %822 = vmatprep.subr.mxu0 0.0
      %823 = vmatpush1.msra.mxu0 0.0
      %824 = vmatprep.subr.mxu0 0.0
      %825 = vmatpush1.msra.mxu0 0.0
      %826 = vmatprep.subr.mxu0 0.0
      %827 = vmatpush1.msra.mxu0 0.0
      %828 = vmatprep.subr.mxu0 0.0
      %829 = vmatpush1.msra.mxu0 %v789
      %830 = vmatprep.subr.mxu0 0.0
      %831 = vmatpush1.msra.mxu0 %v788
      %832 = vmatprep.subr.mxu0 0.0
      %833 = vmatpush1.msra.mxu0 %v787
      %834 = vmatprep.subr.mxu0 0.0
      %835 = vmatpush1.msra.mxu0 %v786
      %836 = vmatprep.subr.mxu0 0.0
      %837 = vmatpush2.msra.mxu0 0.0
      %838 = vmatprep.subr.mxu0 0.0
      %839 = vmatpush2.msra.mxu0 0.0
      %840 = vmatprep.subr.mxu0 0.0
      %841 = vmatpush2.msra.mxu0 0.0
      %842 = vmatprep.subr.mxu0 0.0
      %843 = vmatpush2.msra.mxu0 0.0
      %844 = vmatprep.subr.mxu0 0.0
      %845 = vmatpush2.msra.mxu0 0.0
      %846 = vmatprep.subr.mxu0 0.0
      %847 = vmatpush2.msra.mxu0 0.0
      %848 = vmatprep.subr.mxu0 0.0
      %849 = vmatpush2.msra.mxu0 0.0
      %850 = vmatprep.subr.mxu0 0.0
      %851 = vmatpush2.msra.mxu0 0.0
      %852 = vmatprep.subr.mxu0 0.0
      %853 = vmatpush2.msra.mxu0 0.0
      %854 = vmatprep.subr.mxu0 0.0
      %855 = vmatpush2.msra.mxu0 0.0
      %856 = vmatprep.subr.mxu0 0.0
      %857 = vmatpush2.msra.mxu0 0.0
      %858 = vmatprep.subr.mxu0 0.0
      %859 = vmatpush2.msra.mxu0 0.0
      %860 = vmatprep.subr.mxu0 0.0
      %861 = vmatpush2.msra.mxu0 0.0
      %862 = vmatprep.subr.mxu0 0.0
      %863 = vmatpush2.msra.mxu0 0.0
      %864 = vmatprep.subr.mxu0 0.0
      %865 = vmatpush2.msra.mxu0 0.0
      %866 = vmatprep.subr.mxu0 0.0
      %867 = vmatpush2.msra.mxu0 0.0
      %868 = vmatprep.mubr.f32.mxu0 0.0
      %869 = vmatmul.mubr.f32.gmra.mxu0 %v799
      %v870 = vpop.f32.mrf.mxu0
      %v871 = vadd.f32 %v795, %v870
      %v872 = vpop.f32.mrf.mxu0
      %873 = vmatprep.mubr.f32.mxu0 0.0
      %874 = vmatmul.mubr.f32.gmra.mxu0 %v802
      %v875 = vpop.f32.mrf.mxu0
      %v876 = vadd.f32 %v795, %v875
      %v877 = vpop.f32.mrf.mxu0
      %878 = vdwg.mxu0
      %v879 = vmul.f32 %v871, 0.35355338
      %v880 = vmul.f32 %v876, 0.35355338
      %882 = vrot.lane.b32.xlu0 %v871, 96
      %v883 = vpop.permute.xlu0 %882
      %vm884 = vcmask 64512
      %v886 = vsel %vm884, %v879, 0
      %v888 = vsel %vm884, %v883, 0
      %890 = vmatprep.subr.mxu0 0.0
      %891 = vmatpush1.xpose.msra.mxu0 0.0
      %892 = vmatprep.subr.mxu0 0.0
      %893 = vmatpush1.xpose.msra.mxu0 0.0
      %894 = vmatprep.subr.mxu0 0.0
      %895 = vmatpush1.xpose.msra.mxu0 0.0
      %896 = vmatprep.subr.mxu0 0.0
      %897 = vmatpush1.xpose.msra.mxu0 0.0
      %898 = vmatprep.subr.mxu0 0.0
      %899 = vmatpush1.xpose.msra.mxu0 0.0
      %900 = vmatprep.subr.mxu0 0.0
      %901 = vmatpush1.xpose.msra.mxu0 0.0
      %902 = vmatprep.subr.mxu0 0.0
      %903 = vmatpush1.xpose.msra.mxu0 0.0
      %904 = vmatprep.subr.mxu0 0.0
      %905 = vmatpush1.xpose.msra.mxu0 0.0
      %906 = vmatprep.subr.mxu0 0.0
      %907 = vmatpush1.xpose.msra.mxu0 0.0
      %908 = vmatprep.subr.mxu0 0.0
      %909 = vmatpush1.xpose.msra.mxu0 0.0
      %910 = vmatprep.subr.mxu0 0.0
      %911 = vmatpush1.xpose.msra.mxu0 0.0
      %912 = vmatprep.subr.mxu0 0.0
      %913 = vmatpush1.xpose.msra.mxu0 0.0
      %914 = vmatprep.subr.mxu0 0.0
      %915 = vmatpush1.xpose.msra.mxu0 0.0
      %916 = vmatprep.subr.mxu0 0.0
      %917 = vmatpush1.xpose.msra.mxu0 0.0
      %918 = vmatprep.subr.mxu0 0.0
      %919 = vmatpush1.xpose.msra.mxu0 0.0
      %920 = vmatprep.subr.mxu0 0.0
      %921 = vmatpush1.xpose.msra.mxu0 %v888
      %922 = vmatprep.subr.mxu0 0.0
      %923 = vmatpush2.xpose.msra.mxu0 0.0
      %924 = vmatprep.subr.mxu0 0.0
      %925 = vmatpush2.xpose.msra.mxu0 0.0
      %926 = vmatprep.subr.mxu0 0.0
      %927 = vmatpush2.xpose.msra.mxu0 0.0
      %928 = vmatprep.subr.mxu0 0.0
      %929 = vmatpush2.xpose.msra.mxu0 0.0
      %930 = vmatprep.subr.mxu0 0.0
      %931 = vmatpush2.xpose.msra.mxu0 0.0
      %932 = vmatprep.subr.mxu0 0.0
      %933 = vmatpush2.xpose.msra.mxu0 0.0
      %934 = vmatprep.subr.mxu0 0.0
      %935 = vmatpush2.xpose.msra.mxu0 0.0
      %936 = vmatprep.subr.mxu0 0.0
      %937 = vmatpush2.xpose.msra.mxu0 0.0
      %938 = vmatprep.subr.mxu0 0.0
      %939 = vmatpush2.xpose.msra.mxu0 0.0
      %940 = vmatprep.subr.mxu0 0.0
      %941 = vmatpush2.xpose.msra.mxu0 0.0
      %942 = vmatprep.subr.mxu0 0.0
      %943 = vmatpush2.xpose.msra.mxu0 0.0
      %944 = vmatprep.subr.mxu0 0.0
      %945 = vmatpush2.xpose.msra.mxu0 0.0
      %946 = vmatprep.subr.mxu0 0.0
      %947 = vmatpush2.xpose.msra.mxu0 0.0
      %948 = vmatprep.subr.mxu0 0.0
      %949 = vmatpush2.xpose.msra.mxu0 0.0
      %950 = vmatprep.subr.mxu0 0.0
      %951 = vmatpush2.xpose.msra.mxu0 0.0
      %952 = vmatprep.subr.mxu0 0.0
      %953 = vmatpush2.xpose.msra.mxu0 0.0
      %954 = vmatprep.mubr.f32.mxu0 0.0
      %955 = vmatmul.mubr.f32.gmra.mxu0 %v886
      %v956 = vpop.f32.mrf.mxu0
      %v957 = vadd.f32 0.0, %v956
      %v958 = vpop.f32.mrf.mxu0
      %959 = vdwg.mxu0
      %961 = vrot.lane.b32.xlu0 %v876, 96
      %v962 = vpop.permute.xlu0 %961
      %v964 = vsel %vm884, %v880, 0
      %v966 = vsel %vm884, %v962, 0
      %968 = vmatprep.subr.mxu0 0.0
      %969 = vmatpush1.xpose.msra.mxu0 0.0
      %970 = vmatprep.subr.mxu0 0.0
      %971 = vmatpush1.xpose.msra.mxu0 0.0
      %972 = vmatprep.subr.mxu0 0.0
      %973 = vmatpush1.xpose.msra.mxu0 0.0
      %974 = vmatprep.subr.mxu0 0.0
      %975 = vmatpush1.xpose.msra.mxu0 0.0
      %976 = vmatprep.subr.mxu0 0.0
      %977 = vmatpush1.xpose.msra.mxu0 0.0
      %978 = vmatprep.subr.mxu0 0.0
      %979 = vmatpush1.xpose.msra.mxu0 0.0
      %980 = vmatprep.subr.mxu0 0.0
      %981 = vmatpush1.xpose.msra.mxu0 0.0
      %982 = vmatprep.subr.mxu0 0.0
      %983 = vmatpush1.xpose.msra.mxu0 0.0
      %984 = vmatprep.subr.mxu0 0.0
      %985 = vmatpush1.xpose.msra.mxu0 0.0
      %986 = vmatprep.subr.mxu0 0.0
      %987 = vmatpush1.xpose.msra.mxu0 0.0
      %988 = vmatprep.subr.mxu0 0.0
      %989 = vmatpush1.xpose.msra.mxu0 0.0
      %990 = vmatprep.subr.mxu0 0.0
      %991 = vmatpush1.xpose.msra.mxu0 0.0
      %992 = vmatprep.subr.mxu0 0.0
      %993 = vmatpush1.xpose.msra.mxu0 0.0
      %994 = vmatprep.subr.mxu0 0.0
      %995 = vmatpush1.xpose.msra.mxu0 0.0
      %996 = vmatprep.subr.mxu0 0.0
      %997 = vmatpush1.xpose.msra.mxu0 0.0
      %998 = vmatprep.subr.mxu0 0.0
      %999 = vmatpush1.xpose.msra.mxu0 %v966
      %1000 = vmatprep.subr.mxu0 0.0
      %1001 = vmatpush2.xpose.msra.mxu0 0.0
      %1002 = vmatprep.subr.mxu0 0.0
      %1003 = vmatpush2.xpose.msra.mxu0 0.0
      %1004 = vmatprep.subr.mxu0 0.0
      %1005 = vmatpush2.xpose.msra.mxu0 0.0
      %1006 = vmatprep.subr.mxu0 0.0
      %1007 = vmatpush2.xpose.msra.mxu0 0.0
      %1008 = vmatprep.subr.mxu0 0.0
      %1009 = vmatpush2.xpose.msra.mxu0 0.0
      %1010 = vmatprep.subr.mxu0 0.0
      %1011 = vmatpush2.xpose.msra.mxu0 0.0
      %1012 = vmatprep.subr.mxu0 0.0
      %1013 = vmatpush2.xpose.msra.mxu0 0.0
      %1014 = vmatprep.subr.mxu0 0.0
      %1015 = vmatpush2.xpose.msra.mxu0 0.0
      %1016 = vmatprep.subr.mxu0 0.0
      %1017 = vmatpush2.xpose.msra.mxu0 0.0
      %1018 = vmatprep.subr.mxu0 0.0
      %1019 = vmatpush2.xpose.msra.mxu0 0.0
      %1020 = vmatprep.subr.mxu0 0.0
      %1021 = vmatpush2.xpose.msra.mxu0 0.0
      %1022 = vmatprep.subr.mxu0 0.0
      %1023 = vmatpush2.xpose.msra.mxu0 0.0
      %1024 = vmatprep.subr.mxu0 0.0
      %1025 = vmatpush2.xpose.msra.mxu0 0.0
      %1026 = vmatprep.subr.mxu0 0.0
      %1027 = vmatpush2.xpose.msra.mxu0 0.0
      %1028 = vmatprep.subr.mxu0 0.0
      %1029 = vmatpush2.xpose.msra.mxu0 0.0
      %1030 = vmatprep.subr.mxu0 0.0
      %1031 = vmatpush2.xpose.msra.mxu0 0.0
      %1032 = vmatprep.mubr.f32.mxu0 0.0
      %1033 = vmatmul.mubr.f32.gmra.mxu0 %v964
      %v1034 = vpop.f32.mrf.mxu0
      %v1035 = vadd.f32 0.0, %v1034
      %v1036 = vpop.f32.mrf.mxu0
      %1037 = vdwg.mxu0
      %v1038 = vsel %vm884, %v957, -inf
      %1039 = vmax.xlane.f32.xlu0 %v1038
      %v1040 = vpop.xlane.xlu0 %1039
      %v1041 = vsel %vm884, %v1035, -inf
      %1042 = vmax.xlane.f32.xlu0 %v1041
      %v1043 = vpop.xlane.xlu0 %1042
      %v1044 = vsub.f32 %v957, %v1040
      %v1045 = vsub.f32 %v1035, %v1043
      %v1046 = vmul.f32 %v1044, 1.442695
      %v1047 = vpow.pop %v1046
      %v1048 = vmul.f32 %v1045, 1.442695
      %v1049 = vpow.pop %v1048
      %v1050 = vsel %vm884, %v1047, 0.0
      %1051 = vadd.xlane.f32.xlu0 %v1050
      %v1052 = vpop.xlane.xlu0 %1051
      %v1053 = vsel %vm884, %v1049, 0.0
      %1054 = vadd.xlane.f32.xlu0 %v1053
      %v1055 = vpop.xlane.xlu0 %1054
      %v1056 = vrcp.pop %v1052
      %v1057 = vrcp.pop %v1055
      %v1058 = vmul.f32 %v1047, %v1056
      %v1059 = vmul.f32 %v1049, %v1057
      %1060 = vrot.lane.b32.xlu0 %v871, 64
      %v1061 = vpop.permute.xlu0 %1060
      %v1064 = vsel %vm884, %v1058, 0
      %1066 = vmatprep.subr.mxu0 0.0
      %1067 = vmatpush1.msra.mxu0 0.0
      %1068 = vmatprep.subr.mxu0 0.0
      %1069 = vmatpush1.msra.mxu0 0.0
      %1070 = vmatprep.subr.mxu0 0.0
      %1071 = vmatpush1.msra.mxu0 0.0
      %1072 = vmatprep.subr.mxu0 0.0
      %1073 = vmatpush1.msra.mxu0 0.0
      %1074 = vmatprep.subr.mxu0 0.0
      %1075 = vmatpush1.msra.mxu0 0.0
      %1076 = vmatprep.subr.mxu0 0.0
      %1077 = vmatpush1.msra.mxu0 0.0
      %1078 = vmatprep.subr.mxu0 0.0
      %1079 = vmatpush1.msra.mxu0 0.0
      %1080 = vmatprep.subr.mxu0 0.0
      %1081 = vmatpush1.msra.mxu0 0.0
      %1082 = vmatprep.subr.mxu0 0.0
      %1083 = vmatpush1.msra.mxu0 0.0
      %1084 = vmatprep.subr.mxu0 0.0
      %1085 = vmatpush1.msra.mxu0 0.0
      %1086 = vmatprep.subr.mxu0 0.0
      %1087 = vmatpush1.msra.mxu0 0.0
      %1088 = vmatprep.subr.mxu0 0.0
      %1089 = vmatpush1.msra.mxu0 0.0
      %1090 = vmatprep.subr.mxu0 0.0
      %1091 = vmatpush1.msra.mxu0 0.0
      %1092 = vmatprep.subr.mxu0 0.0
      %1093 = vmatpush1.msra.mxu0 0.0
      %1094 = vmatprep.subr.mxu0 0.0
      %1095 = vmatpush1.msra.mxu0 0.0
      %1096 = vmatprep.subr.mxu0 0.0
      %1097 = vmatpush1.msra.mxu0 %v1061
      %1098 = vmatprep.subr.mxu0 0.0
      %1099 = vmatpush2.msra.mxu0 0.0
      %1100 = vmatprep.subr.mxu0 0.0
      %1101 = vmatpush2.msra.mxu0 0.0
      %1102 = vmatprep.subr.mxu0 0.0
      %1103 = vmatpush2.msra.mxu0 0.0
      %1104 = vmatprep.subr.mxu0 0.0
      %1105 = vmatpush2.msra.mxu0 0.0
      %1106 = vmatprep.subr.mxu0 0.0
      %1107 = vmatpush2.msra.mxu0 0.0
      %1108 = vmatprep.subr.mxu0 0.0
      %1109 = vmatpush2.msra.mxu0 0.0
      %1110 = vmatprep.subr.mxu0 0.0
      %1111 = vmatpush2.msra.mxu0 0.0
      %1112 = vmatprep.subr.mxu0 0.0
      %1113 = vmatpush2.msra.mxu0 0.0
      %1114 = vmatprep.subr.mxu0 0.0
      %1115 = vmatpush2.msra.mxu0 0.0
      %1116 = vmatprep.subr.mxu0 0.0
      %1117 = vmatpush2.msra.mxu0 0.0
      %1118 = vmatprep.subr.mxu0 0.0
      %1119 = vmatpush2.msra.mxu0 0.0
      %1120 = vmatprep.subr.mxu0 0.0
      %1121 = vmatpush2.msra.mxu0 0.0
      %1122 = vmatprep.subr.mxu0 0.0
      %1123 = vmatpush2.msra.mxu0 0.0
      %1124 = vmatprep.subr.mxu0 0.0
      %1125 = vmatpush2.msra.mxu0 0.0
      %1126 = vmatprep.subr.mxu0 0.0
      %1127 = vmatpush2.msra.mxu0 0.0
      %1128 = vmatprep.subr.mxu0 0.0
      %1129 = vmatpush2.msra.mxu0 0.0
      %1130 = vmatprep.mubr.f32.mxu0 0.0
      %1131 = vmatmul.mubr.f32.gmra.mxu0 %v1064
      %v1132 = vpop.f32.mrf.mxu0
      %v1133 = vadd.f32 0.0, %v1132
      %v1134 = vpop.f32.mrf.mxu0
      %1135 = vdwg.mxu0
      %1136 = vrot.lane.b32.xlu0 %v876, 64
      %v1137 = vpop.permute.xlu0 %1136
      %v1140 = vsel %vm884, %v1059, 0
      %1142 = vmatprep.subr.mxu0 0.0
      %1143 = vmatpush1.msra.mxu0 0.0
      %1144 = vmatprep.subr.mxu0 0.0
      %1145 = vmatpush1.msra.mxu0 0.0
      %1146 = vmatprep.subr.mxu0 0.0
      %1147 = vmatpush1.msra.mxu0 0.0
      %1148 = vmatprep.subr.mxu0 0.0
      %1149 = vmatpush1.msra.mxu0 0.0
      %1150 = vmatprep.subr.mxu0 0.0
      %1151 = vmatpush1.msra.mxu0 0.0
      %1152 = vmatprep.subr.mxu0 0.0
      %1153 = vmatpush1.msra.mxu0 0.0
      %1154 = vmatprep.subr.mxu0 0.0
      %1155 = vmatpush1.msra.mxu0 0.0
      %1156 = vmatprep.subr.mxu0 0.0
      %1157 = vmatpush1.msra.mxu0 0.0
      %1158 = vmatprep.subr.mxu0 0.0
      %1159 = vmatpush1.msra.mxu0 0.0
      %1160 = vmatprep.subr.mxu0 0.0
      %1161 = vmatpush1.msra.mxu0 0.0
      %1162 = vmatprep.subr.mxu0 0.0
      %1163 = vmatpush1.msra.mxu0 0.0
      %1164 = vmatprep.subr.mxu0 0.0
      %1165 = vmatpush1.msra.mxu0 0.0
      %1166 = vmatprep.subr.mxu0 0.0
      %1167 = vmatpush1.msra.mxu0 0.0
      %1168 = vmatprep.subr.mxu0 0.0
      %1169 = vmatpush1.msra.mxu0 0.0
      %1170 = vmatprep.subr.mxu0 0.0
      %1171 = vmatpush1.msra.mxu0 0.0
      %1172 = vmatprep.subr.mxu0 0.0
      %1173 = vmatpush1.msra.mxu0 %v1137
      %1174 = vmatprep.subr.mxu0 0.0
      %1175 = vmatpush2.msra.mxu0 0.0
      %1176 = vmatprep.subr.mxu0 0.0
      %1177 = vmatpush2.msra.mxu0 0.0
      %1178 = vmatprep.subr.mxu0 0.0
      %1179 = vmatpush2.msra.mxu0 0.0
      %1180 = vmatprep.subr.mxu0 0.0
      %1181 = vmatpush2.msra.mxu0 0.0
      %1182 = vmatprep.subr.mxu0 0.0
      %1183 = vmatpush2.msra.mxu0 0.0
      %1184 = vmatprep.subr.mxu0 0.0
      %1185 = vmatpush2.msra.mxu0 0.0
      %1186 = vmatprep.subr.mxu0 0.0
      %1187 = vmatpush2.msra.mxu0 0.0
      %1188 = vmatprep.subr.mxu0 0.0
      %1189 = vmatpush2.msra.mxu0 0.0
      %1190 = vmatprep.subr.mxu0 0.0
      %1191 = vmatpush2.msra.mxu0 0.0
      %1192 = vmatprep.subr.mxu0 0.0
      %1193 = vmatpush2.msra.mxu0 0.0
      %1194 = vmatprep.subr.mxu0 0.0
      %1195 = vmatpush2.msra.mxu0 0.0
      %1196 = vmatprep.subr.mxu0 0.0
      %1197 = vmatpush2.msra.mxu0 0.0
      %1198 = vmatprep.subr.mxu0 0.0
      %1199 = vmatpush2.msra.mxu0 0.0
      %1200 = vmatprep.subr.mxu0 0.0
      %1201 = vmatpush2.msra.mxu0 0.0
      %1202 = vmatprep.subr.mxu0 0.0
      %1203 = vmatpush2.msra.mxu0 0.0
      %1204 = vmatprep.subr.mxu0 0.0
      %1205 = vmatpush2.msra.mxu0 0.0
      %1206 = vmatprep.mubr.f32.mxu0 0.0
      %1207 = vmatmul.mubr.f32.gmra.mxu0 %v1140
      %v1208 = vpop.f32.mrf.mxu0
      %v1209 = vadd.f32 0.0, %v1208
      %v1210 = vpop.f32.mrf.mxu0
      %1211 = vdwg.mxu0
      %1212 = vrot.lane.b32.xlu0 %v879, 120
      %v1213 = vpop.permute.xlu0 %1212
      %1214 = vrot.lane.b32.xlu0 %v871, 88
      %v1215 = vpop.permute.xlu0 %1214
      %v1216 = vsel %vm884, %v1213, 0
      %v1218 = vsel %vm884, %v1215, 0
      %1220 = vmatprep.subr.mxu0 0.0
      %1221 = vmatpush1.xpose.msra.mxu0 0.0
      %1222 = vmatprep.subr.mxu0 0.0
      %1223 = vmatpush1.xpose.msra.mxu0 0.0
      %1224 = vmatprep.subr.mxu0 0.0
      %1225 = vmatpush1.xpose.msra.mxu0 0.0
      %1226 = vmatprep.subr.mxu0 0.0
      %1227 = vmatpush1.xpose.msra.mxu0 0.0
      %1228 = vmatprep.subr.mxu0 0.0
      %1229 = vmatpush1.xpose.msra.mxu0 0.0
      %1230 = vmatprep.subr.mxu0 0.0
      %1231 = vmatpush1.xpose.msra.mxu0 0.0
      %1232 = vmatprep.subr.mxu0 0.0
      %1233 = vmatpush1.xpose.msra.mxu0 0.0
      %1234 = vmatprep.subr.mxu0 0.0
      %1235 = vmatpush1.xpose.msra.mxu0 0.0
      %1236 = vmatprep.subr.mxu0 0.0
      %1237 = vmatpush1.xpose.msra.mxu0 0.0
      %1238 = vmatprep.subr.mxu0 0.0
      %1239 = vmatpush1.xpose.msra.mxu0 0.0
      %1240 = vmatprep.subr.mxu0 0.0
      %1241 = vmatpush1.xpose.msra.mxu0 0.0
      %1242 = vmatprep.subr.mxu0 0.0
      %1243 = vmatpush1.xpose.msra.mxu0 0.0
      %1244 = vmatprep.subr.mxu0 0.0
      %1245 = vmatpush1.xpose.msra.mxu0 0.0
      %1246 = vmatprep.subr.mxu0 0.0
      %1247 = vmatpush1.xpose.msra.mxu0 0.0
      %1248 = vmatprep.subr.mxu0 0.0
      %1249 = vmatpush1.xpose.msra.mxu0 0.0
      %1250 = vmatprep.subr.mxu0 0.0
      %1251 = vmatpush1.xpose.msra.mxu0 %v1218
      %1252 = vmatprep.subr.mxu0 0.0
      %1253 = vmatpush2.xpose.msra.mxu0 0.0
      %1254 = vmatprep.subr.mxu0 0.0
      %1255 = vmatpush2.xpose.msra.mxu0 0.0
      %1256 = vmatprep.subr.mxu0 0.0
      %1257 = vmatpush2.xpose.msra.mxu0 0.0
      %1258 = vmatprep.subr.mxu0 0.0
      %1259 = vmatpush2.xpose.msra.mxu0 0.0
      %1260 = vmatprep.subr.mxu0 0.0
      %1261 = vmatpush2.xpose.msra.mxu0 0.0
      %1262 = vmatprep.subr.mxu0 0.0
      %1263 = vmatpush2.xpose.msra.mxu0 0.0
      %1264 = vmatprep.subr.mxu0 0.0
      %1265 = vmatpush2.xpose.msra.mxu0 0.0
      %1266 = vmatprep.subr.mxu0 0.0
      %1267 = vmatpush2.xpose.msra.mxu0 0.0
      %1268 = vmatprep.subr.mxu0 0.0
      %1269 = vmatpush2.xpose.msra.mxu0 0.0
      %1270 = vmatprep.subr.mxu0 0.0
      %1271 = vmatpush2.xpose.msra.mxu0 0.0
      %1272 = vmatprep.subr.mxu0 0.0
      %1273 = vmatpush2.xpose.msra.mxu0 0.0
      %1274 = vmatprep.subr.mxu0 0.0
      %1275 = vmatpush2.xpose.msra.mxu0 0.0
      %1276 = vmatprep.subr.mxu0 0.0
      %1277 = vmatpush2.xpose.msra.mxu0 0.0
      %1278 = vmatprep.subr.mxu0 0.0
      %1279 = vmatpush2.xpose.msra.mxu0 0.0
      %1280 = vmatprep.subr.mxu0 0.0
      %1281 = vmatpush2.xpose.msra.mxu0 0.0
      %1282 = vmatprep.subr.mxu0 0.0
      %1283 = vmatpush2.xpose.msra.mxu0 0.0
      %1284 = vmatprep.mubr.f32.mxu0 0.0
      %1285 = vmatmul.mubr.f32.gmra.mxu0 %v1216
      %v1286 = vpop.f32.mrf.mxu0
      %v1287 = vadd.f32 0.0, %v1286
      %v1288 = vpop.f32.mrf.mxu0
      %1289 = vdwg.mxu0
      %1290 = vrot.lane.b32.xlu0 %v880, 120
      %v1291 = vpop.permute.xlu0 %1290
      %1292 = vrot.lane.b32.xlu0 %v876, 88
      %v1293 = vpop.permute.xlu0 %1292
      %v1294 = vsel %vm884, %v1291, 0
      %v1296 = vsel %vm884, %v1293, 0
      %1298 = vmatprep.subr.mxu0 0.0
      %1299 = vmatpush1.xpose.msra.mxu0 0.0
      %1300 = vmatprep.subr.mxu0 0.0
      %1301 = vmatpush1.xpose.msra.mxu0 0.0
      %1302 = vmatprep.subr.mxu0 0.0
      %1303 = vmatpush1.xpose.msra.mxu0 0.0
      %1304 = vmatprep.subr.mxu0 0.0
      %1305 = vmatpush1.xpose.msra.mxu0 0.0
      %1306 = vmatprep.subr.mxu0 0.0
      %1307 = vmatpush1.xpose.msra.mxu0 0.0
      %1308 = vmatprep.subr.mxu0 0.0
      %1309 = vmatpush1.xpose.msra.mxu0 0.0
      %1310 = vmatprep.subr.mxu0 0.0
      %1311 = vmatpush1.xpose.msra.mxu0 0.0
      %1312 = vmatprep.subr.mxu0 0.0
      %1313 = vmatpush1.xpose.msra.mxu0 0.0
      %1314 = vmatprep.subr.mxu0 0.0
      %1315 = vmatpush1.xpose.msra.mxu0 0.0
      %1316 = vmatprep.subr.mxu0 0.0
      %1317 = vmatpush1.xpose.msra.mxu0 0.0
      %1318 = vmatprep.subr.mxu0 0.0
      %1319 = vmatpush1.xpose.msra.mxu0 0.0
      %1320 = vmatprep.subr.mxu0 0.0
      %1321 = vmatpush1.xpose.msra.mxu0 0.0
      %1322 = vmatprep.subr.mxu0 0.0
      %1323 = vmatpush1.xpose.msra.mxu0 0.0
      %1324 = vmatprep.subr.mxu0 0.0
      %1325 = vmatpush1.xpose.msra.mxu0 0.0
      %1326 = vmatprep.subr.mxu0 0.0
      %1327 = vmatpush1.xpose.msra.mxu0 0.0
      %1328 = vmatprep.subr.mxu0 0.0
      %1329 = vmatpush1.xpose.msra.mxu0 %v1296
      %1330 = vmatprep.subr.mxu0 0.0
      %1331 = vmatpush2.xpose.msra.mxu0 0.0
      %1332 = vmatprep.subr.mxu0 0.0
      %1333 = vmatpush2.xpose.msra.mxu0 0.0
      %1334 = vmatprep.subr.mxu0 0.0
      %1335 = vmatpush2.xpose.msra.mxu0 0.0
      %1336 = vmatprep.subr.mxu0 0.0
      %1337 = vmatpush2.xpose.msra.mxu0 0.0
      %1338 = vmatprep.subr.mxu0 0.0
      %1339 = vmatpush2.xpose.msra.mxu0 0.0
      %1340 = vmatprep.subr.mxu0 0.0
      %1341 = vmatpush2.xpose.msra.mxu0 0.0
      %1342 = vmatprep.subr.mxu0 0.0
      %1343 = vmatpush2.xpose.msra.mxu0 0.0
      %1344 = vmatprep.subr.mxu0 0.0
      %1345 = vmatpush2.xpose.msra.mxu0 0.0
      %1346 = vmatprep.subr.mxu0 0.0
      %1347 = vmatpush2.xpose.msra.mxu0 0.0
      %1348 = vmatprep.subr.mxu0 0.0
      %1349 = vmatpush2.xpose.msra.mxu0 0.0
      %1350 = vmatprep.subr.mxu0 0.0
      %1351 = vmatpush2.xpose.msra.mxu0 0.0
      %1352 = vmatprep.subr.mxu0 0.0
      %1353 = vmatpush2.xpose.msra.mxu0 0.0
      %1354 = vmatprep.subr.mxu0 0.0
      %1355 = vmatpush2.xpose.msra.mxu0 0.0
      %1356 = vmatprep.subr.mxu0 0.0
      %1357 = vmatpush2.xpose.msra.mxu0 0.0
      %1358 = vmatprep.subr.mxu0 0.0
      %1359 = vmatpush2.xpose.msra.mxu0 0.0
      %1360 = vmatprep.subr.mxu0 0.0
      %1361 = vmatpush2.xpose.msra.mxu0 0.0
      %1362 = vmatprep.mubr.f32.mxu0 0.0
      %1363 = vmatmul.mubr.f32.gmra.mxu0 %v1294
      %v1364 = vpop.f32.mrf.mxu0
      %v1365 = vadd.f32 0.0, %v1364
      %v1366 = vpop.f32.mrf.mxu0
      %1367 = vdwg.mxu0
      %v1368 = vsel %vm884, %v1287, -inf
      %1369 = vmax.xlane.f32.xlu0 %v1368
      %v1370 = vpop.xlane.xlu0 %1369
      %v1371 = vsel %vm884, %v1365, -inf
      %1372 = vmax.xlane.f32.xlu0 %v1371
      %v1373 = vpop.xlane.xlu0 %1372
      %v1374 = vsub.f32 %v1287, %v1370
      %v1375 = vsub.f32 %v1365, %v1373
      %v1376 = vmul.f32 %v1374, 1.442695
      %v1377 = vpow.pop %v1376
      %v1378 = vmul.f32 %v1375, 1.442695
      %v1379 = vpow.pop %v1378
      %v1380 = vsel %vm884, %v1377, 0.0
      %1381 = vadd.xlane.f32.xlu0 %v1380
      %v1382 = vpop.xlane.xlu0 %1381
      %v1383 = vsel %vm884, %v1379, 0.0
      %1384 = vadd.xlane.f32.xlu0 %v1383
      %v1385 = vpop.xlane.xlu0 %1384
      %v1386 = vrcp.pop %v1382
      %v1387 = vrcp.pop %v1385
      %v1388 = vmul.f32 %v1377, %v1386
      %v1389 = vmul.f32 %v1379, %v1387
      %1390 = vrot.lane.b32.xlu0 %v871, 56
      %v1391 = vpop.permute.xlu0 %1390
      %v1394 = vsel %vm884, %v1388, 0
      %1396 = vmatprep.subr.mxu0 0.0
      %1397 = vmatpush1.msra.mxu0 0.0
      %1398 = vmatprep.subr.mxu0 0.0
      %1399 = vmatpush1.msra.mxu0 0.0
      %1400 = vmatprep.subr.mxu0 0.0
      %1401 = vmatpush1.msra.mxu0 0.0
      %1402 = vmatprep.subr.mxu0 0.0
      %1403 = vmatpush1.msra.mxu0 0.0
      %1404 = vmatprep.subr.mxu0 0.0
      %1405 = vmatpush1.msra.mxu0 0.0
      %1406 = vmatprep.subr.mxu0 0.0
      %1407 = vmatpush1.msra.mxu0 0.0
      %1408 = vmatprep.subr.mxu0 0.0
      %1409 = vmatpush1.msra.mxu0 0.0
      %1410 = vmatprep.subr.mxu0 0.0
      %1411 = vmatpush1.msra.mxu0 0.0
      %1412 = vmatprep.subr.mxu0 0.0
      %1413 = vmatpush1.msra.mxu0 0.0
      %1414 = vmatprep.subr.mxu0 0.0
      %1415 = vmatpush1.msra.mxu0 0.0
      %1416 = vmatprep.subr.mxu0 0.0
      %1417 = vmatpush1.msra.mxu0 0.0
      %1418 = vmatprep.subr.mxu0 0.0
      %1419 = vmatpush1.msra.mxu0 0.0
      %1420 = vmatprep.subr.mxu0 0.0
      %1421 = vmatpush1.msra.mxu0 0.0
      %1422 = vmatprep.subr.mxu0 0.0
      %1423 = vmatpush1.msra.mxu0 0.0
      %1424 = vmatprep.subr.mxu0 0.0
      %1425 = vmatpush1.msra.mxu0 0.0
      %1426 = vmatprep.subr.mxu0 0.0
      %1427 = vmatpush1.msra.mxu0 %v1391
      %1428 = vmatprep.subr.mxu0 0.0
      %1429 = vmatpush2.msra.mxu0 0.0
      %1430 = vmatprep.subr.mxu0 0.0
      %1431 = vmatpush2.msra.mxu0 0.0
      %1432 = vmatprep.subr.mxu0 0.0
      %1433 = vmatpush2.msra.mxu0 0.0
      %1434 = vmatprep.subr.mxu0 0.0
      %1435 = vmatpush2.msra.mxu0 0.0
      %1436 = vmatprep.subr.mxu0 0.0
      %1437 = vmatpush2.msra.mxu0 0.0
      %1438 = vmatprep.subr.mxu0 0.0
      %1439 = vmatpush2.msra.mxu0 0.0
      %1440 = vmatprep.subr.mxu0 0.0
      %1441 = vmatpush2.msra.mxu0 0.0
      %1442 = vmatprep.subr.mxu0 0.0
      %1443 = vmatpush2.msra.mxu0 0.0
      %1444 = vmatprep.subr.mxu0 0.0
      %1445 = vmatpush2.msra.mxu0 0.0
      %1446 = vmatprep.subr.mxu0 0.0
      %1447 = vmatpush2.msra.mxu0 0.0
      %1448 = vmatprep.subr.mxu0 0.0
      %1449 = vmatpush2.msra.mxu0 0.0
      %1450 = vmatprep.subr.mxu0 0.0
      %1451 = vmatpush2.msra.mxu0 0.0
      %1452 = vmatprep.subr.mxu0 0.0
      %1453 = vmatpush2.msra.mxu0 0.0
      %1454 = vmatprep.subr.mxu0 0.0
      %1455 = vmatpush2.msra.mxu0 0.0
      %1456 = vmatprep.subr.mxu0 0.0
      %1457 = vmatpush2.msra.mxu0 0.0
      %1458 = vmatprep.subr.mxu0 0.0
      %1459 = vmatpush2.msra.mxu0 0.0
      %1460 = vmatprep.mubr.f32.mxu0 0.0
      %1461 = vmatmul.mubr.f32.gmra.mxu0 %v1394
      %v1462 = vpop.f32.mrf.mxu0
      %v1463 = vadd.f32 0.0, %v1462
      %v1464 = vpop.f32.mrf.mxu0
      %1465 = vdwg.mxu0
      %1466 = vrot.lane.b32.xlu0 %v876, 56
      %v1467 = vpop.permute.xlu0 %1466
      %v1470 = vsel %vm884, %v1389, 0
      %1472 = vmatprep.subr.mxu0 0.0
      %1473 = vmatpush1.msra.mxu0 0.0
      %1474 = vmatprep.subr.mxu0 0.0
      %1475 = vmatpush1.msra.mxu0 0.0
      %1476 = vmatprep.subr.mxu0 0.0
      %1477 = vmatpush1.msra.mxu0 0.0
      %1478 = vmatprep.subr.mxu0 0.0
      %1479 = vmatpush1.msra.mxu0 0.0
      %1480 = vmatprep.subr.mxu0 0.0
      %1481 = vmatpush1.msra.mxu0 0.0
      %1482 = vmatprep.subr.mxu0 0.0
      %1483 = vmatpush1.msra.mxu0 0.0
      %1484 = vmatprep.subr.mxu0 0.0
      %1485 = vmatpush1.msra.mxu0 0.0
      %1486 = vmatprep.subr.mxu0 0.0
      %1487 = vmatpush1.msra.mxu0 0.0
      %1488 = vmatprep.subr.mxu0 0.0
      %1489 = vmatpush1.msra.mxu0 0.0
      %1490 = vmatprep.subr.mxu0 0.0
      %1491 = vmatpush1.msra.mxu0 0.0
      %1492 = vmatprep.subr.mxu0 0.0
      %1493 = vmatpush1.msra.mxu0 0.0
      %1494 = vmatprep.subr.mxu0 0.0
      %1495 = vmatpush1.msra.mxu0 0.0
      %1496 = vmatprep.subr.mxu0 0.0
      %1497 = vmatpush1.msra.mxu0 0.0
      %1498 = vmatprep.subr.mxu0 0.0
      %1499 = vmatpush1.msra.mxu0 0.0
      %1500 = vmatprep.subr.mxu0 0.0
      %1501 = vmatpush1.msra.mxu0 0.0
      %1502 = vmatprep.subr.mxu0 0.0
      %1503 = vmatpush1.msra.mxu0 %v1467
      %1504 = vmatprep.subr.mxu0 0.0
      %1505 = vmatpush2.msra.mxu0 0.0
      %1506 = vmatprep.subr.mxu0 0.0
      %1507 = vmatpush2.msra.mxu0 0.0
      %1508 = vmatprep.subr.mxu0 0.0
      %1509 = vmatpush2.msra.mxu0 0.0
      %1510 = vmatprep.subr.mxu0 0.0
      %1511 = vmatpush2.msra.mxu0 0.0
      %1512 = vmatprep.subr.mxu0 0.0
      %1513 = vmatpush2.msra.mxu0 0.0
      %1514 = vmatprep.subr.mxu0 0.0
      %1515 = vmatpush2.msra.mxu0 0.0
      %1516 = vmatprep.subr.mxu0 0.0
      %1517 = vmatpush2.msra.mxu0 0.0
      %1518 = vmatprep.subr.mxu0 0.0
      %1519 = vmatpush2.msra.mxu0 0.0
      %1520 = vmatprep.subr.mxu0 0.0
      %1521 = vmatpush2.msra.mxu0 0.0
      %1522 = vmatprep.subr.mxu0 0.0
      %1523 = vmatpush2.msra.mxu0 0.0
      %1524 = vmatprep.subr.mxu0 0.0
      %1525 = vmatpush2.msra.mxu0 0.0
      %1526 = vmatprep.subr.mxu0 0.0
      %1527 = vmatpush2.msra.mxu0 0.0
      %1528 = vmatprep.subr.mxu0 0.0
      %1529 = vmatpush2.msra.mxu0 0.0
      %1530 = vmatprep.subr.mxu0 0.0
      %1531 = vmatpush2.msra.mxu0 0.0
      %1532 = vmatprep.subr.mxu0 0.0
      %1533 = vmatpush2.msra.mxu0 0.0
      %1534 = vmatprep.subr.mxu0 0.0
      %1535 = vmatpush2.msra.mxu0 0.0
      %1536 = vmatprep.mubr.f32.mxu0 0.0
      %1537 = vmatmul.mubr.f32.gmra.mxu0 %v1470
      %v1538 = vpop.f32.mrf.mxu0
      %v1539 = vadd.f32 0.0, %v1538
      %v1540 = vpop.f32.mrf.mxu0
      %1541 = vdwg.mxu0
      %1542 = vrot.lane.b32.xlu0 %v879, 112
      %v1543 = vpop.permute.xlu0 %1542
      %1544 = vrot.lane.b32.xlu0 %v871, 80
      %v1545 = vpop.permute.xlu0 %1544
      %v1546 = vsel %vm884, %v1543, 0
      %v1548 = vsel %vm884, %v1545, 0
      %1550 = vmatprep.subr.mxu0 0.0
      %1551 = vmatpush1.xpose.msra.mxu0 0.0
      %1552 = vmatprep.subr.mxu0 0.0
      %1553 = vmatpush1.xpose.msra.mxu0 0.0
      %1554 = vmatprep.subr.mxu0 0.0
      %1555 = vmatpush1.xpose.msra.mxu0 0.0
      %1556 = vmatprep.subr.mxu0 0.0
      %1557 = vmatpush1.xpose.msra.mxu0 0.0
      %1558 = vmatprep.subr.mxu0 0.0
      %1559 = vmatpush1.xpose.msra.mxu0 0.0
      %1560 = vmatprep.subr.mxu0 0.0
      %1561 = vmatpush1.xpose.msra.mxu0 0.0
      %1562 = vmatprep.subr.mxu0 0.0
      %1563 = vmatpush1.xpose.msra.mxu0 0.0
      %1564 = vmatprep.subr.mxu0 0.0
      %1565 = vmatpush1.xpose.msra.mxu0 0.0
      %1566 = vmatprep.subr.mxu0 0.0
      %1567 = vmatpush1.xpose.msra.mxu0 0.0
      %1568 = vmatprep.subr.mxu0 0.0
      %1569 = vmatpush1.xpose.msra.mxu0 0.0
      %1570 = vmatprep.subr.mxu0 0.0
      %1571 = vmatpush1.xpose.msra.mxu0 0.0
      %1572 = vmatprep.subr.mxu0 0.0
      %1573 = vmatpush1.xpose.msra.mxu0 0.0
      %1574 = vmatprep.subr.mxu0 0.0
      %1575 = vmatpush1.xpose.msra.mxu0 0.0
      %1576 = vmatprep.subr.mxu0 0.0
      %1577 = vmatpush1.xpose.msra.mxu0 0.0
      %1578 = vmatprep.subr.mxu0 0.0
      %1579 = vmatpush1.xpose.msra.mxu0 0.0
      %1580 = vmatprep.subr.mxu0 0.0
      %1581 = vmatpush1.xpose.msra.mxu0 %v1548
      %1582 = vmatprep.subr.mxu0 0.0
      %1583 = vmatpush2.xpose.msra.mxu0 0.0
      %1584 = vmatprep.subr.mxu0 0.0
      %1585 = vmatpush2.xpose.msra.mxu0 0.0
      %1586 = vmatprep.subr.mxu0 0.0
      %1587 = vmatpush2.xpose.msra.mxu0 0.0
      %1588 = vmatprep.subr.mxu0 0.0
      %1589 = vmatpush2.xpose.msra.mxu0 0.0
      %1590 = vmatprep.subr.mxu0 0.0
      %1591 = vmatpush2.xpose.msra.mxu0 0.0
      %1592 = vmatprep.subr.mxu0 0.0
      %1593 = vmatpush2.xpose.msra.mxu0 0.0
      %1594 = vmatprep.subr.mxu0 0.0
      %1595 = vmatpush2.xpose.msra.mxu0 0.0
      %1596 = vmatprep.subr.mxu0 0.0
      %1597 = vmatpush2.xpose.msra.mxu0 0.0
      %1598 = vmatprep.subr.mxu0 0.0
      %1599 = vmatpush2.xpose.msra.mxu0 0.0
      %1600 = vmatprep.subr.mxu0 0.0
      %1601 = vmatpush2.xpose.msra.mxu0 0.0
      %1602 = vmatprep.subr.mxu0 0.0
      %1603 = vmatpush2.xpose.msra.mxu0 0.0
      %1604 = vmatprep.subr.mxu0 0.0
      %1605 = vmatpush2.xpose.msra.mxu0 0.0
      %1606 = vmatprep.subr.mxu0 0.0
      %1607 = vmatpush2.xpose.msra.mxu0 0.0
      %1608 = vmatprep.subr.mxu0 0.0
      %1609 = vmatpush2.xpose.msra.mxu0 0.0
      %1610 = vmatprep.subr.mxu0 0.0
      %1611 = vmatpush2.xpose.msra.mxu0 0.0
      %1612 = vmatprep.subr.mxu0 0.0
      %1613 = vmatpush2.xpose.msra.mxu0 0.0
      %1614 = vmatprep.mubr.f32.mxu0 0.0
      %1615 = vmatmul.mubr.f32.gmra.mxu0 %v1546
      %v1616 = vpop.f32.mrf.mxu0
      %v1617 = vadd.f32 0.0, %v1616
      %v1618 = vpop.f32.mrf.mxu0
      %1619 = vdwg.mxu0
      %1620 = vrot.lane.b32.xlu0 %v880, 112
      %v1621 = vpop.permute.xlu0 %1620
      %1622 = vrot.lane.b32.xlu0 %v876, 80
      %v1623 = vpop.permute.xlu0 %1622
      %v1624 = vsel %vm884, %v1621, 0
      %v1626 = vsel %vm884, %v1623, 0
      %1628 = vmatprep.subr.mxu0 0.0
      %1629 = vmatpush1.xpose.msra.mxu0 0.0
      %1630 = vmatprep.subr.mxu0 0.0
      %1631 = vmatpush1.xpose.msra.mxu0 0.0
      %1632 = vmatprep.subr.mxu0 0.0
      %1633 = vmatpush1.xpose.msra.mxu0 0.0
      %1634 = vmatprep.subr.mxu0 0.0
      %1635 = vmatpush1.xpose.msra.mxu0 0.0
      %1636 = vmatprep.subr.mxu0 0.0
      %1637 = vmatpush1.xpose.msra.mxu0 0.0
      %1638 = vmatprep.subr.mxu0 0.0
      %1639 = vmatpush1.xpose.msra.mxu0 0.0
      %1640 = vmatprep.subr.mxu0 0.0
      %1641 = vmatpush1.xpose.msra.mxu0 0.0
      %1642 = vmatprep.subr.mxu0 0.0
      %1643 = vmatpush1.xpose.msra.mxu0 0.0
      %1644 = vmatprep.subr.mxu0 0.0
      %1645 = vmatpush1.xpose.msra.mxu0 0.0
      %1646 = vmatprep.subr.mxu0 0.0
      %1647 = vmatpush1.xpose.msra.mxu0 0.0
      %1648 = vmatprep.subr.mxu0 0.0
      %1649 = vmatpush1.xpose.msra.mxu0 0.0
      %1650 = vmatprep.subr.mxu0 0.0
      %1651 = vmatpush1.xpose.msra.mxu0 0.0
      %1652 = vmatprep.subr.mxu0 0.0
      %1653 = vmatpush1.xpose.msra.mxu0 0.0
      %1654 = vmatprep.subr.mxu0 0.0
      %1655 = vmatpush1.xpose.msra.mxu0 0.0
      %1656 = vmatprep.subr.mxu0 0.0
      %1657 = vmatpush1.xpose.msra.mxu0 0.0
      %1658 = vmatprep.subr.mxu0 0.0
      %1659 = vmatpush1.xpose.msra.mxu0 %v1626
      %1660 = vmatprep.subr.mxu0 0.0
      %1661 = vmatpush2.xpose.msra.mxu0 0.0
      %1662 = vmatprep.subr.mxu0 0.0
      %1663 = vmatpush2.xpose.msra.mxu0 0.0
      %1664 = vmatprep.subr.mxu0 0.0
      %1665 = vmatpush2.xpose.msra.mxu0 0.0
      %1666 = vmatprep.subr.mxu0 0.0
      %1667 = vmatpush2.xpose.msra.mxu0 0.0
      %1668 = vmatprep.subr.mxu0 0.0
      %1669 = vmatpush2.xpose.msra.mxu0 0.0
      %1670 = vmatprep.subr.mxu0 0.0
      %1671 = vmatpush2.xpose.msra.mxu0 0.0
      %1672 = vmatprep.subr.mxu0 0.0
      %1673 = vmatpush2.xpose.msra.mxu0 0.0
      %1674 = vmatprep.subr.mxu0 0.0
      %1675 = vmatpush2.xpose.msra.mxu0 0.0
      %1676 = vmatprep.subr.mxu0 0.0
      %1677 = vmatpush2.xpose.msra.mxu0 0.0
      %1678 = vmatprep.subr.mxu0 0.0
      %1679 = vmatpush2.xpose.msra.mxu0 0.0
      %1680 = vmatprep.subr.mxu0 0.0
      %1681 = vmatpush2.xpose.msra.mxu0 0.0
      %1682 = vmatprep.subr.mxu0 0.0
      %1683 = vmatpush2.xpose.msra.mxu0 0.0
      %1684 = vmatprep.subr.mxu0 0.0
      %1685 = vmatpush2.xpose.msra.mxu0 0.0
      %1686 = vmatprep.subr.mxu0 0.0
      %1687 = vmatpush2.xpose.msra.mxu0 0.0
      %1688 = vmatprep.subr.mxu0 0.0
      %1689 = vmatpush2.xpose.msra.mxu0 0.0
      %1690 = vmatprep.subr.mxu0 0.0
      %1691 = vmatpush2.xpose.msra.mxu0 0.0
      %1692 = vmatprep.mubr.f32.mxu0 0.0
      %1693 = vmatmul.mubr.f32.gmra.mxu0 %v1624
      %v1694 = vpop.f32.mrf.mxu0
      %v1695 = vadd.f32 0.0, %v1694
      %v1696 = vpop.f32.mrf.mxu0
      %1697 = vdwg.mxu0
      %v1698 = vsel %vm884, %v1617, -inf
      %1699 = vmax.xlane.f32.xlu0 %v1698
      %v1700 = vpop.xlane.xlu0 %1699
      %v1701 = vsel %vm884, %v1695, -inf
      %1702 = vmax.xlane.f32.xlu0 %v1701
      %v1703 = vpop.xlane.xlu0 %1702
      %v1704 = vsub.f32 %v1617, %v1700
      %v1705 = vsub.f32 %v1695, %v1703
      %v1706 = vmul.f32 %v1704, 1.442695
      %v1707 = vpow.pop %v1706
      %v1708 = vmul.f32 %v1705, 1.442695
      %v1709 = vpow.pop %v1708
      %v1710 = vsel %vm884, %v1707, 0.0
      %1711 = vadd.xlane.f32.xlu0 %v1710
      %v1712 = vpop.xlane.xlu0 %1711
      %v1713 = vsel %vm884, %v1709, 0.0
      %1714 = vadd.xlane.f32.xlu0 %v1713
      %v1715 = vpop.xlane.xlu0 %1714
      %v1716 = vrcp.pop %v1712
      %v1717 = vrcp.pop %v1715
      %v1718 = vmul.f32 %v1707, %v1716
      %v1719 = vmul.f32 %v1709, %v1717
      %1720 = vrot.lane.b32.xlu0 %v871, 48
      %v1721 = vpop.permute.xlu0 %1720
      %v1724 = vsel %vm884, %v1718, 0
      %1726 = vmatprep.subr.mxu0 0.0
      %1727 = vmatpush1.msra.mxu0 0.0
      %1728 = vmatprep.subr.mxu0 0.0
      %1729 = vmatpush1.msra.mxu0 0.0
      %1730 = vmatprep.subr.mxu0 0.0
      %1731 = vmatpush1.msra.mxu0 0.0
      %1732 = vmatprep.subr.mxu0 0.0
      %1733 = vmatpush1.msra.mxu0 0.0
      %1734 = vmatprep.subr.mxu0 0.0
      %1735 = vmatpush1.msra.mxu0 0.0
      %1736 = vmatprep.subr.mxu0 0.0
      %1737 = vmatpush1.msra.mxu0 0.0
      %1738 = vmatprep.subr.mxu0 0.0
      %1739 = vmatpush1.msra.mxu0 0.0
      %1740 = vmatprep.subr.mxu0 0.0
      %1741 = vmatpush1.msra.mxu0 0.0
      %1742 = vmatprep.subr.mxu0 0.0
      %1743 = vmatpush1.msra.mxu0 0.0
      %1744 = vmatprep.subr.mxu0 0.0
      %1745 = vmatpush1.msra.mxu0 0.0
      %1746 = vmatprep.subr.mxu0 0.0
      %1747 = vmatpush1.msra.mxu0 0.0
      %1748 = vmatprep.subr.mxu0 0.0
      %1749 = vmatpush1.msra.mxu0 0.0
      %1750 = vmatprep.subr.mxu0 0.0
      %1751 = vmatpush1.msra.mxu0 0.0
      %1752 = vmatprep.subr.mxu0 0.0
      %1753 = vmatpush1.msra.mxu0 0.0
      %1754 = vmatprep.subr.mxu0 0.0
      %1755 = vmatpush1.msra.mxu0 0.0
      %1756 = vmatprep.subr.mxu0 0.0
      %1757 = vmatpush1.msra.mxu0 %v1721
      %1758 = vmatprep.subr.mxu0 0.0
      %1759 = vmatpush2.msra.mxu0 0.0
      %1760 = vmatprep.subr.mxu0 0.0
      %1761 = vmatpush2.msra.mxu0 0.0
      %1762 = vmatprep.subr.mxu0 0.0
      %1763 = vmatpush2.msra.mxu0 0.0
      %1764 = vmatprep.subr.mxu0 0.0
      %1765 = vmatpush2.msra.mxu0 0.0
      %1766 = vmatprep.subr.mxu0 0.0
      %1767 = vmatpush2.msra.mxu0 0.0
      %1768 = vmatprep.subr.mxu0 0.0
      %1769 = vmatpush2.msra.mxu0 0.0
      %1770 = vmatprep.subr.mxu0 0.0
      %1771 = vmatpush2.msra.mxu0 0.0
      %1772 = vmatprep.subr.mxu0 0.0
      %1773 = vmatpush2.msra.mxu0 0.0
      %1774 = vmatprep.subr.mxu0 0.0
      %1775 = vmatpush2.msra.mxu0 0.0
      %1776 = vmatprep.subr.mxu0 0.0
      %1777 = vmatpush2.msra.mxu0 0.0
      %1778 = vmatprep.subr.mxu0 0.0
      %1779 = vmatpush2.msra.mxu0 0.0
      %1780 = vmatprep.subr.mxu0 0.0
      %1781 = vmatpush2.msra.mxu0 0.0
      %1782 = vmatprep.subr.mxu0 0.0
      %1783 = vmatpush2.msra.mxu0 0.0
      %1784 = vmatprep.subr.mxu0 0.0
      %1785 = vmatpush2.msra.mxu0 0.0
      %1786 = vmatprep.subr.mxu0 0.0
      %1787 = vmatpush2.msra.mxu0 0.0
      %1788 = vmatprep.subr.mxu0 0.0
      %1789 = vmatpush2.msra.mxu0 0.0
      %1790 = vmatprep.mubr.f32.mxu0 0.0
      %1791 = vmatmul.mubr.f32.gmra.mxu0 %v1724
      %v1792 = vpop.f32.mrf.mxu0
      %v1793 = vadd.f32 0.0, %v1792
      %v1794 = vpop.f32.mrf.mxu0
      %1795 = vdwg.mxu0
      %1796 = vrot.lane.b32.xlu0 %v876, 48
      %v1797 = vpop.permute.xlu0 %1796
      %v1800 = vsel %vm884, %v1719, 0
      %1802 = vmatprep.subr.mxu0 0.0
      %1803 = vmatpush1.msra.mxu0 0.0
      %1804 = vmatprep.subr.mxu0 0.0
      %1805 = vmatpush1.msra.mxu0 0.0
      %1806 = vmatprep.subr.mxu0 0.0
      %1807 = vmatpush1.msra.mxu0 0.0
      %1808 = vmatprep.subr.mxu0 0.0
      %1809 = vmatpush1.msra.mxu0 0.0
      %1810 = vmatprep.subr.mxu0 0.0
      %1811 = vmatpush1.msra.mxu0 0.0
      %1812 = vmatprep.subr.mxu0 0.0
      %1813 = vmatpush1.msra.mxu0 0.0
      %1814 = vmatprep.subr.mxu0 0.0
      %1815 = vmatpush1.msra.mxu0 0.0
      %1816 = vmatprep.subr.mxu0 0.0
      %1817 = vmatpush1.msra.mxu0 0.0
      %1818 = vmatprep.subr.mxu0 0.0
      %1819 = vmatpush1.msra.mxu0 0.0
      %1820 = vmatprep.subr.mxu0 0.0
      %1821 = vmatpush1.msra.mxu0 0.0
      %1822 = vmatprep.subr.mxu0 0.0
      %1823 = vmatpush1.msra.mxu0 0.0
      %1824 = vmatprep.subr.mxu0 0.0
      %1825 = vmatpush1.msra.mxu0 0.0
      %1826 = vmatprep.subr.mxu0 0.0
      %1827 = vmatpush1.msra.mxu0 0.0
      %1828 = vmatprep.subr.mxu0 0.0
      %1829 = vmatpush1.msra.mxu0 0.0
      %1830 = vmatprep.subr.mxu0 0.0
      %1831 = vmatpush1.msra.mxu0 0.0
      %1832 = vmatprep.subr.mxu0 0.0
      %1833 = vmatpush1.msra.mxu0 %v1797
      %1834 = vmatprep.subr.mxu0 0.0
      %1835 = vmatpush2.msra.mxu0 0.0
      %1836 = vmatprep.subr.mxu0 0.0
      %1837 = vmatpush2.msra.mxu0 0.0
      %1838 = vmatprep.subr.mxu0 0.0
      %1839 = vmatpush2.msra.mxu0 0.0
      %1840 = vmatprep.subr.mxu0 0.0
      %1841 = vmatpush2.msra.mxu0 0.0
      %1842 = vmatprep.subr.mxu0 0.0
      %1843 = vmatpush2.msra.mxu0 0.0
      %1844 = vmatprep.subr.mxu0 0.0
      %1845 = vmatpush2.msra.mxu0 0.0
      %1846 = vmatprep.subr.mxu0 0.0
      %1847 = vmatpush2.msra.mxu0 0.0
      %1848 = vmatprep.subr.mxu0 0.0
      %1849 = vmatpush2.msra.mxu0 0.0
      %1850 = vmatprep.subr.mxu0 0.0
      %1851 = vmatpush2.msra.mxu0 0.0
      %1852 = vmatprep.subr.mxu0 0.0
      %1853 = vmatpush2.msra.mxu0 0.0
      %1854 = vmatprep.subr.mxu0 0.0
      %1855 = vmatpush2.msra.mxu0 0.0
      %1856 = vmatprep.subr.mxu0 0.0
      %1857 = vmatpush2.msra.mxu0 0.0
      %1858 = vmatprep.subr.mxu0 0.0
      %1859 = vmatpush2.msra.mxu0 0.0
      %1860 = vmatprep.subr.mxu0 0.0
      %1861 = vmatpush2.msra.mxu0 0.0
      %1862 = vmatprep.subr.mxu0 0.0
      %1863 = vmatpush2.msra.mxu0 0.0
      %1864 = vmatprep.subr.mxu0 0.0
      %1865 = vmatpush2.msra.mxu0 0.0
      %1866 = vmatprep.mubr.f32.mxu0 0.0
      %1867 = vmatmul.mubr.f32.gmra.mxu0 %v1800
      %v1868 = vpop.f32.mrf.mxu0
      %v1869 = vadd.f32 0.0, %v1868
      %v1870 = vpop.f32.mrf.mxu0
      %1871 = vdwg.mxu0
      %1872 = vrot.lane.b32.xlu0 %v879, 104
      %v1873 = vpop.permute.xlu0 %1872
      %1874 = vrot.lane.b32.xlu0 %v871, 72
      %v1875 = vpop.permute.xlu0 %1874
      %v1876 = vsel %vm884, %v1873, 0
      %v1878 = vsel %vm884, %v1875, 0
      %1880 = vmatprep.subr.mxu0 0.0
      %1881 = vmatpush1.xpose.msra.mxu0 0.0
      %1882 = vmatprep.subr.mxu0 0.0
      %1883 = vmatpush1.xpose.msra.mxu0 0.0
      %1884 = vmatprep.subr.mxu0 0.0
      %1885 = vmatpush1.xpose.msra.mxu0 0.0
      %1886 = vmatprep.subr.mxu0 0.0
      %1887 = vmatpush1.xpose.msra.mxu0 0.0
      %1888 = vmatprep.subr.mxu0 0.0
      %1889 = vmatpush1.xpose.msra.mxu0 0.0
      %1890 = vmatprep.subr.mxu0 0.0
      %1891 = vmatpush1.xpose.msra.mxu0 0.0
      %1892 = vmatprep.subr.mxu0 0.0
      %1893 = vmatpush1.xpose.msra.mxu0 0.0
      %1894 = vmatprep.subr.mxu0 0.0
      %1895 = vmatpush1.xpose.msra.mxu0 0.0
      %1896 = vmatprep.subr.mxu0 0.0
      %1897 = vmatpush1.xpose.msra.mxu0 0.0
      %1898 = vmatprep.subr.mxu0 0.0
      %1899 = vmatpush1.xpose.msra.mxu0 0.0
      %1900 = vmatprep.subr.mxu0 0.0
      %1901 = vmatpush1.xpose.msra.mxu0 0.0
      %1902 = vmatprep.subr.mxu0 0.0
      %1903 = vmatpush1.xpose.msra.mxu0 0.0
      %1904 = vmatprep.subr.mxu0 0.0
      %1905 = vmatpush1.xpose.msra.mxu0 0.0
      %1906 = vmatprep.subr.mxu0 0.0
      %1907 = vmatpush1.xpose.msra.mxu0 0.0
      %1908 = vmatprep.subr.mxu0 0.0
      %1909 = vmatpush1.xpose.msra.mxu0 0.0
      %1910 = vmatprep.subr.mxu0 0.0
      %1911 = vmatpush1.xpose.msra.mxu0 %v1878
      %1912 = vmatprep.subr.mxu0 0.0
      %1913 = vmatpush2.xpose.msra.mxu0 0.0
      %1914 = vmatprep.subr.mxu0 0.0
      %1915 = vmatpush2.xpose.msra.mxu0 0.0
      %1916 = vmatprep.subr.mxu0 0.0
      %1917 = vmatpush2.xpose.msra.mxu0 0.0
      %1918 = vmatprep.subr.mxu0 0.0
      %1919 = vmatpush2.xpose.msra.mxu0 0.0
      %1920 = vmatprep.subr.mxu0 0.0
      %1921 = vmatpush2.xpose.msra.mxu0 0.0
      %1922 = vmatprep.subr.mxu0 0.0
      %1923 = vmatpush2.xpose.msra.mxu0 0.0
      %1924 = vmatprep.subr.mxu0 0.0
      %1925 = vmatpush2.xpose.msra.mxu0 0.0
      %1926 = vmatprep.subr.mxu0 0.0
      %1927 = vmatpush2.xpose.msra.mxu0 0.0
      %1928 = vmatprep.subr.mxu0 0.0
      %1929 = vmatpush2.xpose.msra.mxu0 0.0
      %1930 = vmatprep.subr.mxu0 0.0
      %1931 = vmatpush2.xpose.msra.mxu0 0.0
      %1932 = vmatprep.subr.mxu0 0.0
      %1933 = vmatpush2.xpose.msra.mxu0 0.0
      %1934 = vmatprep.subr.mxu0 0.0
      %1935 = vmatpush2.xpose.msra.mxu0 0.0
      %1936 = vmatprep.subr.mxu0 0.0
      %1937 = vmatpush2.xpose.msra.mxu0 0.0
      %1938 = vmatprep.subr.mxu0 0.0
      %1939 = vmatpush2.xpose.msra.mxu0 0.0
      %1940 = vmatprep.subr.mxu0 0.0
      %1941 = vmatpush2.xpose.msra.mxu0 0.0
      %1942 = vmatprep.subr.mxu0 0.0
      %1943 = vmatpush2.xpose.msra.mxu0 0.0
      %1944 = vmatprep.mubr.f32.mxu0 0.0
      %1945 = vmatmul.mubr.f32.gmra.mxu0 %v1876
      %v1946 = vpop.f32.mrf.mxu0
      %v1947 = vadd.f32 0.0, %v1946
      %v1948 = vpop.f32.mrf.mxu0
      %1949 = vdwg.mxu0
      %1950 = vrot.lane.b32.xlu0 %v880, 104
      %v1951 = vpop.permute.xlu0 %1950
      %1952 = vrot.lane.b32.xlu0 %v876, 72
      %v1953 = vpop.permute.xlu0 %1952
      %v1954 = vsel %vm884, %v1951, 0
      %v1956 = vsel %vm884, %v1953, 0
      %1958 = vmatprep.subr.mxu0 0.0
      %1959 = vmatpush1.xpose.msra.mxu0 0.0
      %1960 = vmatprep.subr.mxu0 0.0
      %1961 = vmatpush1.xpose.msra.mxu0 0.0
      %1962 = vmatprep.subr.mxu0 0.0
      %1963 = vmatpush1.xpose.msra.mxu0 0.0
      %1964 = vmatprep.subr.mxu0 0.0
      %1965 = vmatpush1.xpose.msra.mxu0 0.0
      %1966 = vmatprep.subr.mxu0 0.0
      %1967 = vmatpush1.xpose.msra.mxu0 0.0
      %1968 = vmatprep.subr.mxu0 0.0
      %1969 = vmatpush1.xpose.msra.mxu0 0.0
      %1970 = vmatprep.subr.mxu0 0.0
      %1971 = vmatpush1.xpose.msra.mxu0 0.0
      %1972 = vmatprep.subr.mxu0 0.0
      %1973 = vmatpush1.xpose.msra.mxu0 0.0
      %1974 = vmatprep.subr.mxu0 0.0
      %1975 = vmatpush1.xpose.msra.mxu0 0.0
      %1976 = vmatprep.subr.mxu0 0.0
      %1977 = vmatpush1.xpose.msra.mxu0 0.0
      %1978 = vmatprep.subr.mxu0 0.0
      %1979 = vmatpush1.xpose.msra.mxu0 0.0
      %1980 = vmatprep.subr.mxu0 0.0
      %1981 = vmatpush1.xpose.msra.mxu0 0.0
      %1982 = vmatprep.subr.mxu0 0.0
      %1983 = vmatpush1.xpose.msra.mxu0 0.0
      %1984 = vmatprep.subr.mxu0 0.0
      %1985 = vmatpush1.xpose.msra.mxu0 0.0
      %1986 = vmatprep.subr.mxu0 0.0
      %1987 = vmatpush1.xpose.msra.mxu0 0.0
      %1988 = vmatprep.subr.mxu0 0.0
      %1989 = vmatpush1.xpose.msra.mxu0 %v1956
      %1990 = vmatprep.subr.mxu0 0.0
      %1991 = vmatpush2.xpose.msra.mxu0 0.0
      %1992 = vmatprep.subr.mxu0 0.0
      %1993 = vmatpush2.xpose.msra.mxu0 0.0
      %1994 = vmatprep.subr.mxu0 0.0
      %1995 = vmatpush2.xpose.msra.mxu0 0.0
      %1996 = vmatprep.subr.mxu0 0.0
      %1997 = vmatpush2.xpose.msra.mxu0 0.0
      %1998 = vmatprep.subr.mxu0 0.0
      %1999 = vmatpush2.xpose.msra.mxu0 0.0
      %2000 = vmatprep.subr.mxu0 0.0
      %2001 = vmatpush2.xpose.msra.mxu0 0.0
      %2002 = vmatprep.subr.mxu0 0.0
      %2003 = vmatpush2.xpose.msra.mxu0 0.0
      %2004 = vmatprep.subr.mxu0 0.0
      %2005 = vmatpush2.xpose.msra.mxu0 0.0
      %2006 = vmatprep.subr.mxu0 0.0
      %2007 = vmatpush2.xpose.msra.mxu0 0.0
      %2008 = vmatprep.subr.mxu0 0.0
      %2009 = vmatpush2.xpose.msra.mxu0 0.0
      %2010 = vmatprep.subr.mxu0 0.0
      %2011 = vmatpush2.xpose.msra.mxu0 0.0
      %2012 = vmatprep.subr.mxu0 0.0
      %2013 = vmatpush2.xpose.msra.mxu0 0.0
      %2014 = vmatprep.subr.mxu0 0.0
      %2015 = vmatpush2.xpose.msra.mxu0 0.0
      %2016 = vmatprep.subr.mxu0 0.0
      %2017 = vmatpush2.xpose.msra.mxu0 0.0
      %2018 = vmatprep.subr.mxu0 0.0
      %2019 = vmatpush2.xpose.msra.mxu0 0.0
      %2020 = vmatprep.subr.mxu0 0.0
      %2021 = vmatpush2.xpose.msra.mxu0 0.0
      %2022 = vmatprep.mubr.f32.mxu0 0.0
      %2023 = vmatmul.mubr.f32.gmra.mxu0 %v1954
      %v2024 = vpop.f32.mrf.mxu0
      %v2025 = vadd.f32 0.0, %v2024
      %v2026 = vpop.f32.mrf.mxu0
      %2027 = vdwg.mxu0
      %v2028 = vsel %vm884, %v1947, -inf
      %2029 = vmax.xlane.f32.xlu0 %v2028
      %v2030 = vpop.xlane.xlu0 %2029
      %v2031 = vsel %vm884, %v2025, -inf
      %2032 = vmax.xlane.f32.xlu0 %v2031
      %v2033 = vpop.xlane.xlu0 %2032
      %v2034 = vsub.f32 %v1947, %v2030
      %v2035 = vsub.f32 %v2025, %v2033
      %v2036 = vmul.f32 %v2034, 1.442695
      %v2037 = vpow.pop %v2036
      %v2038 = vmul.f32 %v2035, 1.442695
      %v2039 = vpow.pop %v2038
      %v2040 = vsel %vm884, %v2037, 0.0
      %2041 = vadd.xlane.f32.xlu0 %v2040
      %v2042 = vpop.xlane.xlu0 %2041
      %v2043 = vsel %vm884, %v2039, 0.0
      %2044 = vadd.xlane.f32.xlu0 %v2043
      %v2045 = vpop.xlane.xlu0 %2044
      %v2046 = vrcp.pop %v2042
      %v2047 = vrcp.pop %v2045
      %v2048 = vmul.f32 %v2037, %v2046
      %v2049 = vmul.f32 %v2039, %v2047
      %2050 = vrot.lane.b32.xlu0 %v871, 40
      %v2051 = vpop.permute.xlu0 %2050
      %v2054 = vsel %vm884, %v2048, 0
      %2056 = vmatprep.subr.mxu0 0.0
      %2057 = vmatpush1.msra.mxu0 0.0
      %2058 = vmatprep.subr.mxu0 0.0
      %2059 = vmatpush1.msra.mxu0 0.0
      %2060 = vmatprep.subr.mxu0 0.0
      %2061 = vmatpush1.msra.mxu0 0.0
      %2062 = vmatprep.subr.mxu0 0.0
      %2063 = vmatpush1.msra.mxu0 0.0
      %2064 = vmatprep.subr.mxu0 0.0
      %2065 = vmatpush1.msra.mxu0 0.0
      %2066 = vmatprep.subr.mxu0 0.0
      %2067 = vmatpush1.msra.mxu0 0.0
      %2068 = vmatprep.subr.mxu0 0.0
      %2069 = vmatpush1.msra.mxu0 0.0
      %2070 = vmatprep.subr.mxu0 0.0
      %2071 = vmatpush1.msra.mxu0 0.0
      %2072 = vmatprep.subr.mxu0 0.0
      %2073 = vmatpush1.msra.mxu0 0.0
      %2074 = vmatprep.subr.mxu0 0.0
      %2075 = vmatpush1.msra.mxu0 0.0
      %2076 = vmatprep.subr.mxu0 0.0
      %2077 = vmatpush1.msra.mxu0 0.0
      %2078 = vmatprep.subr.mxu0 0.0
      %2079 = vmatpush1.msra.mxu0 0.0
      %2080 = vmatprep.subr.mxu0 0.0
      %2081 = vmatpush1.msra.mxu0 0.0
      %2082 = vmatprep.subr.mxu0 0.0
      %2083 = vmatpush1.msra.mxu0 0.0
      %2084 = vmatprep.subr.mxu0 0.0
      %2085 = vmatpush1.msra.mxu0 0.0
      %2086 = vmatprep.subr.mxu0 0.0
      %2087 = vmatpush1.msra.mxu0 %v2051
      %2088 = vmatprep.subr.mxu0 0.0
      %2089 = vmatpush2.msra.mxu0 0.0
      %2090 = vmatprep.subr.mxu0 0.0
      %2091 = vmatpush2.msra.mxu0 0.0
      %2092 = vmatprep.subr.mxu0 0.0
      %2093 = vmatpush2.msra.mxu0 0.0
      %2094 = vmatprep.subr.mxu0 0.0
      %2095 = vmatpush2.msra.mxu0 0.0
      %2096 = vmatprep.subr.mxu0 0.0
      %2097 = vmatpush2.msra.mxu0 0.0
      %2098 = vmatprep.subr.mxu0 0.0
      %2099 = vmatpush2.msra.mxu0 0.0
      %2100 = vmatprep.subr.mxu0 0.0
      %2101 = vmatpush2.msra.mxu0 0.0
      %2102 = vmatprep.subr.mxu0 0.0
      %2103 = vmatpush2.msra.mxu0 0.0
      %2104 = vmatprep.subr.mxu0 0.0
      %2105 = vmatpush2.msra.mxu0 0.0
      %2106 = vmatprep.subr.mxu0 0.0
      %2107 = vmatpush2.msra.mxu0 0.0
      %2108 = vmatprep.subr.mxu0 0.0
      %2109 = vmatpush2.msra.mxu0 0.0
      %2110 = vmatprep.subr.mxu0 0.0
      %2111 = vmatpush2.msra.mxu0 0.0
      %2112 = vmatprep.subr.mxu0 0.0
      %2113 = vmatpush2.msra.mxu0 0.0
      %2114 = vmatprep.subr.mxu0 0.0
      %2115 = vmatpush2.msra.mxu0 0.0
      %2116 = vmatprep.subr.mxu0 0.0
      %2117 = vmatpush2.msra.mxu0 0.0
      %2118 = vmatprep.subr.mxu0 0.0
      %2119 = vmatpush2.msra.mxu0 0.0
      %2120 = vmatprep.mubr.f32.mxu0 0.0
      %2121 = vmatmul.mubr.f32.gmra.mxu0 %v2054
      %v2122 = vpop.f32.mrf.mxu0
      %v2123 = vadd.f32 0.0, %v2122
      %v2124 = vpop.f32.mrf.mxu0
      %2125 = vdwg.mxu0
      %2126 = vrot.lane.b32.xlu0 %v876, 40
      %v2127 = vpop.permute.xlu0 %2126
      %v2130 = vsel %vm884, %v2049, 0
      %2132 = vmatprep.subr.mxu0 0.0
      %2133 = vmatpush1.msra.mxu0 0.0
      %2134 = vmatprep.subr.mxu0 0.0
      %2135 = vmatpush1.msra.mxu0 0.0
      %2136 = vmatprep.subr.mxu0 0.0
      %2137 = vmatpush1.msra.mxu0 0.0
      %2138 = vmatprep.subr.mxu0 0.0
      %2139 = vmatpush1.msra.mxu0 0.0
      %2140 = vmatprep.subr.mxu0 0.0
      %2141 = vmatpush1.msra.mxu0 0.0
      %2142 = vmatprep.subr.mxu0 0.0
      %2143 = vmatpush1.msra.mxu0 0.0
      %2144 = vmatprep.subr.mxu0 0.0
      %2145 = vmatpush1.msra.mxu0 0.0
      %2146 = vmatprep.subr.mxu0 0.0
      %2147 = vmatpush1.msra.mxu0 0.0
      %2148 = vmatprep.subr.mxu0 0.0
      %2149 = vmatpush1.msra.mxu0 0.0
      %2150 = vmatprep.subr.mxu0 0.0
      %2151 = vmatpush1.msra.mxu0 0.0
      %2152 = vmatprep.subr.mxu0 0.0
      %2153 = vmatpush1.msra.mxu0 0.0
      %2154 = vmatprep.subr.mxu0 0.0
      %2155 = vmatpush1.msra.mxu0 0.0
      %2156 = vmatprep.subr.mxu0 0.0
      %2157 = vmatpush1.msra.mxu0 0.0
      %2158 = vmatprep.subr.mxu0 0.0
      %2159 = vmatpush1.msra.mxu0 0.0
      %2160 = vmatprep.subr.mxu0 0.0
      %2161 = vmatpush1.msra.mxu0 0.0
      %2162 = vmatprep.subr.mxu0 0.0
      %2163 = vmatpush1.msra.mxu0 %v2127
      %2164 = vmatprep.subr.mxu0 0.0
      %2165 = vmatpush2.msra.mxu0 0.0
      %2166 = vmatprep.subr.mxu0 0.0
      %2167 = vmatpush2.msra.mxu0 0.0
      %2168 = vmatprep.subr.mxu0 0.0
      %2169 = vmatpush2.msra.mxu0 0.0
      %2170 = vmatprep.subr.mxu0 0.0
      %2171 = vmatpush2.msra.mxu0 0.0
      %2172 = vmatprep.subr.mxu0 0.0
      %2173 = vmatpush2.msra.mxu0 0.0
      %2174 = vmatprep.subr.mxu0 0.0
      %2175 = vmatpush2.msra.mxu0 0.0
      %2176 = vmatprep.subr.mxu0 0.0
      %2177 = vmatpush2.msra.mxu0 0.0
      %2178 = vmatprep.subr.mxu0 0.0
      %2179 = vmatpush2.msra.mxu0 0.0
      %2180 = vmatprep.subr.mxu0 0.0
      %2181 = vmatpush2.msra.mxu0 0.0
      %2182 = vmatprep.subr.mxu0 0.0
      %2183 = vmatpush2.msra.mxu0 0.0
      %2184 = vmatprep.subr.mxu0 0.0
      %2185 = vmatpush2.msra.mxu0 0.0
      %2186 = vmatprep.subr.mxu0 0.0
      %2187 = vmatpush2.msra.mxu0 0.0
      %2188 = vmatprep.subr.mxu0 0.0
      %2189 = vmatpush2.msra.mxu0 0.0
      %2190 = vmatprep.subr.mxu0 0.0
      %2191 = vmatpush2.msra.mxu0 0.0
      %2192 = vmatprep.subr.mxu0 0.0
      %2193 = vmatpush2.msra.mxu0 0.0
      %2194 = vmatprep.subr.mxu0 0.0
      %2195 = vmatpush2.msra.mxu0 0.0
      %2196 = vmatprep.mubr.f32.mxu0 0.0
      %2197 = vmatmul.mubr.f32.gmra.mxu0 %v2130
      %v2198 = vpop.f32.mrf.mxu0
      %v2199 = vadd.f32 0.0, %v2198
      %v2200 = vpop.f32.mrf.mxu0
      %2201 = vdwg.mxu0
      %2204 = vrot.lane.b32.xlu0 %v1463, 8
      %v2205 = vpop.permute.xlu0 %2204
      %2206 = vrot.lane.b32.xlu0 %v1539, 8
      %v2207 = vpop.permute.xlu0 %2206
      %2212 = vrot.lane.b32.xlu0 %v1793, 16
      %v2213 = vpop.permute.xlu0 %2212
      %2214 = vrot.lane.b32.xlu0 %v1869, 16
      %v2215 = vpop.permute.xlu0 %2214
      %2220 = vrot.lane.b32.xlu0 %v2123, 24
      %v2221 = vpop.permute.xlu0 %2220
      %2222 = vrot.lane.b32.xlu0 %v2199, 24
      %v2223 = vpop.permute.xlu0 %2222
      %v2226 = vsel %vm884, %v1133, %v2205
      %v2227 = vsel %vm884, %v1209, %v2207
      %vm2228 = vcmask 130048
      %v2229 = vsel %vm2228, %v2226, %v2213
      %v2230 = vsel %vm2228, %v2227, %v2215
      %vm2231 = vcmask 195584
      %v2232 = vsel %vm2231, %v2229, %v2221
      %v2233 = vsel %vm2231, %v2230, %v2223
      %v2234 = vld [vmem:[%s732] sm:$0xff]
      %v2235 = vld [vmem:[%s732 + $0x8] sm:$0xff]
      %v2236 = vld [vmem:[%s732 + $0x10] sm:$0xff]
      %v2237 = vld [vmem:[%s732 + $0x18] sm:$0xff]
      %v2238 = vld [vmem:[%s736] sm:$0x1]
      %v2240 = vlaneseq
      %v2241 = vshrl.u32 %v2240, 7
      %v2242 = vsub.s32 0, %v2241
      %v2243 = vrot.slane %v2238, %v2242
      %v2246 = vsel %vm797, %v2232, 0
      %v2249 = vsel %vm797, %v2233, 0
      %2251 = vmatprep.subr.mxu0 0.0
      %2252 = vmatpush1.msra.mxu0 0.0
      %2253 = vmatprep.subr.mxu0 0.0
      %2254 = vmatpush1.msra.mxu0 0.0
      %2255 = vmatprep.subr.mxu0 0.0
      %2256 = vmatpush1.msra.mxu0 0.0
      %2257 = vmatprep.subr.mxu0 0.0
      %2258 = vmatpush1.msra.mxu0 0.0
      %2259 = vmatprep.subr.mxu0 0.0
      %2260 = vmatpush1.msra.mxu0 0.0
      %2261 = vmatprep.subr.mxu0 0.0
      %2262 = vmatpush1.msra.mxu0 0.0
      %2263 = vmatprep.subr.mxu0 0.0
      %2264 = vmatpush1.msra.mxu0 0.0
      %2265 = vmatprep.subr.mxu0 0.0
      %2266 = vmatpush1.msra.mxu0 0.0
      %2267 = vmatprep.subr.mxu0 0.0
      %2268 = vmatpush1.msra.mxu0 0.0
      %2269 = vmatprep.subr.mxu0 0.0
      %2270 = vmatpush1.msra.mxu0 0.0
      %2271 = vmatprep.subr.mxu0 0.0
      %2272 = vmatpush1.msra.mxu0 0.0
      %2273 = vmatprep.subr.mxu0 0.0
      %2274 = vmatpush1.msra.mxu0 0.0
      %2275 = vmatprep.subr.mxu0 0.0
      %2276 = vmatpush1.msra.mxu0 %v2237
      %2277 = vmatprep.subr.mxu0 0.0
      %2278 = vmatpush1.msra.mxu0 %v2236
      %2279 = vmatprep.subr.mxu0 0.0
      %2280 = vmatpush1.msra.mxu0 %v2235
      %2281 = vmatprep.subr.mxu0 0.0
      %2282 = vmatpush1.msra.mxu0 %v2234
      %2283 = vmatprep.subr.mxu0 0.0
      %2284 = vmatpush2.msra.mxu0 0.0
      %2285 = vmatprep.subr.mxu0 0.0
      %2286 = vmatpush2.msra.mxu0 0.0
      %2287 = vmatprep.subr.mxu0 0.0
      %2288 = vmatpush2.msra.mxu0 0.0
      %2289 = vmatprep.subr.mxu0 0.0
      %2290 = vmatpush2.msra.mxu0 0.0
      %2291 = vmatprep.subr.mxu0 0.0
      %2292 = vmatpush2.msra.mxu0 0.0
      %2293 = vmatprep.subr.mxu0 0.0
      %2294 = vmatpush2.msra.mxu0 0.0
      %2295 = vmatprep.subr.mxu0 0.0
      %2296 = vmatpush2.msra.mxu0 0.0
      %2297 = vmatprep.subr.mxu0 0.0
      %2298 = vmatpush2.msra.mxu0 0.0
      %2299 = vmatprep.subr.mxu0 0.0
      %2300 = vmatpush2.msra.mxu0 0.0
      %2301 = vmatprep.subr.mxu0 0.0
      %2302 = vmatpush2.msra.mxu0 0.0
      %2303 = vmatprep.subr.mxu0 0.0
      %2304 = vmatpush2.msra.mxu0 0.0
      %2305 = vmatprep.subr.mxu0 0.0
      %2306 = vmatpush2.msra.mxu0 0.0
      %2307 = vmatprep.subr.mxu0 0.0
      %2308 = vmatpush2.msra.mxu0 0.0
      %2309 = vmatprep.subr.mxu0 0.0
      %2310 = vmatpush2.msra.mxu0 0.0
      %2311 = vmatprep.subr.mxu0 0.0
      %2312 = vmatpush2.msra.mxu0 0.0
      %2313 = vmatprep.subr.mxu0 0.0
      %2314 = vmatpush2.msra.mxu0 0.0
      %2315 = vmatprep.mubr.f32.mxu0 0.0
      %2316 = vmatmul.mubr.f32.gmra.mxu0 %v2246
      %v2317 = vpop.f32.mrf.mxu0
      %v2318 = vadd.f32 %v2243, %v2317
      %v2319 = vpop.f32.mrf.mxu0
      %2320 = vmatprep.mubr.f32.mxu0 0.0
      %2321 = vmatmul.mubr.f32.gmra.mxu0 %v2249
      %v2322 = vpop.f32.mrf.mxu0
      %v2323 = vadd.f32 %v2243, %v2322
      %v2324 = vpop.f32.mrf.mxu0
      %2325 = vdwg.mxu0
      %v2326 = vadd.f32 %v784, %v2318
      %v2327 = vadd.f32 %v785, %v2323
      %v2328 = vld [vmem:[%s758] sm:$0x1]
      %v2329 = vld [vmem:[%s762] sm:$0x1]
      %v2330 = vsel %vm797, %v2326, 0.0
      %2331 = vadd.xlane.f32.xlu0 %v2330
      %v2332 = vpop.xlane.xlu0 %2331
      %v2333 = vsel %vm797, %v2327, 0.0
      %2334 = vadd.xlane.f32.xlu0 %v2333
      %v2335 = vpop.xlane.xlu0 %2334
      %v2336 = vrcp.pop 32.0
      %v2337 = vmul.f32 %v2332, %v2336
      %v2338 = vmul.f32 %v2335, %v2336
      %v2339 = vsub.f32 %v2326, %v2337
      %v2340 = vsub.f32 %v2327, %v2338
      %v2341 = vmul.f32 %v2339, %v2339
      %v2342 = vmul.f32 %v2340, %v2340
      %v2343 = vsel %vm797, %v2341, 0.0
      %2344 = vadd.xlane.f32.xlu0 %v2343
      %v2345 = vpop.xlane.xlu0 %2344
      %v2346 = vsel %vm797, %v2342, 0.0
      %2347 = vadd.xlane.f32.xlu0 %v2346
      %v2348 = vpop.xlane.xlu0 %2347
      %v2349 = vmul.f32 %v2345, %v2336
      %v2350 = vmul.f32 %v2348, %v2336
      %v2351 = vadd.f32 %v2349, 1e-05
      %v2352 = vadd.f32 %v2350, 1e-05
      %v2353 = vrsqrt.pop %v2351
      %v2354 = vrsqrt.pop %v2352
      %v2355 = vmul.f32 %v2339, %v2353
      %v2356 = vmul.f32 %v2340, %v2354
      %v2358 = vlaneseq
      %v2359 = vshrl.u32 %v2358, 7
      %v2360 = vsub.s32 0, %v2359
      %v2361 = vrot.slane %v2328, %v2360
      %v2363 = vmul.f32 %v2355, %v2361
      %v2364 = vmul.f32 %v2356, %v2361
      %v2366 = vlaneseq
      %v2367 = vshrl.u32 %v2366, 7
      %v2368 = vsub.s32 0, %v2367
      %v2369 = vrot.slane %v2329, %v2368
      %v2371 = vadd.f32 %v2363, %v2369
      %v2372 = vadd.f32 %v2364, %v2369
      %v2373 = vld [vmem:[%s741] sm:$0xff]
      %v2374 = vld [vmem:[%s741 + $0x8] sm:$0xff]
      %v2375 = vld [vmem:[%s741 + $0x10] sm:$0xff]
      %v2376 = vld [vmem:[%s741 + $0x18] sm:$0xff]
      %v2377 = vld [vmem:[%s745] sm:$0x1]
      %v2379 = vlaneseq
      %v2380 = vshrl.u32 %v2379, 7
      %v2381 = vsub.s32 0, %v2380
      %v2382 = vrot.slane %v2377, %v2381
      %v2385 = vsel %vm797, %v2371, 0
      %v2388 = vsel %vm797, %v2372, 0
      %2390 = vmatprep.subr.mxu0 0.0
      %2391 = vmatpush1.msra.mxu0 0.0
      %2392 = vmatprep.subr.mxu0 0.0
      %2393 = vmatpush1.msra.mxu0 0.0
      %2394 = vmatprep.subr.mxu0 0.0
      %2395 = vmatpush1.msra.mxu0 0.0
      %2396 = vmatprep.subr.mxu0 0.0
      %2397 = vmatpush1.msra.mxu0 0.0
      %2398 = vmatprep.subr.mxu0 0.0
      %2399 = vmatpush1.msra.mxu0 0.0
      %2400 = vmatprep.subr.mxu0 0.0
      %2401 = vmatpush1.msra.mxu0 0.0
      %2402 = vmatprep.subr.mxu0 0.0
      %2403 = vmatpush1.msra.mxu0 0.0
      %2404 = vmatprep.subr.mxu0 0.0
      %2405 = vmatpush1.msra.mxu0 0.0
      %2406 = vmatprep.subr.mxu0 0.0
      %2407 = vmatpush1.msra.mxu0 0.0
      %2408 = vmatprep.subr.mxu0 0.0
      %2409 = vmatpush1.msra.mxu0 0.0
      %2410 = vmatprep.subr.mxu0 0.0
      %2411 = vmatpush1.msra.mxu0 0.0
      %2412 = vmatprep.subr.mxu0 0.0
      %2413 = vmatpush1.msra.mxu0 0.0
      %2414 = vmatprep.subr.mxu0 0.0
      %2415 = vmatpush1.msra.mxu0 %v2376
      %2416 = vmatprep.subr.mxu0 0.0
      %2417 = vmatpush1.msra.mxu0 %v2375
      %2418 = vmatprep.subr.mxu0 0.0
      %2419 = vmatpush1.msra.mxu0 %v2374
      %2420 = vmatprep.subr.mxu0 0.0
      %2421 = vmatpush1.msra.mxu0 %v2373
      %2422 = vmatprep.subr.mxu0 0.0
      %2423 = vmatpush2.msra.mxu0 0.0
      %2424 = vmatprep.subr.mxu0 0.0
      %2425 = vmatpush2.msra.mxu0 0.0
      %2426 = vmatprep.subr.mxu0 0.0
      %2427 = vmatpush2.msra.mxu0 0.0
      %2428 = vmatprep.subr.mxu0 0.0
      %2429 = vmatpush2.msra.mxu0 0.0
      %2430 = vmatprep.subr.mxu0 0.0
      %2431 = vmatpush2.msra.mxu0 0.0
      %2432 = vmatprep.subr.mxu0 0.0
      %2433 = vmatpush2.msra.mxu0 0.0
      %2434 = vmatprep.subr.mxu0 0.0
      %2435 = vmatpush2.msra.mxu0 0.0
      %2436 = vmatprep.subr.mxu0 0.0
      %2437 = vmatpush2.msra.mxu0 0.0
      %2438 = vmatprep.subr.mxu0 0.0
      %2439 = vmatpush2.msra.mxu0 0.0
      %2440 = vmatprep.subr.mxu0 0.0
      %2441 = vmatpush2.msra.mxu0 0.0
      %2442 = vmatprep.subr.mxu0 0.0
      %2443 = vmatpush2.msra.mxu0 0.0
      %2444 = vmatprep.subr.mxu0 0.0
      %2445 = vmatpush2.msra.mxu0 0.0
      %2446 = vmatprep.subr.mxu0 0.0
      %2447 = vmatpush2.msra.mxu0 0.0
      %2448 = vmatprep.subr.mxu0 0.0
      %2449 = vmatpush2.msra.mxu0 0.0
      %2450 = vmatprep.subr.mxu0 0.0
      %2451 = vmatpush2.msra.mxu0 0.0
      %2452 = vmatprep.subr.mxu0 0.0
      %2453 = vmatpush2.msra.mxu0 0.0
      %2454 = vmatprep.mubr.f32.mxu0 0.0
      %2455 = vmatmul.mubr.f32.gmra.mxu0 %v2385
      %v2456 = vpop.f32.mrf.mxu0
      %v2457 = vadd.f32 %v2382, %v2456
      %v2458 = vpop.f32.mrf.mxu0
      %2459 = vmatprep.mubr.f32.mxu0 0.0
      %2460 = vmatmul.mubr.f32.gmra.mxu0 %v2388
      %v2461 = vpop.f32.mrf.mxu0
      %v2462 = vadd.f32 %v2382, %v2461
      %v2463 = vpop.f32.mrf.mxu0
      %2464 = vdwg.mxu0
      %v2465 = vmax.f32 %v2457, 0.0
      %v2466 = vmax.f32 %v2462, 0.0
      %v2467 = vld [vmem:[%s750] sm:$0xff]
      %v2468 = vld [vmem:[%s750 + $0x8] sm:$0xff]
      %v2469 = vld [vmem:[%s750 + $0x10] sm:$0xff]
      %v2470 = vld [vmem:[%s750 + $0x18] sm:$0xff]
      %v2471 = vld [vmem:[%s750 + $0x20] sm:$0xff]
      %v2472 = vld [vmem:[%s750 + $0x28] sm:$0xff]
      %v2473 = vld [vmem:[%s750 + $0x30] sm:$0xff]
      %v2474 = vld [vmem:[%s750 + $0x38] sm:$0xff]
      %v2475 = vld [vmem:[%s754] sm:$0x1]
      %v2477 = vlaneseq
      %v2478 = vshrl.u32 %v2477, 7
      %v2479 = vsub.s32 0, %v2478
      %v2480 = vrot.slane %v2475, %v2479
      %vm2482 = vcmask 523264
      %v2484 = vsel %vm2482, %v2465, 0
      %v2487 = vsel %vm2482, %v2466, 0
      %2489 = vmatprep.subr.mxu0 0.0
      %2490 = vmatpush1.msra.mxu0 0.0
      %2491 = vmatprep.subr.mxu0 0.0
      %2492 = vmatpush1.msra.mxu0 0.0
      %2493 = vmatprep.subr.mxu0 0.0
      %2494 = vmatpush1.msra.mxu0 0.0
      %2495 = vmatprep.subr.mxu0 0.0
      %2496 = vmatpush1.msra.mxu0 0.0
      %2497 = vmatprep.subr.mxu0 0.0
      %2498 = vmatpush1.msra.mxu0 0.0
      %2499 = vmatprep.subr.mxu0 0.0
      %2500 = vmatpush1.msra.mxu0 0.0
      %2501 = vmatprep.subr.mxu0 0.0
      %2502 = vmatpush1.msra.mxu0 0.0
      %2503 = vmatprep.subr.mxu0 0.0
      %2504 = vmatpush1.msra.mxu0 0.0
      %2505 = vmatprep.subr.mxu0 0.0
      %2506 = vmatpush1.msra.mxu0 %v2474
      %2507 = vmatprep.subr.mxu0 0.0
      %2508 = vmatpush1.msra.mxu0 %v2473
      %2509 = vmatprep.subr.mxu0 0.0
      %2510 = vmatpush1.msra.mxu0 %v2472
      %2511 = vmatprep.subr.mxu0 0.0
      %2512 = vmatpush1.msra.mxu0 %v2471
      %2513 = vmatprep.subr.mxu0 0.0
      %2514 = vmatpush1.msra.mxu0 %v2470
      %2515 = vmatprep.subr.mxu0 0.0
      %2516 = vmatpush1.msra.mxu0 %v2469
      %2517 = vmatprep.subr.mxu0 0.0
      %2518 = vmatpush1.msra.mxu0 %v2468
      %2519 = vmatprep.subr.mxu0 0.0
      %2520 = vmatpush1.msra.mxu0 %v2467
      %2521 = vmatprep.subr.mxu0 0.0
      %2522 = vmatpush2.msra.mxu0 0.0
      %2523 = vmatprep.subr.mxu0 0.0
      %2524 = vmatpush2.msra.mxu0 0.0
      %2525 = vmatprep.subr.mxu0 0.0
      %2526 = vmatpush2.msra.mxu0 0.0
      %2527 = vmatprep.subr.mxu0 0.0
      %2528 = vmatpush2.msra.mxu0 0.0
      %2529 = vmatprep.subr.mxu0 0.0
      %2530 = vmatpush2.msra.mxu0 0.0
      %2531 = vmatprep.subr.mxu0 0.0
      %2532 = vmatpush2.msra.mxu0 0.0
      %2533 = vmatprep.subr.mxu0 0.0
      %2534 = vmatpush2.msra.mxu0 0.0
      %2535 = vmatprep.subr.mxu0 0.0
      %2536 = vmatpush2.msra.mxu0 0.0
      %2537 = vmatprep.subr.mxu0 0.0
      %2538 = vmatpush2.msra.mxu0 0.0
      %2539 = vmatprep.subr.mxu0 0.0
      %2540 = vmatpush2.msra.mxu0 0.0
      %2541 = vmatprep.subr.mxu0 0.0
      %2542 = vmatpush2.msra.mxu0 0.0
      %2543 = vmatprep.subr.mxu0 0.0
      %2544 = vmatpush2.msra.mxu0 0.0
      %2545 = vmatprep.subr.mxu0 0.0
      %2546 = vmatpush2.msra.mxu0 0.0
      %2547 = vmatprep.subr.mxu0 0.0
      %2548 = vmatpush2.msra.mxu0 0.0
      %2549 = vmatprep.subr.mxu0 0.0
      %2550 = vmatpush2.msra.mxu0 0.0
      %2551 = vmatprep.subr.mxu0 0.0
      %2552 = vmatpush2.msra.mxu0 0.0
      %2553 = vmatprep.mubr.f32.mxu0 0.0
      %2554 = vmatmul.mubr.f32.gmra.mxu0 %v2484
      %v2555 = vpop.f32.mrf.mxu0
      %v2556 = vadd.f32 %v2480, %v2555
      %v2557 = vpop.f32.mrf.mxu0
      %2558 = vmatprep.mubr.f32.mxu0 0.0
      %2559 = vmatmul.mubr.f32.gmra.mxu0 %v2487
      %v2560 = vpop.f32.mrf.mxu0
      %v2561 = vadd.f32 %v2480, %v2560
      %v2562 = vpop.f32.mrf.mxu0
      %2563 = vdwg.mxu0
      %v2564 = vadd.f32 %v2371, %v2556
      %v2565 = vadd.f32 %v2372, %v2561
      %v2566 = vld [vmem:[%s766] sm:$0x1]
      %v2567 = vld [vmem:[%s770] sm:$0x1]
      %v2568 = vsel %vm797, %v2564, 0.0
      %2569 = vadd.xlane.f32.xlu0 %v2568
      %v2570 = vpop.xlane.xlu0 %2569
      %v2571 = vsel %vm797, %v2565, 0.0
      %2572 = vadd.xlane.f32.xlu0 %v2571
      %v2573 = vpop.xlane.xlu0 %2572
      %v2574 = vmul.f32 %v2570, %v2336
      %v2575 = vmul.f32 %v2573, %v2336
      %v2576 = vsub.f32 %v2564, %v2574
      %v2577 = vsub.f32 %v2565, %v2575
      %v2578 = vmul.f32 %v2576, %v2576
      %v2579 = vmul.f32 %v2577, %v2577
      %v2580 = vsel %vm797, %v2578, 0.0
      %2581 = vadd.xlane.f32.xlu0 %v2580
      %v2582 = vpop.xlane.xlu0 %2581
      %v2583 = vsel %vm797, %v2579, 0.0
      %2584 = vadd.xlane.f32.xlu0 %v2583
      %v2585 = vpop.xlane.xlu0 %2584
      %v2586 = vmul.f32 %v2582, %v2336
      %v2587 = vmul.f32 %v2585, %v2336
      %v2588 = vadd.f32 %v2586, 1e-05
      %v2589 = vadd.f32 %v2587, 1e-05
      %v2590 = vrsqrt.pop %v2588
      %v2591 = vrsqrt.pop %v2589
      %v2592 = vmul.f32 %v2576, %v2590
      %v2593 = vmul.f32 %v2577, %v2591
      %v2595 = vlaneseq
      %v2596 = vshrl.u32 %v2595, 7
      %v2597 = vsub.s32 0, %v2596
      %v2598 = vrot.slane %v2566, %v2597
      %v2600 = vmul.f32 %v2592, %v2598
      %v2601 = vmul.f32 %v2593, %v2598
      %v2603 = vlaneseq
      %v2604 = vshrl.u32 %v2603, 7
      %v2605 = vsub.s32 0, %v2604
      %v2606 = vrot.slane %v2567, %v2605
      %v2608 = vadd.f32 %v2600, %v2606
      %v2609 = vadd.f32 %v2601, %v2606
      %s2610 = scalar_lea.vmem %s723, 32
      %v2611 = vld [vmem:[%s2610] sm:$0xff]
      %v2612 = vld [vmem:[%s2610 + $0x8] sm:$0xff]
      %v2613 = vld [vmem:[%s2610 + $0x10] sm:$0xff]
      %v2614 = vld [vmem:[%s2610 + $0x18] sm:$0xff]
      %s2615 = scalar_lea.vmem %s727, 1
      %v2616 = vld [vmem:[%s2615] sm:$0x1]
      %v2618 = vlaneseq
      %v2619 = vshrl.u32 %v2618, 7
      %v2620 = vsub.s32 0, %v2619
      %v2621 = vrot.slane %v2616, %v2620
      %v2624 = vsel %vm797, %v2608, 0
      %v2627 = vsel %vm797, %v2609, 0
      %2629 = vmatprep.subr.mxu0 0.0
      %2630 = vmatpush1.msra.mxu0 0.0
      %2631 = vmatprep.subr.mxu0 0.0
      %2632 = vmatpush1.msra.mxu0 0.0
      %2633 = vmatprep.subr.mxu0 0.0
      %2634 = vmatpush1.msra.mxu0 0.0
      %2635 = vmatprep.subr.mxu0 0.0
      %2636 = vmatpush1.msra.mxu0 0.0
      %2637 = vmatprep.subr.mxu0 0.0
      %2638 = vmatpush1.msra.mxu0 0.0
      %2639 = vmatprep.subr.mxu0 0.0
      %2640 = vmatpush1.msra.mxu0 0.0
      %2641 = vmatprep.subr.mxu0 0.0
      %2642 = vmatpush1.msra.mxu0 0.0
      %2643 = vmatprep.subr.mxu0 0.0
      %2644 = vmatpush1.msra.mxu0 0.0
      %2645 = vmatprep.subr.mxu0 0.0
      %2646 = vmatpush1.msra.mxu0 0.0
      %2647 = vmatprep.subr.mxu0 0.0
      %2648 = vmatpush1.msra.mxu0 0.0
      %2649 = vmatprep.subr.mxu0 0.0
      %2650 = vmatpush1.msra.mxu0 0.0
      %2651 = vmatprep.subr.mxu0 0.0
      %2652 = vmatpush1.msra.mxu0 0.0
      %2653 = vmatprep.subr.mxu0 0.0
      %2654 = vmatpush1.msra.mxu0 %v2614
      %2655 = vmatprep.subr.mxu0 0.0
      %2656 = vmatpush1.msra.mxu0 %v2613
      %2657 = vmatprep.subr.mxu0 0.0
      %2658 = vmatpush1.msra.mxu0 %v2612
      %2659 = vmatprep.subr.mxu0 0.0
      %2660 = vmatpush1.msra.mxu0 %v2611
      %2661 = vmatprep.subr.mxu0 0.0
      %2662 = vmatpush2.msra.mxu0 0.0
      %2663 = vmatprep.subr.mxu0 0.0
      %2664 = vmatpush2.msra.mxu0 0.0
      %2665 = vmatprep.subr.mxu0 0.0
      %2666 = vmatpush2.msra.mxu0 0.0
      %2667 = vmatprep.subr.mxu0 0.0
      %2668 = vmatpush2.msra.mxu0 0.0
      %2669 = vmatprep.subr.mxu0 0.0
      %2670 = vmatpush2.msra.mxu0 0.0
      %2671 = vmatprep.subr.mxu0 0.0
      %2672 = vmatpush2.msra.mxu0 0.0
      %2673 = vmatprep.subr.mxu0 0.0
      %2674 = vmatpush2.msra.mxu0 0.0
      %2675 = vmatprep.subr.mxu0 0.0
      %2676 = vmatpush2.msra.mxu0 0.0
      %2677 = vmatprep.subr.mxu0 0.0
      %2678 = vmatpush2.msra.mxu0 0.0
      %2679 = vmatprep.subr.mxu0 0.0
      %2680 = vmatpush2.msra.mxu0 0.0
      %2681 = vmatprep.subr.mxu0 0.0
      %2682 = vmatpush2.msra.mxu0 0.0
      %2683 = vmatprep.subr.mxu0 0.0
      %2684 = vmatpush2.msra.mxu0 0.0
      %2685 = vmatprep.subr.mxu0 0.0
      %2686 = vmatpush2.msra.mxu0 0.0
      %2687 = vmatprep.subr.mxu0 0.0
      %2688 = vmatpush2.msra.mxu0 0.0
      %2689 = vmatprep.subr.mxu0 0.0
      %2690 = vmatpush2.msra.mxu0 0.0
      %2691 = vmatprep.subr.mxu0 0.0
      %2692 = vmatpush2.msra.mxu0 0.0
      %2693 = vmatprep.mubr.f32.mxu0 0.0
      %2694 = vmatmul.mubr.f32.gmra.mxu0 %v2624
      %v2695 = vpop.f32.mrf.mxu0
      %v2696 = vadd.f32 %v2621, %v2695
      %v2697 = vpop.f32.mrf.mxu0
      %2698 = vmatprep.mubr.f32.mxu0 0.0
      %2699 = vmatmul.mubr.f32.gmra.mxu0 %v2627
      %v2700 = vpop.f32.mrf.mxu0
      %v2701 = vadd.f32 %v2621, %v2700
      %v2702 = vpop.f32.mrf.mxu0
      %2703 = vdwg.mxu0
      %v2704 = vmul.f32 %v2696, 0.35355338
      %v2705 = vmul.f32 %v2701, 0.35355338
      %2707 = vrot.lane.b32.xlu0 %v2696, 96
      %v2708 = vpop.permute.xlu0 %2707
      %v2710 = vsel %vm884, %v2704, 0
      %v2712 = vsel %vm884, %v2708, 0
      %2714 = vmatprep.subr.mxu0 0.0
      %2715 = vmatpush1.xpose.msra.mxu0 0.0
      %2716 = vmatprep.subr.mxu0 0.0
      %2717 = vmatpush1.xpose.msra.mxu0 0.0
      %2718 = vmatprep.subr.mxu0 0.0
      %2719 = vmatpush1.xpose.msra.mxu0 0.0
      %2720 = vmatprep.subr.mxu0 0.0
      %2721 = vmatpush1.xpose.msra.mxu0 0.0
      %2722 = vmatprep.subr.mxu0 0.0
      %2723 = vmatpush1.xpose.msra.mxu0 0.0
      %2724 = vmatprep.subr.mxu0 0.0
      %2725 = vmatpush1.xpose.msra.mxu0 0.0
      %2726 = vmatprep.subr.mxu0 0.0
      %2727 = vmatpush1.xpose.msra.mxu0 0.0
      %2728 = vmatprep.subr.mxu0 0.0
      %2729 = vmatpush1.xpose.msra.mxu0 0.0
      %2730 = vmatprep.subr.mxu0 0.0
      %2731 = vmatpush1.xpose.msra.mxu0 0.0
      %2732 = vmatprep.subr.mxu0 0.0
      %2733 = vmatpush1.xpose.msra.mxu0 0.0
      %2734 = vmatprep.subr.mxu0 0.0
      %2735 = vmatpush1.xpose.msra.mxu0 0.0
      %2736 = vmatprep.subr.mxu0 0.0
      %2737 = vmatpush1.xpose.msra.mxu0 0.0
      %2738 = vmatprep.subr.mxu0 0.0
      %2739 = vmatpush1.xpose.msra.mxu0 0.0
      %2740 = vmatprep.subr.mxu0 0.0
      %2741 = vmatpush1.xpose.msra.mxu0 0.0
      %2742 = vmatprep.subr.mxu0 0.0
      %2743 = vmatpush1.xpose.msra.mxu0 0.0
      %2744 = vmatprep.subr.mxu0 0.0
      %2745 = vmatpush1.xpose.msra.mxu0 %v2712
      %2746 = vmatprep.subr.mxu0 0.0
      %2747 = vmatpush2.xpose.msra.mxu0 0.0
      %2748 = vmatprep.subr.mxu0 0.0
      %2749 = vmatpush2.xpose.msra.mxu0 0.0
      %2750 = vmatprep.subr.mxu0 0.0
      %2751 = vmatpush2.xpose.msra.mxu0 0.0
      %2752 = vmatprep.subr.mxu0 0.0
      %2753 = vmatpush2.xpose.msra.mxu0 0.0
      %2754 = vmatprep.subr.mxu0 0.0
      %2755 = vmatpush2.xpose.msra.mxu0 0.0
      %2756 = vmatprep.subr.mxu0 0.0
      %2757 = vmatpush2.xpose.msra.mxu0 0.0
      %2758 = vmatprep.subr.mxu0 0.0
      %2759 = vmatpush2.xpose.msra.mxu0 0.0
      %2760 = vmatprep.subr.mxu0 0.0
      %2761 = vmatpush2.xpose.msra.mxu0 0.0
      %2762 = vmatprep.subr.mxu0 0.0
      %2763 = vmatpush2.xpose.msra.mxu0 0.0
      %2764 = vmatprep.subr.mxu0 0.0
      %2765 = vmatpush2.xpose.msra.mxu0 0.0
      %2766 = vmatprep.subr.mxu0 0.0
      %2767 = vmatpush2.xpose.msra.mxu0 0.0
      %2768 = vmatprep.subr.mxu0 0.0
      %2769 = vmatpush2.xpose.msra.mxu0 0.0
      %2770 = vmatprep.subr.mxu0 0.0
      %2771 = vmatpush2.xpose.msra.mxu0 0.0
      %2772 = vmatprep.subr.mxu0 0.0
      %2773 = vmatpush2.xpose.msra.mxu0 0.0
      %2774 = vmatprep.subr.mxu0 0.0
      %2775 = vmatpush2.xpose.msra.mxu0 0.0
      %2776 = vmatprep.subr.mxu0 0.0
      %2777 = vmatpush2.xpose.msra.mxu0 0.0
      %2778 = vmatprep.mubr.f32.mxu0 0.0
      %2779 = vmatmul.mubr.f32.gmra.mxu0 %v2710
      %v2780 = vpop.f32.mrf.mxu0
      %v2781 = vadd.f32 0.0, %v2780
      %v2782 = vpop.f32.mrf.mxu0
      %2783 = vdwg.mxu0
      %2785 = vrot.lane.b32.xlu0 %v2701, 96
      %v2786 = vpop.permute.xlu0 %2785
      %v2788 = vsel %vm884, %v2705, 0
      %v2790 = vsel %vm884, %v2786, 0
      %2792 = vmatprep.subr.mxu0 0.0
      %2793 = vmatpush1.xpose.msra.mxu0 0.0
      %2794 = vmatprep.subr.mxu0 0.0
      %2795 = vmatpush1.xpose.msra.mxu0 0.0
      %2796 = vmatprep.subr.mxu0 0.0
      %2797 = vmatpush1.xpose.msra.mxu0 0.0
      %2798 = vmatprep.subr.mxu0 0.0
      %2799 = vmatpush1.xpose.msra.mxu0 0.0
      %2800 = vmatprep.subr.mxu0 0.0
      %2801 = vmatpush1.xpose.msra.mxu0 0.0
      %2802 = vmatprep.subr.mxu0 0.0
      %2803 = vmatpush1.xpose.msra.mxu0 0.0
      %2804 = vmatprep.subr.mxu0 0.0
      %2805 = vmatpush1.xpose.msra.mxu0 0.0
      %2806 = vmatprep.subr.mxu0 0.0
      %2807 = vmatpush1.xpose.msra.mxu0 0.0
      %2808 = vmatprep.subr.mxu0 0.0
      %2809 = vmatpush1.xpose.msra.mxu0 0.0
      %2810 = vmatprep.subr.mxu0 0.0
      %2811 = vmatpush1.xpose.msra.mxu0 0.0
      %2812 = vmatprep.subr.mxu0 0.0
      %2813 = vmatpush1.xpose.msra.mxu0 0.0
      %2814 = vmatprep.subr.mxu0 0.0
      %2815 = vmatpush1.xpose.msra.mxu0 0.0
      %2816 = vmatprep.subr.mxu0 0.0
      %2817 = vmatpush1.xpose.msra.mxu0 0.0
      %2818 = vmatprep.subr.mxu0 0.0
      %2819 = vmatpush1.xpose.msra.mxu0 0.0
      %2820 = vmatprep.subr.mxu0 0.0
      %2821 = vmatpush1.xpose.msra.mxu0 0.0
      %2822 = vmatprep.subr.mxu0 0.0
      %2823 = vmatpush1.xpose.msra.mxu0 %v2790
      %2824 = vmatprep.subr.mxu0 0.0
      %2825 = vmatpush2.xpose.msra.mxu0 0.0
      %2826 = vmatprep.subr.mxu0 0.0
      %2827 = vmatpush2.xpose.msra.mxu0 0.0
      %2828 = vmatprep.subr.mxu0 0.0
      %2829 = vmatpush2.xpose.msra.mxu0 0.0
      %2830 = vmatprep.subr.mxu0 0.0
      %2831 = vmatpush2.xpose.msra.mxu0 0.0
      %2832 = vmatprep.subr.mxu0 0.0
      %2833 = vmatpush2.xpose.msra.mxu0 0.0
      %2834 = vmatprep.subr.mxu0 0.0
      %2835 = vmatpush2.xpose.msra.mxu0 0.0
      %2836 = vmatprep.subr.mxu0 0.0
      %2837 = vmatpush2.xpose.msra.mxu0 0.0
      %2838 = vmatprep.subr.mxu0 0.0
      %2839 = vmatpush2.xpose.msra.mxu0 0.0
      %2840 = vmatprep.subr.mxu0 0.0
      %2841 = vmatpush2.xpose.msra.mxu0 0.0
      %2842 = vmatprep.subr.mxu0 0.0
      %2843 = vmatpush2.xpose.msra.mxu0 0.0
      %2844 = vmatprep.subr.mxu0 0.0
      %2845 = vmatpush2.xpose.msra.mxu0 0.0
      %2846 = vmatprep.subr.mxu0 0.0
      %2847 = vmatpush2.xpose.msra.mxu0 0.0
      %2848 = vmatprep.subr.mxu0 0.0
      %2849 = vmatpush2.xpose.msra.mxu0 0.0
      %2850 = vmatprep.subr.mxu0 0.0
      %2851 = vmatpush2.xpose.msra.mxu0 0.0
      %2852 = vmatprep.subr.mxu0 0.0
      %2853 = vmatpush2.xpose.msra.mxu0 0.0
      %2854 = vmatprep.subr.mxu0 0.0
      %2855 = vmatpush2.xpose.msra.mxu0 0.0
      %2856 = vmatprep.mubr.f32.mxu0 0.0
      %2857 = vmatmul.mubr.f32.gmra.mxu0 %v2788
      %v2858 = vpop.f32.mrf.mxu0
      %v2859 = vadd.f32 0.0, %v2858
      %v2860 = vpop.f32.mrf.mxu0
      %2861 = vdwg.mxu0
      %v2862 = vsel %vm884, %v2781, -inf
      %2863 = vmax.xlane.f32.xlu0 %v2862
      %v2864 = vpop.xlane.xlu0 %2863
      %v2865 = vsel %vm884, %v2859, -inf
      %2866 = vmax.xlane.f32.xlu0 %v2865
      %v2867 = vpop.xlane.xlu0 %2866
      %v2868 = vsub.f32 %v2781, %v2864
      %v2869 = vsub.f32 %v2859, %v2867
      %v2870 = vmul.f32 %v2868, 1.442695
      %v2871 = vpow.pop %v2870
      %v2872 = vmul.f32 %v2869, 1.442695
      %v2873 = vpow.pop %v2872
      %v2874 = vsel %vm884, %v2871, 0.0
      %2875 = vadd.xlane.f32.xlu0 %v2874
      %v2876 = vpop.xlane.xlu0 %2875
      %v2877 = vsel %vm884, %v2873, 0.0
      %2878 = vadd.xlane.f32.xlu0 %v2877
      %v2879 = vpop.xlane.xlu0 %2878
      %v2880 = vrcp.pop %v2876
      %v2881 = vrcp.pop %v2879
      %v2882 = vmul.f32 %v2871, %v2880
      %v2883 = vmul.f32 %v2873, %v2881
      %2884 = vrot.lane.b32.xlu0 %v2696, 64
      %v2885 = vpop.permute.xlu0 %2884
      %v2888 = vsel %vm884, %v2882, 0
      %2890 = vmatprep.subr.mxu0 0.0
      %2891 = vmatpush1.msra.mxu0 0.0
      %2892 = vmatprep.subr.mxu0 0.0
      %2893 = vmatpush1.msra.mxu0 0.0
      %2894 = vmatprep.subr.mxu0 0.0
      %2895 = vmatpush1.msra.mxu0 0.0
      %2896 = vmatprep.subr.mxu0 0.0
      %2897 = vmatpush1.msra.mxu0 0.0
      %2898 = vmatprep.subr.mxu0 0.0
      %2899 = vmatpush1.msra.mxu0 0.0
      %2900 = vmatprep.subr.mxu0 0.0
      %2901 = vmatpush1.msra.mxu0 0.0
      %2902 = vmatprep.subr.mxu0 0.0
      %2903 = vmatpush1.msra.mxu0 0.0
      %2904 = vmatprep.subr.mxu0 0.0
      %2905 = vmatpush1.msra.mxu0 0.0
      %2906 = vmatprep.subr.mxu0 0.0
      %2907 = vmatpush1.msra.mxu0 0.0
      %2908 = vmatprep.subr.mxu0 0.0
      %2909 = vmatpush1.msra.mxu0 0.0
      %2910 = vmatprep.subr.mxu0 0.0
      %2911 = vmatpush1.msra.mxu0 0.0
      %2912 = vmatprep.subr.mxu0 0.0
      %2913 = vmatpush1.msra.mxu0 0.0
      %2914 = vmatprep.subr.mxu0 0.0
      %2915 = vmatpush1.msra.mxu0 0.0
      %2916 = vmatprep.subr.mxu0 0.0
      %2917 = vmatpush1.msra.mxu0 0.0
      %2918 = vmatprep.subr.mxu0 0.0
      %2919 = vmatpush1.msra.mxu0 0.0
      %2920 = vmatprep.subr.mxu0 0.0
      %2921 = vmatpush1.msra.mxu0 %v2885
      %2922 = vmatprep.subr.mxu0 0.0
      %2923 = vmatpush2.msra.mxu0 0.0
      %2924 = vmatprep.subr.mxu0 0.0
      %2925 = vmatpush2.msra.mxu0 0.0
      %2926 = vmatprep.subr.mxu0 0.0
      %2927 = vmatpush2.msra.mxu0 0.0
      %2928 = vmatprep.subr.mxu0 0.0
      %2929 = vmatpush2.msra.mxu0 0.0
      %2930 = vmatprep.subr.mxu0 0.0
      %2931 = vmatpush2.msra.mxu0 0.0
      %2932 = vmatprep.subr.mxu0 0.0
      %2933 = vmatpush2.msra.mxu0 0.0
      %2934 = vmatprep.subr.mxu0 0.0
      %2935 = vmatpush2.msra.mxu0 0.0
      %2936 = vmatprep.subr.mxu0 0.0
      %2937 = vmatpush2.msra.mxu0 0.0
      %2938 = vmatprep.subr.mxu0 0.0
      %2939 = vmatpush2.msra.mxu0 0.0
      %2940 = vmatprep.subr.mxu0 0.0
      %2941 = vmatpush2.msra.mxu0 0.0
      %2942 = vmatprep.subr.mxu0 0.0
      %2943 = vmatpush2.msra.mxu0 0.0
      %2944 = vmatprep.subr.mxu0 0.0
      %2945 = vmatpush2.msra.mxu0 0.0
      %2946 = vmatprep.subr.mxu0 0.0
      %2947 = vmatpush2.msra.mxu0 0.0
      %2948 = vmatprep.subr.mxu0 0.0
      %2949 = vmatpush2.msra.mxu0 0.0
      %2950 = vmatprep.subr.mxu0 0.0
      %2951 = vmatpush2.msra.mxu0 0.0
      %2952 = vmatprep.subr.mxu0 0.0
      %2953 = vmatpush2.msra.mxu0 0.0
      %2954 = vmatprep.mubr.f32.mxu0 0.0
      %2955 = vmatmul.mubr.f32.gmra.mxu0 %v2888
      %v2956 = vpop.f32.mrf.mxu0
      %v2957 = vadd.f32 0.0, %v2956
      %v2958 = vpop.f32.mrf.mxu0
      %2959 = vdwg.mxu0
      %2960 = vrot.lane.b32.xlu0 %v2701, 64
      %v2961 = vpop.permute.xlu0 %2960
      %v2964 = vsel %vm884, %v2883, 0
      %2966 = vmatprep.subr.mxu0 0.0
      %2967 = vmatpush1.msra.mxu0 0.0
      %2968 = vmatprep.subr.mxu0 0.0
      %2969 = vmatpush1.msra.mxu0 0.0
      %2970 = vmatprep.subr.mxu0 0.0
      %2971 = vmatpush1.msra.mxu0 0.0
      %2972 = vmatprep.subr.mxu0 0.0
      %2973 = vmatpush1.msra.mxu0 0.0
      %2974 = vmatprep.subr.mxu0 0.0
      %2975 = vmatpush1.msra.mxu0 0.0
      %2976 = vmatprep.subr.mxu0 0.0
      %2977 = vmatpush1.msra.mxu0 0.0
      %2978 = vmatprep.subr.mxu0 0.0
      %2979 = vmatpush1.msra.mxu0 0.0
      %2980 = vmatprep.subr.mxu0 0.0
      %2981 = vmatpush1.msra.mxu0 0.0
      %2982 = vmatprep.subr.mxu0 0.0
      %2983 = vmatpush1.msra.mxu0 0.0
      %2984 = vmatprep.subr.mxu0 0.0
      %2985 = vmatpush1.msra.mxu0 0.0
      %2986 = vmatprep.subr.mxu0 0.0
      %2987 = vmatpush1.msra.mxu0 0.0
      %2988 = vmatprep.subr.mxu0 0.0
      %2989 = vmatpush1.msra.mxu0 0.0
      %2990 = vmatprep.subr.mxu0 0.0
      %2991 = vmatpush1.msra.mxu0 0.0
      %2992 = vmatprep.subr.mxu0 0.0
      %2993 = vmatpush1.msra.mxu0 0.0
      %2994 = vmatprep.subr.mxu0 0.0
      %2995 = vmatpush1.msra.mxu0 0.0
      %2996 = vmatprep.subr.mxu0 0.0
      %2997 = vmatpush1.msra.mxu0 %v2961
      %2998 = vmatprep.subr.mxu0 0.0
      %2999 = vmatpush2.msra.mxu0 0.0
      %3000 = vmatprep.subr.mxu0 0.0
      %3001 = vmatpush2.msra.mxu0 0.0
      %3002 = vmatprep.subr.mxu0 0.0
      %3003 = vmatpush2.msra.mxu0 0.0
      %3004 = vmatprep.subr.mxu0 0.0
      %3005 = vmatpush2.msra.mxu0 0.0
      %3006 = vmatprep.subr.mxu0 0.0
      %3007 = vmatpush2.msra.mxu0 0.0
      %3008 = vmatprep.subr.mxu0 0.0
      %3009 = vmatpush2.msra.mxu0 0.0
      %3010 = vmatprep.subr.mxu0 0.0
      %3011 = vmatpush2.msra.mxu0 0.0
      %3012 = vmatprep.subr.mxu0 0.0
      %3013 = vmatpush2.msra.mxu0 0.0
      %3014 = vmatprep.subr.mxu0 0.0
      %3015 = vmatpush2.msra.mxu0 0.0
      %3016 = vmatprep.subr.mxu0 0.0
      %3017 = vmatpush2.msra.mxu0 0.0
      %3018 = vmatprep.subr.mxu0 0.0
      %3019 = vmatpush2.msra.mxu0 0.0
      %3020 = vmatprep.subr.mxu0 0.0
      %3021 = vmatpush2.msra.mxu0 0.0
      %3022 = vmatprep.subr.mxu0 0.0
      %3023 = vmatpush2.msra.mxu0 0.0
      %3024 = vmatprep.subr.mxu0 0.0
      %3025 = vmatpush2.msra.mxu0 0.0
      %3026 = vmatprep.subr.mxu0 0.0
      %3027 = vmatpush2.msra.mxu0 0.0
      %3028 = vmatprep.subr.mxu0 0.0
      %3029 = vmatpush2.msra.mxu0 0.0
      %3030 = vmatprep.mubr.f32.mxu0 0.0
      %3031 = vmatmul.mubr.f32.gmra.mxu0 %v2964
      %v3032 = vpop.f32.mrf.mxu0
      %v3033 = vadd.f32 0.0, %v3032
      %v3034 = vpop.f32.mrf.mxu0
      %3035 = vdwg.mxu0
      %3036 = vrot.lane.b32.xlu0 %v2704, 120
      %v3037 = vpop.permute.xlu0 %3036
      %3038 = vrot.lane.b32.xlu0 %v2696, 88
      %v3039 = vpop.permute.xlu0 %3038
      %v3040 = vsel %vm884, %v3037, 0
      %v3042 = vsel %vm884, %v3039, 0
      %3044 = vmatprep.subr.mxu0 0.0
      %3045 = vmatpush1.xpose.msra.mxu0 0.0
      %3046 = vmatprep.subr.mxu0 0.0
      %3047 = vmatpush1.xpose.msra.mxu0 0.0
      %3048 = vmatprep.subr.mxu0 0.0
      %3049 = vmatpush1.xpose.msra.mxu0 0.0
      %3050 = vmatprep.subr.mxu0 0.0
      %3051 = vmatpush1.xpose.msra.mxu0 0.0
      %3052 = vmatprep.subr.mxu0 0.0
      %3053 = vmatpush1.xpose.msra.mxu0 0.0
      %3054 = vmatprep.subr.mxu0 0.0
      %3055 = vmatpush1.xpose.msra.mxu0 0.0
      %3056 = vmatprep.subr.mxu0 0.0
      %3057 = vmatpush1.xpose.msra.mxu0 0.0
      %3058 = vmatprep.subr.mxu0 0.0
      %3059 = vmatpush1.xpose.msra.mxu0 0.0
      %3060 = vmatprep.subr.mxu0 0.0
      %3061 = vmatpush1.xpose.msra.mxu0 0.0
      %3062 = vmatprep.subr.mxu0 0.0
      %3063 = vmatpush1.xpose.msra.mxu0 0.0
      %3064 = vmatprep.subr.mxu0 0.0
      %3065 = vmatpush1.xpose.msra.mxu0 0.0
      %3066 = vmatprep.subr.mxu0 0.0
      %3067 = vmatpush1.xpose.msra.mxu0 0.0
      %3068 = vmatprep.subr.mxu0 0.0
      %3069 = vmatpush1.xpose.msra.mxu0 0.0
      %3070 = vmatprep.subr.mxu0 0.0
      %3071 = vmatpush1.xpose.msra.mxu0 0.0
      %3072 = vmatprep.subr.mxu0 0.0
      %3073 = vmatpush1.xpose.msra.mxu0 0.0
      %3074 = vmatprep.subr.mxu0 0.0
      %3075 = vmatpush1.xpose.msra.mxu0 %v3042
      %3076 = vmatprep.subr.mxu0 0.0
      %3077 = vmatpush2.xpose.msra.mxu0 0.0
      %3078 = vmatprep.subr.mxu0 0.0
      %3079 = vmatpush2.xpose.msra.mxu0 0.0
      %3080 = vmatprep.subr.mxu0 0.0
      %3081 = vmatpush2.xpose.msra.mxu0 0.0
      %3082 = vmatprep.subr.mxu0 0.0
      %3083 = vmatpush2.xpose.msra.mxu0 0.0
      %3084 = vmatprep.subr.mxu0 0.0
      %3085 = vmatpush2.xpose.msra.mxu0 0.0
      %3086 = vmatprep.subr.mxu0 0.0
      %3087 = vmatpush2.xpose.msra.mxu0 0.0
      %3088 = vmatprep.subr.mxu0 0.0
      %3089 = vmatpush2.xpose.msra.mxu0 0.0
      %3090 = vmatprep.subr.mxu0 0.0
      %3091 = vmatpush2.xpose.msra.mxu0 0.0
      %3092 = vmatprep.subr.mxu0 0.0
      %3093 = vmatpush2.xpose.msra.mxu0 0.0
      %3094 = vmatprep.subr.mxu0 0.0
      %3095 = vmatpush2.xpose.msra.mxu0 0.0
      %3096 = vmatprep.subr.mxu0 0.0
      %3097 = vmatpush2.xpose.msra.mxu0 0.0
      %3098 = vmatprep.subr.mxu0 0.0
      %3099 = vmatpush2.xpose.msra.mxu0 0.0
      %3100 = vmatprep.subr.mxu0 0.0
      %3101 = vmatpush2.xpose.msra.mxu0 0.0
      %3102 = vmatprep.subr.mxu0 0.0
      %3103 = vmatpush2.xpose.msra.mxu0 0.0
      %3104 = vmatprep.subr.mxu0 0.0
      %3105 = vmatpush2.xpose.msra.mxu0 0.0
      %3106 = vmatprep.subr.mxu0 0.0
      %3107 = vmatpush2.xpose.msra.mxu0 0.0
      %3108 = vmatprep.mubr.f32.mxu0 0.0
      %3109 = vmatmul.mubr.f32.gmra.mxu0 %v3040
      %v3110 = vpop.f32.mrf.mxu0
      %v3111 = vadd.f32 0.0, %v3110
      %v3112 = vpop.f32.mrf.mxu0
      %3113 = vdwg.mxu0
      %3114 = vrot.lane.b32.xlu0 %v2705, 120
      %v3115 = vpop.permute.xlu0 %3114
      %3116 = vrot.lane.b32.xlu0 %v2701, 88
      %v3117 = vpop.permute.xlu0 %3116
      %v3118 = vsel %vm884, %v3115, 0
      %v3120 = vsel %vm884, %v3117, 0
      %3122 = vmatprep.subr.mxu0 0.0
      %3123 = vmatpush1.xpose.msra.mxu0 0.0
      %3124 = vmatprep.subr.mxu0 0.0
      %3125 = vmatpush1.xpose.msra.mxu0 0.0
      %3126 = vmatprep.subr.mxu0 0.0
      %3127 = vmatpush1.xpose.msra.mxu0 0.0
      %3128 = vmatprep.subr.mxu0 0.0
      %3129 = vmatpush1.xpose.msra.mxu0 0.0
      %3130 = vmatprep.subr.mxu0 0.0
      %3131 = vmatpush1.xpose.msra.mxu0 0.0
      %3132 = vmatprep.subr.mxu0 0.0
      %3133 = vmatpush1.xpose.msra.mxu0 0.0
      %3134 = vmatprep.subr.mxu0 0.0
      %3135 = vmatpush1.xpose.msra.mxu0 0.0
      %3136 = vmatprep.subr.mxu0 0.0
      %3137 = vmatpush1.xpose.msra.mxu0 0.0
      %3138 = vmatprep.subr.mxu0 0.0
      %3139 = vmatpush1.xpose.msra.mxu0 0.0
      %3140 = vmatprep.subr.mxu0 0.0
      %3141 = vmatpush1.xpose.msra.mxu0 0.0
      %3142 = vmatprep.subr.mxu0 0.0
      %3143 = vmatpush1.xpose.msra.mxu0 0.0
      %3144 = vmatprep.subr.mxu0 0.0
      %3145 = vmatpush1.xpose.msra.mxu0 0.0
      %3146 = vmatprep.subr.mxu0 0.0
      %3147 = vmatpush1.xpose.msra.mxu0 0.0
      %3148 = vmatprep.subr.mxu0 0.0
      %3149 = vmatpush1.xpose.msra.mxu0 0.0
      %3150 = vmatprep.subr.mxu0 0.0
      %3151 = vmatpush1.xpose.msra.mxu0 0.0
      %3152 = vmatprep.subr.mxu0 0.0
      %3153 = vmatpush1.xpose.msra.mxu0 %v3120
      %3154 = vmatprep.subr.mxu0 0.0
      %3155 = vmatpush2.xpose.msra.mxu0 0.0
      %3156 = vmatprep.subr.mxu0 0.0
      %3157 = vmatpush2.xpose.msra.mxu0 0.0
      %3158 = vmatprep.subr.mxu0 0.0
      %3159 = vmatpush2.xpose.msra.mxu0 0.0
      %3160 = vmatprep.subr.mxu0 0.0
      %3161 = vmatpush2.xpose.msra.mxu0 0.0
      %3162 = vmatprep.subr.mxu0 0.0
      %3163 = vmatpush2.xpose.msra.mxu0 0.0
      %3164 = vmatprep.subr.mxu0 0.0
      %3165 = vmatpush2.xpose.msra.mxu0 0.0
      %3166 = vmatprep.subr.mxu0 0.0
      %3167 = vmatpush2.xpose.msra.mxu0 0.0
      %3168 = vmatprep.subr.mxu0 0.0
      %3169 = vmatpush2.xpose.msra.mxu0 0.0
      %3170 = vmatprep.subr.mxu0 0.0
      %3171 = vmatpush2.xpose.msra.mxu0 0.0
      %3172 = vmatprep.subr.mxu0 0.0
      %3173 = vmatpush2.xpose.msra.mxu0 0.0
      %3174 = vmatprep.subr.mxu0 0.0
      %3175 = vmatpush2.xpose.msra.mxu0 0.0
      %3176 = vmatprep.subr.mxu0 0.0
      %3177 = vmatpush2.xpose.msra.mxu0 0.0
      %3178 = vmatprep.subr.mxu0 0.0
      %3179 = vmatpush2.xpose.msra.mxu0 0.0
      %3180 = vmatprep.subr.mxu0 0.0
      %3181 = vmatpush2.xpose.msra.mxu0 0.0
      %3182 = vmatprep.subr.mxu0 0.0
      %3183 = vmatpush2.xpose.msra.mxu0 0.0
      %3184 = vmatprep.subr.mxu0 0.0
      %3185 = vmatpush2.xpose.msra.mxu0 0.0
      %3186 = vmatprep.mubr.f32.mxu0 0.0
      %3187 = vmatmul.mubr.f32.gmra.mxu0 %v3118
      %v3188 = vpop.f32.mrf.mxu0
      %v3189 = vadd.f32 0.0, %v3188
      %v3190 = vpop.f32.mrf.mxu0
      %3191 = vdwg.mxu0
      %v3192 = vsel %vm884, %v3111, -inf
      %3193 = vmax.xlane.f32.xlu0 %v3192
      %v3194 = vpop.xlane.xlu0 %3193
      %v3195 = vsel %vm884, %v3189, -inf
      %3196 = vmax.xlane.f32.xlu0 %v3195
      %v3197 = vpop.xlane.xlu0 %3196
      %v3198 = vsub.f32 %v3111, %v3194
      %v3199 = vsub.f32 %v3189, %v3197
      %v3200 = vmul.f32 %v3198, 1.442695
      %v3201 = vpow.pop %v3200
      %v3202 = vmul.f32 %v3199, 1.442695
      %v3203 = vpow.pop %v3202
      %v3204 = vsel %vm884, %v3201, 0.0
      %3205 = vadd.xlane.f32.xlu0 %v3204
      %v3206 = vpop.xlane.xlu0 %3205
      %v3207 = vsel %vm884, %v3203, 0.0
      %3208 = vadd.xlane.f32.xlu0 %v3207
      %v3209 = vpop.xlane.xlu0 %3208
      %v3210 = vrcp.pop %v3206
      %v3211 = vrcp.pop %v3209
      %v3212 = vmul.f32 %v3201, %v3210
      %v3213 = vmul.f32 %v3203, %v3211
      %3214 = vrot.lane.b32.xlu0 %v2696, 56
      %v3215 = vpop.permute.xlu0 %3214
      %v3218 = vsel %vm884, %v3212, 0
      %3220 = vmatprep.subr.mxu0 0.0
      %3221 = vmatpush1.msra.mxu0 0.0
      %3222 = vmatprep.subr.mxu0 0.0
      %3223 = vmatpush1.msra.mxu0 0.0
      %3224 = vmatprep.subr.mxu0 0.0
      %3225 = vmatpush1.msra.mxu0 0.0
      %3226 = vmatprep.subr.mxu0 0.0
      %3227 = vmatpush1.msra.mxu0 0.0
      %3228 = vmatprep.subr.mxu0 0.0
      %3229 = vmatpush1.msra.mxu0 0.0
      %3230 = vmatprep.subr.mxu0 0.0
      %3231 = vmatpush1.msra.mxu0 0.0
      %3232 = vmatprep.subr.mxu0 0.0
      %3233 = vmatpush1.msra.mxu0 0.0
      %3234 = vmatprep.subr.mxu0 0.0
      %3235 = vmatpush1.msra.mxu0 0.0
      %3236 = vmatprep.subr.mxu0 0.0
      %3237 = vmatpush1.msra.mxu0 0.0
      %3238 = vmatprep.subr.mxu0 0.0
      %3239 = vmatpush1.msra.mxu0 0.0
      %3240 = vmatprep.subr.mxu0 0.0
      %3241 = vmatpush1.msra.mxu0 0.0
      %3242 = vmatprep.subr.mxu0 0.0
      %3243 = vmatpush1.msra.mxu0 0.0
      %3244 = vmatprep.subr.mxu0 0.0
      %3245 = vmatpush1.msra.mxu0 0.0
      %3246 = vmatprep.subr.mxu0 0.0
      %3247 = vmatpush1.msra.mxu0 0.0
      %3248 = vmatprep.subr.mxu0 0.0
      %3249 = vmatpush1.msra.mxu0 0.0
      %3250 = vmatprep.subr.mxu0 0.0
      %3251 = vmatpush1.msra.mxu0 %v3215
      %3252 = vmatprep.subr.mxu0 0.0
      %3253 = vmatpush2.msra.mxu0 0.0
      %3254 = vmatprep.subr.mxu0 0.0
      %3255 = vmatpush2.msra.mxu0 0.0
      %3256 = vmatprep.subr.mxu0 0.0
      %3257 = vmatpush2.msra.mxu0 0.0
      %3258 = vmatprep.subr.mxu0 0.0
      %3259 = vmatpush2.msra.mxu0 0.0
      %3260 = vmatprep.subr.mxu0 0.0
      %3261 = vmatpush2.msra.mxu0 0.0
      %3262 = vmatprep.subr.mxu0 0.0
      %3263 = vmatpush2.msra.mxu0 0.0
      %3264 = vmatprep.subr.mxu0 0.0
      %3265 = vmatpush2.msra.mxu0 0.0
      %3266 = vmatprep.subr.mxu0 0.0
      %3267 = vmatpush2.msra.mxu0 0.0
      %3268 = vmatprep.subr.mxu0 0.0
      %3269 = vmatpush2.msra.mxu0 0.0
      %3270 = vmatprep.subr.mxu0 0.0
      %3271 = vmatpush2.msra.mxu0 0.0
      %3272 = vmatprep.subr.mxu0 0.0
      %3273 = vmatpush2.msra.mxu0 0.0
      %3274 = vmatprep.subr.mxu0 0.0
      %3275 = vmatpush2.msra.mxu0 0.0
      %3276 = vmatprep.subr.mxu0 0.0
      %3277 = vmatpush2.msra.mxu0 0.0
      %3278 = vmatprep.subr.mxu0 0.0
      %3279 = vmatpush2.msra.mxu0 0.0
      %3280 = vmatprep.subr.mxu0 0.0
      %3281 = vmatpush2.msra.mxu0 0.0
      %3282 = vmatprep.subr.mxu0 0.0
      %3283 = vmatpush2.msra.mxu0 0.0
      %3284 = vmatprep.mubr.f32.mxu0 0.0
      %3285 = vmatmul.mubr.f32.gmra.mxu0 %v3218
      %v3286 = vpop.f32.mrf.mxu0
      %v3287 = vadd.f32 0.0, %v3286
      %v3288 = vpop.f32.mrf.mxu0
      %3289 = vdwg.mxu0
      %3290 = vrot.lane.b32.xlu0 %v2701, 56
      %v3291 = vpop.permute.xlu0 %3290
      %v3294 = vsel %vm884, %v3213, 0
      %3296 = vmatprep.subr.mxu0 0.0
      %3297 = vmatpush1.msra.mxu0 0.0
      %3298 = vmatprep.subr.mxu0 0.0
      %3299 = vmatpush1.msra.mxu0 0.0
      %3300 = vmatprep.subr.mxu0 0.0
      %3301 = vmatpush1.msra.mxu0 0.0
      %3302 = vmatprep.subr.mxu0 0.0
      %3303 = vmatpush1.msra.mxu0 0.0
      %3304 = vmatprep.subr.mxu0 0.0
      %3305 = vmatpush1.msra.mxu0 0.0
      %3306 = vmatprep.subr.mxu0 0.0
      %3307 = vmatpush1.msra.mxu0 0.0
      %3308 = vmatprep.subr.mxu0 0.0
      %3309 = vmatpush1.msra.mxu0 0.0
      %3310 = vmatprep.subr.mxu0 0.0
      %3311 = vmatpush1.msra.mxu0 0.0
      %3312 = vmatprep.subr.mxu0 0.0
      %3313 = vmatpush1.msra.mxu0 0.0
      %3314 = vmatprep.subr.mxu0 0.0
      %3315 = vmatpush1.msra.mxu0 0.0
      %3316 = vmatprep.subr.mxu0 0.0
      %3317 = vmatpush1.msra.mxu0 0.0
      %3318 = vmatprep.subr.mxu0 0.0
      %3319 = vmatpush1.msra.mxu0 0.0
      %3320 = vmatprep.subr.mxu0 0.0
      %3321 = vmatpush1.msra.mxu0 0.0
      %3322 = vmatprep.subr.mxu0 0.0
      %3323 = vmatpush1.msra.mxu0 0.0
      %3324 = vmatprep.subr.mxu0 0.0
      %3325 = vmatpush1.msra.mxu0 0.0
      %3326 = vmatprep.subr.mxu0 0.0
      %3327 = vmatpush1.msra.mxu0 %v3291
      %3328 = vmatprep.subr.mxu0 0.0
      %3329 = vmatpush2.msra.mxu0 0.0
      %3330 = vmatprep.subr.mxu0 0.0
      %3331 = vmatpush2.msra.mxu0 0.0
      %3332 = vmatprep.subr.mxu0 0.0
      %3333 = vmatpush2.msra.mxu0 0.0
      %3334 = vmatprep.subr.mxu0 0.0
      %3335 = vmatpush2.msra.mxu0 0.0
      %3336 = vmatprep.subr.mxu0 0.0
      %3337 = vmatpush2.msra.mxu0 0.0
      %3338 = vmatprep.subr.mxu0 0.0
      %3339 = vmatpush2.msra.mxu0 0.0
      %3340 = vmatprep.subr.mxu0 0.0
      %3341 = vmatpush2.msra.mxu0 0.0
      %3342 = vmatprep.subr.mxu0 0.0
      %3343 = vmatpush2.msra.mxu0 0.0
      %3344 = vmatprep.subr.mxu0 0.0
      %3345 = vmatpush2.msra.mxu0 0.0
      %3346 = vmatprep.subr.mxu0 0.0
      %3347 = vmatpush2.msra.mxu0 0.0
      %3348 = vmatprep.subr.mxu0 0.0
      %3349 = vmatpush2.msra.mxu0 0.0
      %3350 = vmatprep.subr.mxu0 0.0
      %3351 = vmatpush2.msra.mxu0 0.0
      %3352 = vmatprep.subr.mxu0 0.0
      %3353 = vmatpush2.msra.mxu0 0.0
      %3354 = vmatprep.subr.mxu0 0.0
      %3355 = vmatpush2.msra.mxu0 0.0
      %3356 = vmatprep.subr.mxu0 0.0
      %3357 = vmatpush2.msra.mxu0 0.0
      %3358 = vmatprep.subr.mxu0 0.0
      %3359 = vmatpush2.msra.mxu0 0.0
      %3360 = vmatprep.mubr.f32.mxu0 0.0
      %3361 = vmatmul.mubr.f32.gmra.mxu0 %v3294
      %v3362 = vpop.f32.mrf.mxu0
      %v3363 = vadd.f32 0.0, %v3362
      %v3364 = vpop.f32.mrf.mxu0
      %3365 = vdwg.mxu0
      %3366 = vrot.lane.b32.xlu0 %v2704, 112
      %v3367 = vpop.permute.xlu0 %3366
      %3368 = vrot.lane.b32.xlu0 %v2696, 80
      %v3369 = vpop.permute.xlu0 %3368
      %v3370 = vsel %vm884, %v3367, 0
      %v3372 = vsel %vm884, %v3369, 0
      %3374 = vmatprep.subr.mxu0 0.0
      %3375 = vmatpush1.xpose.msra.mxu0 0.0
      %3376 = vmatprep.subr.mxu0 0.0
      %3377 = vmatpush1.xpose.msra.mxu0 0.0
      %3378 = vmatprep.subr.mxu0 0.0
      %3379 = vmatpush1.xpose.msra.mxu0 0.0
      %3380 = vmatprep.subr.mxu0 0.0
      %3381 = vmatpush1.xpose.msra.mxu0 0.0
      %3382 = vmatprep.subr.mxu0 0.0
      %3383 = vmatpush1.xpose.msra.mxu0 0.0
      %3384 = vmatprep.subr.mxu0 0.0
      %3385 = vmatpush1.xpose.msra.mxu0 0.0
      %3386 = vmatprep.subr.mxu0 0.0
      %3387 = vmatpush1.xpose.msra.mxu0 0.0
      %3388 = vmatprep.subr.mxu0 0.0
      %3389 = vmatpush1.xpose.msra.mxu0 0.0
      %3390 = vmatprep.subr.mxu0 0.0
      %3391 = vmatpush1.xpose.msra.mxu0 0.0
      %3392 = vmatprep.subr.mxu0 0.0
      %3393 = vmatpush1.xpose.msra.mxu0 0.0
      %3394 = vmatprep.subr.mxu0 0.0
      %3395 = vmatpush1.xpose.msra.mxu0 0.0
      %3396 = vmatprep.subr.mxu0 0.0
      %3397 = vmatpush1.xpose.msra.mxu0 0.0
      %3398 = vmatprep.subr.mxu0 0.0
      %3399 = vmatpush1.xpose.msra.mxu0 0.0
      %3400 = vmatprep.subr.mxu0 0.0
      %3401 = vmatpush1.xpose.msra.mxu0 0.0
      %3402 = vmatprep.subr.mxu0 0.0
      %3403 = vmatpush1.xpose.msra.mxu0 0.0
      %3404 = vmatprep.subr.mxu0 0.0
      %3405 = vmatpush1.xpose.msra.mxu0 %v3372
      %3406 = vmatprep.subr.mxu0 0.0
      %3407 = vmatpush2.xpose.msra.mxu0 0.0
      %3408 = vmatprep.subr.mxu0 0.0
      %3409 = vmatpush2.xpose.msra.mxu0 0.0
      %3410 = vmatprep.subr.mxu0 0.0
      %3411 = vmatpush2.xpose.msra.mxu0 0.0
      %3412 = vmatprep.subr.mxu0 0.0
      %3413 = vmatpush2.xpose.msra.mxu0 0.0
      %3414 = vmatprep.subr.mxu0 0.0
      %3415 = vmatpush2.xpose.msra.mxu0 0.0
      %3416 = vmatprep.subr.mxu0 0.0
      %3417 = vmatpush2.xpose.msra.mxu0 0.0
      %3418 = vmatprep.subr.mxu0 0.0
      %3419 = vmatpush2.xpose.msra.mxu0 0.0
      %3420 = vmatprep.subr.mxu0 0.0
      %3421 = vmatpush2.xpose.msra.mxu0 0.0
      %3422 = vmatprep.subr.mxu0 0.0
      %3423 = vmatpush2.xpose.msra.mxu0 0.0
      %3424 = vmatprep.subr.mxu0 0.0
      %3425 = vmatpush2.xpose.msra.mxu0 0.0
      %3426 = vmatprep.subr.mxu0 0.0
      %3427 = vmatpush2.xpose.msra.mxu0 0.0
      %3428 = vmatprep.subr.mxu0 0.0
      %3429 = vmatpush2.xpose.msra.mxu0 0.0
      %3430 = vmatprep.subr.mxu0 0.0
      %3431 = vmatpush2.xpose.msra.mxu0 0.0
      %3432 = vmatprep.subr.mxu0 0.0
      %3433 = vmatpush2.xpose.msra.mxu0 0.0
      %3434 = vmatprep.subr.mxu0 0.0
      %3435 = vmatpush2.xpose.msra.mxu0 0.0
      %3436 = vmatprep.subr.mxu0 0.0
      %3437 = vmatpush2.xpose.msra.mxu0 0.0
      %3438 = vmatprep.mubr.f32.mxu0 0.0
      %3439 = vmatmul.mubr.f32.gmra.mxu0 %v3370
      %v3440 = vpop.f32.mrf.mxu0
      %v3441 = vadd.f32 0.0, %v3440
      %v3442 = vpop.f32.mrf.mxu0
      %3443 = vdwg.mxu0
      %3444 = vrot.lane.b32.xlu0 %v2705, 112
      %v3445 = vpop.permute.xlu0 %3444
      %3446 = vrot.lane.b32.xlu0 %v2701, 80
      %v3447 = vpop.permute.xlu0 %3446
      %v3448 = vsel %vm884, %v3445, 0
      %v3450 = vsel %vm884, %v3447, 0
      %3452 = vmatprep.subr.mxu0 0.0
      %3453 = vmatpush1.xpose.msra.mxu0 0.0
      %3454 = vmatprep.subr.mxu0 0.0
      %3455 = vmatpush1.xpose.msra.mxu0 0.0
      %3456 = vmatprep.subr.mxu0 0.0
      %3457 = vmatpush1.xpose.msra.mxu0 0.0
      %3458 = vmatprep.subr.mxu0 0.0
      %3459 = vmatpush1.xpose.msra.mxu0 0.0
      %3460 = vmatprep.subr.mxu0 0.0
      %3461 = vmatpush1.xpose.msra.mxu0 0.0
      %3462 = vmatprep.subr.mxu0 0.0
      %3463 = vmatpush1.xpose.msra.mxu0 0.0
      %3464 = vmatprep.subr.mxu0 0.0
      %3465 = vmatpush1.xpose.msra.mxu0 0.0
      %3466 = vmatprep.subr.mxu0 0.0
      %3467 = vmatpush1.xpose.msra.mxu0 0.0
      %3468 = vmatprep.subr.mxu0 0.0
      %3469 = vmatpush1.xpose.msra.mxu0 0.0
      %3470 = vmatprep.subr.mxu0 0.0
      %3471 = vmatpush1.xpose.msra.mxu0 0.0
      %3472 = vmatprep.subr.mxu0 0.0
      %3473 = vmatpush1.xpose.msra.mxu0 0.0
      %3474 = vmatprep.subr.mxu0 0.0
      %3475 = vmatpush1.xpose.msra.mxu0 0.0
      %3476 = vmatprep.subr.mxu0 0.0
      %3477 = vmatpush1.xpose.msra.mxu0 0.0
      %3478 = vmatprep.subr.mxu0 0.0
      %3479 = vmatpush1.xpose.msra.mxu0 0.0
      %3480 = vmatprep.subr.mxu0 0.0
      %3481 = vmatpush1.xpose.msra.mxu0 0.0
      %3482 = vmatprep.subr.mxu0 0.0
      %3483 = vmatpush1.xpose.msra.mxu0 %v3450
      %3484 = vmatprep.subr.mxu0 0.0
      %3485 = vmatpush2.xpose.msra.mxu0 0.0
      %3486 = vmatprep.subr.mxu0 0.0
      %3487 = vmatpush2.xpose.msra.mxu0 0.0
      %3488 = vmatprep.subr.mxu0 0.0
      %3489 = vmatpush2.xpose.msra.mxu0 0.0
      %3490 = vmatprep.subr.mxu0 0.0
      %3491 = vmatpush2.xpose.msra.mxu0 0.0
      %3492 = vmatprep.subr.mxu0 0.0
      %3493 = vmatpush2.xpose.msra.mxu0 0.0
      %3494 = vmatprep.subr.mxu0 0.0
      %3495 = vmatpush2.xpose.msra.mxu0 0.0
      %3496 = vmatprep.subr.mxu0 0.0
      %3497 = vmatpush2.xpose.msra.mxu0 0.0
      %3498 = vmatprep.subr.mxu0 0.0
      %3499 = vmatpush2.xpose.msra.mxu0 0.0
      %3500 = vmatprep.subr.mxu0 0.0
      %3501 = vmatpush2.xpose.msra.mxu0 0.0
      %3502 = vmatprep.subr.mxu0 0.0
      %3503 = vmatpush2.xpose.msra.mxu0 0.0
      %3504 = vmatprep.subr.mxu0 0.0
      %3505 = vmatpush2.xpose.msra.mxu0 0.0
      %3506 = vmatprep.subr.mxu0 0.0
      %3507 = vmatpush2.xpose.msra.mxu0 0.0
      %3508 = vmatprep.subr.mxu0 0.0
      %3509 = vmatpush2.xpose.msra.mxu0 0.0
      %3510 = vmatprep.subr.mxu0 0.0
      %3511 = vmatpush2.xpose.msra.mxu0 0.0
      %3512 = vmatprep.subr.mxu0 0.0
      %3513 = vmatpush2.xpose.msra.mxu0 0.0
      %3514 = vmatprep.subr.mxu0 0.0
      %3515 = vmatpush2.xpose.msra.mxu0 0.0
      %3516 = vmatprep.mubr.f32.mxu0 0.0
      %3517 = vmatmul.mubr.f32.gmra.mxu0 %v3448
      %v3518 = vpop.f32.mrf.mxu0
      %v3519 = vadd.f32 0.0, %v3518
      %v3520 = vpop.f32.mrf.mxu0
      %3521 = vdwg.mxu0
      %v3522 = vsel %vm884, %v3441, -inf
      %3523 = vmax.xlane.f32.xlu0 %v3522
      %v3524 = vpop.xlane.xlu0 %3523
      %v3525 = vsel %vm884, %v3519, -inf
      %3526 = vmax.xlane.f32.xlu0 %v3525
      %v3527 = vpop.xlane.xlu0 %3526
      %v3528 = vsub.f32 %v3441, %v3524
      %v3529 = vsub.f32 %v3519, %v3527
      %v3530 = vmul.f32 %v3528, 1.442695
      %v3531 = vpow.pop %v3530
      %v3532 = vmul.f32 %v3529, 1.442695
      %v3533 = vpow.pop %v3532
      %v3534 = vsel %vm884, %v3531, 0.0
      %3535 = vadd.xlane.f32.xlu0 %v3534
      %v3536 = vpop.xlane.xlu0 %3535
      %v3537 = vsel %vm884, %v3533, 0.0
      %3538 = vadd.xlane.f32.xlu0 %v3537
      %v3539 = vpop.xlane.xlu0 %3538
      %v3540 = vrcp.pop %v3536
      %v3541 = vrcp.pop %v3539
      %v3542 = vmul.f32 %v3531, %v3540
      %v3543 = vmul.f32 %v3533, %v3541
      %3544 = vrot.lane.b32.xlu0 %v2696, 48
      %v3545 = vpop.permute.xlu0 %3544
      %v3548 = vsel %vm884, %v3542, 0
      %3550 = vmatprep.subr.mxu0 0.0
      %3551 = vmatpush1.msra.mxu0 0.0
      %3552 = vmatprep.subr.mxu0 0.0
      %3553 = vmatpush1.msra.mxu0 0.0
      %3554 = vmatprep.subr.mxu0 0.0
      %3555 = vmatpush1.msra.mxu0 0.0
      %3556 = vmatprep.subr.mxu0 0.0
      %3557 = vmatpush1.msra.mxu0 0.0
      %3558 = vmatprep.subr.mxu0 0.0
      %3559 = vmatpush1.msra.mxu0 0.0
      %3560 = vmatprep.subr.mxu0 0.0
      %3561 = vmatpush1.msra.mxu0 0.0
      %3562 = vmatprep.subr.mxu0 0.0
      %3563 = vmatpush1.msra.mxu0 0.0
      %3564 = vmatprep.subr.mxu0 0.0
      %3565 = vmatpush1.msra.mxu0 0.0
      %3566 = vmatprep.subr.mxu0 0.0
      %3567 = vmatpush1.msra.mxu0 0.0
      %3568 = vmatprep.subr.mxu0 0.0
      %3569 = vmatpush1.msra.mxu0 0.0
      %3570 = vmatprep.subr.mxu0 0.0
      %3571 = vmatpush1.msra.mxu0 0.0
      %3572 = vmatprep.subr.mxu0 0.0
      %3573 = vmatpush1.msra.mxu0 0.0
      %3574 = vmatprep.subr.mxu0 0.0
      %3575 = vmatpush1.msra.mxu0 0.0
      %3576 = vmatprep.subr.mxu0 0.0
      %3577 = vmatpush1.msra.mxu0 0.0
      %3578 = vmatprep.subr.mxu0 0.0
      %3579 = vmatpush1.msra.mxu0 0.0
      %3580 = vmatprep.subr.mxu0 0.0
      %3581 = vmatpush1.msra.mxu0 %v3545
      %3582 = vmatprep.subr.mxu0 0.0
      %3583 = vmatpush2.msra.mxu0 0.0
      %3584 = vmatprep.subr.mxu0 0.0
      %3585 = vmatpush2.msra.mxu0 0.0
      %3586 = vmatprep.subr.mxu0 0.0
      %3587 = vmatpush2.msra.mxu0 0.0
      %3588 = vmatprep.subr.mxu0 0.0
      %3589 = vmatpush2.msra.mxu0 0.0
      %3590 = vmatprep.subr.mxu0 0.0
      %3591 = vmatpush2.msra.mxu0 0.0
      %3592 = vmatprep.subr.mxu0 0.0
      %3593 = vmatpush2.msra.mxu0 0.0
      %3594 = vmatprep.subr.mxu0 0.0
      %3595 = vmatpush2.msra.mxu0 0.0
      %3596 = vmatprep.subr.mxu0 0.0
      %3597 = vmatpush2.msra.mxu0 0.0
      %3598 = vmatprep.subr.mxu0 0.0
      %3599 = vmatpush2.msra.mxu0 0.0
      %3600 = vmatprep.subr.mxu0 0.0
      %3601 = vmatpush2.msra.mxu0 0.0
      %3602 = vmatprep.subr.mxu0 0.0
      %3603 = vmatpush2.msra.mxu0 0.0
      %3604 = vmatprep.subr.mxu0 0.0
      %3605 = vmatpush2.msra.mxu0 0.0
      %3606 = vmatprep.subr.mxu0 0.0
      %3607 = vmatpush2.msra.mxu0 0.0
      %3608 = vmatprep.subr.mxu0 0.0
      %3609 = vmatpush2.msra.mxu0 0.0
      %3610 = vmatprep.subr.mxu0 0.0
      %3611 = vmatpush2.msra.mxu0 0.0
      %3612 = vmatprep.subr.mxu0 0.0
      %3613 = vmatpush2.msra.mxu0 0.0
      %3614 = vmatprep.mubr.f32.mxu0 0.0
      %3615 = vmatmul.mubr.f32.gmra.mxu0 %v3548
      %v3616 = vpop.f32.mrf.mxu0
      %v3617 = vadd.f32 0.0, %v3616
      %v3618 = vpop.f32.mrf.mxu0
      %3619 = vdwg.mxu0
      %3620 = vrot.lane.b32.xlu0 %v2701, 48
      %v3621 = vpop.permute.xlu0 %3620
      %v3624 = vsel %vm884, %v3543, 0
      %3626 = vmatprep.subr.mxu0 0.0
      %3627 = vmatpush1.msra.mxu0 0.0
      %3628 = vmatprep.subr.mxu0 0.0
      %3629 = vmatpush1.msra.mxu0 0.0
      %3630 = vmatprep.subr.mxu0 0.0
      %3631 = vmatpush1.msra.mxu0 0.0
      %3632 = vmatprep.subr.mxu0 0.0
      %3633 = vmatpush1.msra.mxu0 0.0
      %3634 = vmatprep.subr.mxu0 0.0
      %3635 = vmatpush1.msra.mxu0 0.0
      %3636 = vmatprep.subr.mxu0 0.0
      %3637 = vmatpush1.msra.mxu0 0.0
      %3638 = vmatprep.subr.mxu0 0.0
      %3639 = vmatpush1.msra.mxu0 0.0
      %3640 = vmatprep.subr.mxu0 0.0
      %3641 = vmatpush1.msra.mxu0 0.0
      %3642 = vmatprep.subr.mxu0 0.0
      %3643 = vmatpush1.msra.mxu0 0.0
      %3644 = vmatprep.subr.mxu0 0.0
      %3645 = vmatpush1.msra.mxu0 0.0
      %3646 = vmatprep.subr.mxu0 0.0
      %3647 = vmatpush1.msra.mxu0 0.0
      %3648 = vmatprep.subr.mxu0 0.0
      %3649 = vmatpush1.msra.mxu0 0.0
      %3650 = vmatprep.subr.mxu0 0.0
      %3651 = vmatpush1.msra.mxu0 0.0
      %3652 = vmatprep.subr.mxu0 0.0
      %3653 = vmatpush1.msra.mxu0 0.0
      %3654 = vmatprep.subr.mxu0 0.0
      %3655 = vmatpush1.msra.mxu0 0.0
      %3656 = vmatprep.subr.mxu0 0.0
      %3657 = vmatpush1.msra.mxu0 %v3621
      %3658 = vmatprep.subr.mxu0 0.0
      %3659 = vmatpush2.msra.mxu0 0.0
      %3660 = vmatprep.subr.mxu0 0.0
      %3661 = vmatpush2.msra.mxu0 0.0
      %3662 = vmatprep.subr.mxu0 0.0
      %3663 = vmatpush2.msra.mxu0 0.0
      %3664 = vmatprep.subr.mxu0 0.0
      %3665 = vmatpush2.msra.mxu0 0.0
      %3666 = vmatprep.subr.mxu0 0.0
      %3667 = vmatpush2.msra.mxu0 0.0
      %3668 = vmatprep.subr.mxu0 0.0
      %3669 = vmatpush2.msra.mxu0 0.0
      %3670 = vmatprep.subr.mxu0 0.0
      %3671 = vmatpush2.msra.mxu0 0.0
      %3672 = vmatprep.subr.mxu0 0.0
      %3673 = vmatpush2.msra.mxu0 0.0
      %3674 = vmatprep.subr.mxu0 0.0
      %3675 = vmatpush2.msra.mxu0 0.0
      %3676 = vmatprep.subr.mxu0 0.0
      %3677 = vmatpush2.msra.mxu0 0.0
      %3678 = vmatprep.subr.mxu0 0.0
      %3679 = vmatpush2.msra.mxu0 0.0
      %3680 = vmatprep.subr.mxu0 0.0
      %3681 = vmatpush2.msra.mxu0 0.0
      %3682 = vmatprep.subr.mxu0 0.0
      %3683 = vmatpush2.msra.mxu0 0.0
      %3684 = vmatprep.subr.mxu0 0.0
      %3685 = vmatpush2.msra.mxu0 0.0
      %3686 = vmatprep.subr.mxu0 0.0
      %3687 = vmatpush2.msra.mxu0 0.0
      %3688 = vmatprep.subr.mxu0 0.0
      %3689 = vmatpush2.msra.mxu0 0.0
      %3690 = vmatprep.mubr.f32.mxu0 0.0
      %3691 = vmatmul.mubr.f32.gmra.mxu0 %v3624
      %v3692 = vpop.f32.mrf.mxu0
      %v3693 = vadd.f32 0.0, %v3692
      %v3694 = vpop.f32.mrf.mxu0
      %3695 = vdwg.mxu0
      %3696 = vrot.lane.b32.xlu0 %v2704, 104
      %v3697 = vpop.permute.xlu0 %3696
      %3698 = vrot.lane.b32.xlu0 %v2696, 72
      %v3699 = vpop.permute.xlu0 %3698
      %v3700 = vsel %vm884, %v3697, 0
      %v3702 = vsel %vm884, %v3699, 0
      %3704 = vmatprep.subr.mxu0 0.0
      %3705 = vmatpush1.xpose.msra.mxu0 0.0
      %3706 = vmatprep.subr.mxu0 0.0
      %3707 = vmatpush1.xpose.msra.mxu0 0.0
      %3708 = vmatprep.subr.mxu0 0.0
      %3709 = vmatpush1.xpose.msra.mxu0 0.0
      %3710 = vmatprep.subr.mxu0 0.0
      %3711 = vmatpush1.xpose.msra.mxu0 0.0
      %3712 = vmatprep.subr.mxu0 0.0
      %3713 = vmatpush1.xpose.msra.mxu0 0.0
      %3714 = vmatprep.subr.mxu0 0.0
      %3715 = vmatpush1.xpose.msra.mxu0 0.0
      %3716 = vmatprep.subr.mxu0 0.0
      %3717 = vmatpush1.xpose.msra.mxu0 0.0
      %3718 = vmatprep.subr.mxu0 0.0
      %3719 = vmatpush1.xpose.msra.mxu0 0.0
      %3720 = vmatprep.subr.mxu0 0.0
      %3721 = vmatpush1.xpose.msra.mxu0 0.0
      %3722 = vmatprep.subr.mxu0 0.0
      %3723 = vmatpush1.xpose.msra.mxu0 0.0
      %3724 = vmatprep.subr.mxu0 0.0
      %3725 = vmatpush1.xpose.msra.mxu0 0.0
      %3726 = vmatprep.subr.mxu0 0.0
      %3727 = vmatpush1.xpose.msra.mxu0 0.0
      %3728 = vmatprep.subr.mxu0 0.0
      %3729 = vmatpush1.xpose.msra.mxu0 0.0
      %3730 = vmatprep.subr.mxu0 0.0
      %3731 = vmatpush1.xpose.msra.mxu0 0.0
      %3732 = vmatprep.subr.mxu0 0.0
      %3733 = vmatpush1.xpose.msra.mxu0 0.0
      %3734 = vmatprep.subr.mxu0 0.0
      %3735 = vmatpush1.xpose.msra.mxu0 %v3702
      %3736 = vmatprep.subr.mxu0 0.0
      %3737 = vmatpush2.xpose.msra.mxu0 0.0
      %3738 = vmatprep.subr.mxu0 0.0
      %3739 = vmatpush2.xpose.msra.mxu0 0.0
      %3740 = vmatprep.subr.mxu0 0.0
      %3741 = vmatpush2.xpose.msra.mxu0 0.0
      %3742 = vmatprep.subr.mxu0 0.0
      %3743 = vmatpush2.xpose.msra.mxu0 0.0
      %3744 = vmatprep.subr.mxu0 0.0
      %3745 = vmatpush2.xpose.msra.mxu0 0.0
      %3746 = vmatprep.subr.mxu0 0.0
      %3747 = vmatpush2.xpose.msra.mxu0 0.0
      %3748 = vmatprep.subr.mxu0 0.0
      %3749 = vmatpush2.xpose.msra.mxu0 0.0
      %3750 = vmatprep.subr.mxu0 0.0
      %3751 = vmatpush2.xpose.msra.mxu0 0.0
      %3752 = vmatprep.subr.mxu0 0.0
      %3753 = vmatpush2.xpose.msra.mxu0 0.0
      %3754 = vmatprep.subr.mxu0 0.0
      %3755 = vmatpush2.xpose.msra.mxu0 0.0
      %3756 = vmatprep.subr.mxu0 0.0
      %3757 = vmatpush2.xpose.msra.mxu0 0.0
      %3758 = vmatprep.subr.mxu0 0.0
      %3759 = vmatpush2.xpose.msra.mxu0 0.0
      %3760 = vmatprep.subr.mxu0 0.0
      %3761 = vmatpush2.xpose.msra.mxu0 0.0
      %3762 = vmatprep.subr.mxu0 0.0
      %3763 = vmatpush2.xpose.msra.mxu0 0.0
      %3764 = vmatprep.subr.mxu0 0.0
      %3765 = vmatpush2.xpose.msra.mxu0 0.0
      %3766 = vmatprep.subr.mxu0 0.0
      %3767 = vmatpush2.xpose.msra.mxu0 0.0
      %3768 = vmatprep.mubr.f32.mxu0 0.0
      %3769 = vmatmul.mubr.f32.gmra.mxu0 %v3700
      %v3770 = vpop.f32.mrf.mxu0
      %v3771 = vadd.f32 0.0, %v3770
      %v3772 = vpop.f32.mrf.mxu0
      %3773 = vdwg.mxu0
      %3774 = vrot.lane.b32.xlu0 %v2705, 104
      %v3775 = vpop.permute.xlu0 %3774
      %3776 = vrot.lane.b32.xlu0 %v2701, 72
      %v3777 = vpop.permute.xlu0 %3776
      %v3778 = vsel %vm884, %v3775, 0
      %v3780 = vsel %vm884, %v3777, 0
      %3782 = vmatprep.subr.mxu0 0.0
      %3783 = vmatpush1.xpose.msra.mxu0 0.0
      %3784 = vmatprep.subr.mxu0 0.0
      %3785 = vmatpush1.xpose.msra.mxu0 0.0
      %3786 = vmatprep.subr.mxu0 0.0
      %3787 = vmatpush1.xpose.msra.mxu0 0.0
      %3788 = vmatprep.subr.mxu0 0.0
      %3789 = vmatpush1.xpose.msra.mxu0 0.0
      %3790 = vmatprep.subr.mxu0 0.0
      %3791 = vmatpush1.xpose.msra.mxu0 0.0
      %3792 = vmatprep.subr.mxu0 0.0
      %3793 = vmatpush1.xpose.msra.mxu0 0.0
      %3794 = vmatprep.subr.mxu0 0.0
      %3795 = vmatpush1.xpose.msra.mxu0 0.0
      %3796 = vmatprep.subr.mxu0 0.0
      %3797 = vmatpush1.xpose.msra.mxu0 0.0
      %3798 = vmatprep.subr.mxu0 0.0
      %3799 = vmatpush1.xpose.msra.mxu0 0.0
      %3800 = vmatprep.subr.mxu0 0.0
      %3801 = vmatpush1.xpose.msra.mxu0 0.0
      %3802 = vmatprep.subr.mxu0 0.0
      %3803 = vmatpush1.xpose.msra.mxu0 0.0
      %3804 = vmatprep.subr.mxu0 0.0
      %3805 = vmatpush1.xpose.msra.mxu0 0.0
      %3806 = vmatprep.subr.mxu0 0.0
      %3807 = vmatpush1.xpose.msra.mxu0 0.0
      %3808 = vmatprep.subr.mxu0 0.0
      %3809 = vmatpush1.xpose.msra.mxu0 0.0
      %3810 = vmatprep.subr.mxu0 0.0
      %3811 = vmatpush1.xpose.msra.mxu0 0.0
      %3812 = vmatprep.subr.mxu0 0.0
      %3813 = vmatpush1.xpose.msra.mxu0 %v3780
      %3814 = vmatprep.subr.mxu0 0.0
      %3815 = vmatpush2.xpose.msra.mxu0 0.0
      %3816 = vmatprep.subr.mxu0 0.0
      %3817 = vmatpush2.xpose.msra.mxu0 0.0
      %3818 = vmatprep.subr.mxu0 0.0
      %3819 = vmatpush2.xpose.msra.mxu0 0.0
      %3820 = vmatprep.subr.mxu0 0.0
      %3821 = vmatpush2.xpose.msra.mxu0 0.0
      %3822 = vmatprep.subr.mxu0 0.0
      %3823 = vmatpush2.xpose.msra.mxu0 0.0
      %3824 = vmatprep.subr.mxu0 0.0
      %3825 = vmatpush2.xpose.msra.mxu0 0.0
      %3826 = vmatprep.subr.mxu0 0.0
      %3827 = vmatpush2.xpose.msra.mxu0 0.0
      %3828 = vmatprep.subr.mxu0 0.0
      %3829 = vmatpush2.xpose.msra.mxu0 0.0
      %3830 = vmatprep.subr.mxu0 0.0
      %3831 = vmatpush2.xpose.msra.mxu0 0.0
      %3832 = vmatprep.subr.mxu0 0.0
      %3833 = vmatpush2.xpose.msra.mxu0 0.0
      %3834 = vmatprep.subr.mxu0 0.0
      %3835 = vmatpush2.xpose.msra.mxu0 0.0
      %3836 = vmatprep.subr.mxu0 0.0
      %3837 = vmatpush2.xpose.msra.mxu0 0.0
      %3838 = vmatprep.subr.mxu0 0.0
      %3839 = vmatpush2.xpose.msra.mxu0 0.0
      %3840 = vmatprep.subr.mxu0 0.0
      %3841 = vmatpush2.xpose.msra.mxu0 0.0
      %3842 = vmatprep.subr.mxu0 0.0
      %3843 = vmatpush2.xpose.msra.mxu0 0.0
      %3844 = vmatprep.subr.mxu0 0.0
      %3845 = vmatpush2.xpose.msra.mxu0 0.0
      %3846 = vmatprep.mubr.f32.mxu0 0.0
      %3847 = vmatmul.mubr.f32.gmra.mxu0 %v3778
      %v3848 = vpop.f32.mrf.mxu0
      %v3849 = vadd.f32 0.0, %v3848
      %v3850 = vpop.f32.mrf.mxu0
      %3851 = vdwg.mxu0
      %v3852 = vsel %vm884, %v3771, -inf
      %3853 = vmax.xlane.f32.xlu0 %v3852
      %v3854 = vpop.xlane.xlu0 %3853
      %v3855 = vsel %vm884, %v3849, -inf
      %3856 = vmax.xlane.f32.xlu0 %v3855
      %v3857 = vpop.xlane.xlu0 %3856
      %v3858 = vsub.f32 %v3771, %v3854
      %v3859 = vsub.f32 %v3849, %v3857
      %v3860 = vmul.f32 %v3858, 1.442695
      %v3861 = vpow.pop %v3860
      %v3862 = vmul.f32 %v3859, 1.442695
      %v3863 = vpow.pop %v3862
      %v3864 = vsel %vm884, %v3861, 0.0
      %3865 = vadd.xlane.f32.xlu0 %v3864
      %v3866 = vpop.xlane.xlu0 %3865
      %v3867 = vsel %vm884, %v3863, 0.0
      %3868 = vadd.xlane.f32.xlu0 %v3867
      %v3869 = vpop.xlane.xlu0 %3868
      %v3870 = vrcp.pop %v3866
      %v3871 = vrcp.pop %v3869
      %v3872 = vmul.f32 %v3861, %v3870
      %v3873 = vmul.f32 %v3863, %v3871
      %3874 = vrot.lane.b32.xlu0 %v2696, 40
      %v3875 = vpop.permute.xlu0 %3874
      %v3878 = vsel %vm884, %v3872, 0
      %3880 = vmatprep.subr.mxu0 0.0
      %3881 = vmatpush1.msra.mxu0 0.0
      %3882 = vmatprep.subr.mxu0 0.0
      %3883 = vmatpush1.msra.mxu0 0.0
      %3884 = vmatprep.subr.mxu0 0.0
      %3885 = vmatpush1.msra.mxu0 0.0
      %3886 = vmatprep.subr.mxu0 0.0
      %3887 = vmatpush1.msra.mxu0 0.0
      %3888 = vmatprep.subr.mxu0 0.0
      %3889 = vmatpush1.msra.mxu0 0.0
      %3890 = vmatprep.subr.mxu0 0.0
      %3891 = vmatpush1.msra.mxu0 0.0
      %3892 = vmatprep.subr.mxu0 0.0
      %3893 = vmatpush1.msra.mxu0 0.0
      %3894 = vmatprep.subr.mxu0 0.0
      %3895 = vmatpush1.msra.mxu0 0.0
      %3896 = vmatprep.subr.mxu0 0.0
      %3897 = vmatpush1.msra.mxu0 0.0
      %3898 = vmatprep.subr.mxu0 0.0
      %3899 = vmatpush1.msra.mxu0 0.0
      %3900 = vmatprep.subr.mxu0 0.0
      %3901 = vmatpush1.msra.mxu0 0.0
      %3902 = vmatprep.subr.mxu0 0.0
      %3903 = vmatpush1.msra.mxu0 0.0
      %3904 = vmatprep.subr.mxu0 0.0
      %3905 = vmatpush1.msra.mxu0 0.0
      %3906 = vmatprep.subr.mxu0 0.0
      %3907 = vmatpush1.msra.mxu0 0.0
      %3908 = vmatprep.subr.mxu0 0.0
      %3909 = vmatpush1.msra.mxu0 0.0
      %3910 = vmatprep.subr.mxu0 0.0
      %3911 = vmatpush1.msra.mxu0 %v3875
      %3912 = vmatprep.subr.mxu0 0.0
      %3913 = vmatpush2.msra.mxu0 0.0
      %3914 = vmatprep.subr.mxu0 0.0
      %3915 = vmatpush2.msra.mxu0 0.0
      %3916 = vmatprep.subr.mxu0 0.0
      %3917 = vmatpush2.msra.mxu0 0.0
      %3918 = vmatprep.subr.mxu0 0.0
      %3919 = vmatpush2.msra.mxu0 0.0
      %3920 = vmatprep.subr.mxu0 0.0
      %3921 = vmatpush2.msra.mxu0 0.0
      %3922 = vmatprep.subr.mxu0 0.0
      %3923 = vmatpush2.msra.mxu0 0.0
      %3924 = vmatprep.subr.mxu0 0.0
      %3925 = vmatpush2.msra.mxu0 0.0
      %3926 = vmatprep.subr.mxu0 0.0
      %3927 = vmatpush2.msra.mxu0 0.0
      %3928 = vmatprep.subr.mxu0 0.0
      %3929 = vmatpush2.msra.mxu0 0.0
      %3930 = vmatprep.subr.mxu0 0.0
      %3931 = vmatpush2.msra.mxu0 0.0
      %3932 = vmatprep.subr.mxu0 0.0
      %3933 = vmatpush2.msra.mxu0 0.0
      %3934 = vmatprep.subr.mxu0 0.0
      %3935 = vmatpush2.msra.mxu0 0.0
      %3936 = vmatprep.subr.mxu0 0.0
      %3937 = vmatpush2.msra.mxu0 0.0
      %3938 = vmatprep.subr.mxu0 0.0
      %3939 = vmatpush2.msra.mxu0 0.0
      %3940 = vmatprep.subr.mxu0 0.0
      %3941 = vmatpush2.msra.mxu0 0.0
      %3942 = vmatprep.subr.mxu0 0.0
      %3943 = vmatpush2.msra.mxu0 0.0
      %3944 = vmatprep.mubr.f32.mxu0 0.0
      %3945 = vmatmul.mubr.f32.gmra.mxu0 %v3878
      %v3946 = vpop.f32.mrf.mxu0
      %v3947 = vadd.f32 0.0, %v3946
      %v3948 = vpop.f32.mrf.mxu0
      %3949 = vdwg.mxu0
      %3950 = vrot.lane.b32.xlu0 %v2701, 40
      %v3951 = vpop.permute.xlu0 %3950
      %v3954 = vsel %vm884, %v3873, 0
      %3956 = vmatprep.subr.mxu0 0.0
      %3957 = vmatpush1.msra.mxu0 0.0
      %3958 = vmatprep.subr.mxu0 0.0
      %3959 = vmatpush1.msra.mxu0 0.0
      %3960 = vmatprep.subr.mxu0 0.0
      %3961 = vmatpush1.msra.mxu0 0.0
      %3962 = vmatprep.subr.mxu0 0.0
      %3963 = vmatpush1.msra.mxu0 0.0
      %3964 = vmatprep.subr.mxu0 0.0
      %3965 = vmatpush1.msra.mxu0 0.0
      %3966 = vmatprep.subr.mxu0 0.0
      %3967 = vmatpush1.msra.mxu0 0.0
      %3968 = vmatprep.subr.mxu0 0.0
      %3969 = vmatpush1.msra.mxu0 0.0
      %3970 = vmatprep.subr.mxu0 0.0
      %3971 = vmatpush1.msra.mxu0 0.0
      %3972 = vmatprep.subr.mxu0 0.0
      %3973 = vmatpush1.msra.mxu0 0.0
      %3974 = vmatprep.subr.mxu0 0.0
      %3975 = vmatpush1.msra.mxu0 0.0
      %3976 = vmatprep.subr.mxu0 0.0
      %3977 = vmatpush1.msra.mxu0 0.0
      %3978 = vmatprep.subr.mxu0 0.0
      %3979 = vmatpush1.msra.mxu0 0.0
      %3980 = vmatprep.subr.mxu0 0.0
      %3981 = vmatpush1.msra.mxu0 0.0
      %3982 = vmatprep.subr.mxu0 0.0
      %3983 = vmatpush1.msra.mxu0 0.0
      %3984 = vmatprep.subr.mxu0 0.0
      %3985 = vmatpush1.msra.mxu0 0.0
      %3986 = vmatprep.subr.mxu0 0.0
      %3987 = vmatpush1.msra.mxu0 %v3951
      %3988 = vmatprep.subr.mxu0 0.0
      %3989 = vmatpush2.msra.mxu0 0.0
      %3990 = vmatprep.subr.mxu0 0.0
      %3991 = vmatpush2.msra.mxu0 0.0
      %3992 = vmatprep.subr.mxu0 0.0
      %3993 = vmatpush2.msra.mxu0 0.0
      %3994 = vmatprep.subr.mxu0 0.0
      %3995 = vmatpush2.msra.mxu0 0.0
      %3996 = vmatprep.subr.mxu0 0.0
      %3997 = vmatpush2.msra.mxu0 0.0
      %3998 = vmatprep.subr.mxu0 0.0
      %3999 = vmatpush2.msra.mxu0 0.0
      %4000 = vmatprep.subr.mxu0 0.0
      %4001 = vmatpush2.msra.mxu0 0.0
      %4002 = vmatprep.subr.mxu0 0.0
      %4003 = vmatpush2.msra.mxu0 0.0
      %4004 = vmatprep.subr.mxu0 0.0
      %4005 = vmatpush2.msra.mxu0 0.0
      %4006 = vmatprep.subr.mxu0 0.0
      %4007 = vmatpush2.msra.mxu0 0.0
      %4008 = vmatprep.subr.mxu0 0.0
      %4009 = vmatpush2.msra.mxu0 0.0
      %4010 = vmatprep.subr.mxu0 0.0
      %4011 = vmatpush2.msra.mxu0 0.0
      %4012 = vmatprep.subr.mxu0 0.0
      %4013 = vmatpush2.msra.mxu0 0.0
      %4014 = vmatprep.subr.mxu0 0.0
      %4015 = vmatpush2.msra.mxu0 0.0
      %4016 = vmatprep.subr.mxu0 0.0
      %4017 = vmatpush2.msra.mxu0 0.0
      %4018 = vmatprep.subr.mxu0 0.0
      %4019 = vmatpush2.msra.mxu0 0.0
      %4020 = vmatprep.mubr.f32.mxu0 0.0
      %4021 = vmatmul.mubr.f32.gmra.mxu0 %v3954
      %v4022 = vpop.f32.mrf.mxu0
      %v4023 = vadd.f32 0.0, %v4022
      %v4024 = vpop.f32.mrf.mxu0
      %4025 = vdwg.mxu0
      %4028 = vrot.lane.b32.xlu0 %v3287, 8
      %v4029 = vpop.permute.xlu0 %4028
      %4030 = vrot.lane.b32.xlu0 %v3363, 8
      %v4031 = vpop.permute.xlu0 %4030
      %4036 = vrot.lane.b32.xlu0 %v3617, 16
      %v4037 = vpop.permute.xlu0 %4036
      %4038 = vrot.lane.b32.xlu0 %v3693, 16
      %v4039 = vpop.permute.xlu0 %4038
      %4044 = vrot.lane.b32.xlu0 %v3947, 24
      %v4045 = vpop.permute.xlu0 %4044
      %4046 = vrot.lane.b32.xlu0 %v4023, 24
      %v4047 = vpop.permute.xlu0 %4046
      %v4050 = vsel %vm884, %v2957, %v4029
      %v4051 = vsel %vm884, %v3033, %v4031
      %v4052 = vsel %vm2228, %v4050, %v4037
      %v4053 = vsel %vm2228, %v4051, %v4039
      %v4054 = vsel %vm2231, %v4052, %v4045
      %v4055 = vsel %vm2231, %v4053, %v4047
      %s4056 = scalar_lea.vmem %s732, 32
      %v4057 = vld [vmem:[%s4056] sm:$0xff]
      %v4058 = vld [vmem:[%s4056 + $0x8] sm:$0xff]
      %v4059 = vld [vmem:[%s4056 + $0x10] sm:$0xff]
      %v4060 = vld [vmem:[%s4056 + $0x18] sm:$0xff]
      %s4061 = scalar_lea.vmem %s736, 1
      %v4062 = vld [vmem:[%s4061] sm:$0x1]
      %v4064 = vlaneseq
      %v4065 = vshrl.u32 %v4064, 7
      %v4066 = vsub.s32 0, %v4065
      %v4067 = vrot.slane %v4062, %v4066
      %v4070 = vsel %vm797, %v4054, 0
      %v4073 = vsel %vm797, %v4055, 0
      %4075 = vmatprep.subr.mxu0 0.0
      %4076 = vmatpush1.msra.mxu0 0.0
      %4077 = vmatprep.subr.mxu0 0.0
      %4078 = vmatpush1.msra.mxu0 0.0
      %4079 = vmatprep.subr.mxu0 0.0
      %4080 = vmatpush1.msra.mxu0 0.0
      %4081 = vmatprep.subr.mxu0 0.0
      %4082 = vmatpush1.msra.mxu0 0.0
      %4083 = vmatprep.subr.mxu0 0.0
      %4084 = vmatpush1.msra.mxu0 0.0
      %4085 = vmatprep.subr.mxu0 0.0
      %4086 = vmatpush1.msra.mxu0 0.0
      %4087 = vmatprep.subr.mxu0 0.0
      %4088 = vmatpush1.msra.mxu0 0.0
      %4089 = vmatprep.subr.mxu0 0.0
      %4090 = vmatpush1.msra.mxu0 0.0
      %4091 = vmatprep.subr.mxu0 0.0
      %4092 = vmatpush1.msra.mxu0 0.0
      %4093 = vmatprep.subr.mxu0 0.0
      %4094 = vmatpush1.msra.mxu0 0.0
      %4095 = vmatprep.subr.mxu0 0.0
      %4096 = vmatpush1.msra.mxu0 0.0
      %4097 = vmatprep.subr.mxu0 0.0
      %4098 = vmatpush1.msra.mxu0 0.0
      %4099 = vmatprep.subr.mxu0 0.0
      %4100 = vmatpush1.msra.mxu0 %v4060
      %4101 = vmatprep.subr.mxu0 0.0
      %4102 = vmatpush1.msra.mxu0 %v4059
      %4103 = vmatprep.subr.mxu0 0.0
      %4104 = vmatpush1.msra.mxu0 %v4058
      %4105 = vmatprep.subr.mxu0 0.0
      %4106 = vmatpush1.msra.mxu0 %v4057
      %4107 = vmatprep.subr.mxu0 0.0
      %4108 = vmatpush2.msra.mxu0 0.0
      %4109 = vmatprep.subr.mxu0 0.0
      %4110 = vmatpush2.msra.mxu0 0.0
      %4111 = vmatprep.subr.mxu0 0.0
      %4112 = vmatpush2.msra.mxu0 0.0
      %4113 = vmatprep.subr.mxu0 0.0
      %4114 = vmatpush2.msra.mxu0 0.0
      %4115 = vmatprep.subr.mxu0 0.0
      %4116 = vmatpush2.msra.mxu0 0.0
      %4117 = vmatprep.subr.mxu0 0.0
      %4118 = vmatpush2.msra.mxu0 0.0
      %4119 = vmatprep.subr.mxu0 0.0
      %4120 = vmatpush2.msra.mxu0 0.0
      %4121 = vmatprep.subr.mxu0 0.0
      %4122 = vmatpush2.msra.mxu0 0.0
      %4123 = vmatprep.subr.mxu0 0.0
      %4124 = vmatpush2.msra.mxu0 0.0
      %4125 = vmatprep.subr.mxu0 0.0
      %4126 = vmatpush2.msra.mxu0 0.0
      %4127 = vmatprep.subr.mxu0 0.0
      %4128 = vmatpush2.msra.mxu0 0.0
      %4129 = vmatprep.subr.mxu0 0.0
      %4130 = vmatpush2.msra.mxu0 0.0
      %4131 = vmatprep.subr.mxu0 0.0
      %4132 = vmatpush2.msra.mxu0 0.0
      %4133 = vmatprep.subr.mxu0 0.0
      %4134 = vmatpush2.msra.mxu0 0.0
      %4135 = vmatprep.subr.mxu0 0.0
      %4136 = vmatpush2.msra.mxu0 0.0
      %4137 = vmatprep.subr.mxu0 0.0
      %4138 = vmatpush2.msra.mxu0 0.0
      %4139 = vmatprep.mubr.f32.mxu0 0.0
      %4140 = vmatmul.mubr.f32.gmra.mxu0 %v4070
      %v4141 = vpop.f32.mrf.mxu0
      %v4142 = vadd.f32 %v4067, %v4141
      %v4143 = vpop.f32.mrf.mxu0
      %4144 = vmatprep.mubr.f32.mxu0 0.0
      %4145 = vmatmul.mubr.f32.gmra.mxu0 %v4073
      %v4146 = vpop.f32.mrf.mxu0
      %v4147 = vadd.f32 %v4067, %v4146
      %v4148 = vpop.f32.mrf.mxu0
      %4149 = vdwg.mxu0
      %v4150 = vadd.f32 %v2608, %v4142
      %v4151 = vadd.f32 %v2609, %v4147
      %s4152 = scalar_lea.vmem %s758, 1
      %v4153 = vld [vmem:[%s4152] sm:$0x1]
      %s4154 = scalar_lea.vmem %s762, 1
      %v4155 = vld [vmem:[%s4154] sm:$0x1]
      %v4156 = vsel %vm797, %v4150, 0.0
      %4157 = vadd.xlane.f32.xlu0 %v4156
      %v4158 = vpop.xlane.xlu0 %4157
      %v4159 = vsel %vm797, %v4151, 0.0
      %4160 = vadd.xlane.f32.xlu0 %v4159
      %v4161 = vpop.xlane.xlu0 %4160
      %v4162 = vmul.f32 %v4158, %v2336
      %v4163 = vmul.f32 %v4161, %v2336
      %v4164 = vsub.f32 %v4150, %v4162
      %v4165 = vsub.f32 %v4151, %v4163
      %v4166 = vmul.f32 %v4164, %v4164
      %v4167 = vmul.f32 %v4165, %v4165
      %v4168 = vsel %vm797, %v4166, 0.0
      %4169 = vadd.xlane.f32.xlu0 %v4168
      %v4170 = vpop.xlane.xlu0 %4169
      %v4171 = vsel %vm797, %v4167, 0.0
      %4172 = vadd.xlane.f32.xlu0 %v4171
      %v4173 = vpop.xlane.xlu0 %4172
      %v4174 = vmul.f32 %v4170, %v2336
      %v4175 = vmul.f32 %v4173, %v2336
      %v4176 = vadd.f32 %v4174, 1e-05
      %v4177 = vadd.f32 %v4175, 1e-05
      %v4178 = vrsqrt.pop %v4176
      %v4179 = vrsqrt.pop %v4177
      %v4180 = vmul.f32 %v4164, %v4178
      %v4181 = vmul.f32 %v4165, %v4179
      %v4183 = vlaneseq
      %v4184 = vshrl.u32 %v4183, 7
      %v4185 = vsub.s32 0, %v4184
      %v4186 = vrot.slane %v4153, %v4185
      %v4188 = vmul.f32 %v4180, %v4186
      %v4189 = vmul.f32 %v4181, %v4186
      %v4191 = vlaneseq
      %v4192 = vshrl.u32 %v4191, 7
      %v4193 = vsub.s32 0, %v4192
      %v4194 = vrot.slane %v4155, %v4193
      %v4196 = vadd.f32 %v4188, %v4194
      %v4197 = vadd.f32 %v4189, %v4194
      %s4198 = scalar_lea.vmem %s741, 32
      %v4199 = vld [vmem:[%s4198] sm:$0xff]
      %v4200 = vld [vmem:[%s4198 + $0x8] sm:$0xff]
      %v4201 = vld [vmem:[%s4198 + $0x10] sm:$0xff]
      %v4202 = vld [vmem:[%s4198 + $0x18] sm:$0xff]
      %s4203 = scalar_lea.vmem %s745, 1
      %v4204 = vld [vmem:[%s4203] sm:$0x1]
      %v4206 = vlaneseq
      %v4207 = vshrl.u32 %v4206, 7
      %v4208 = vsub.s32 0, %v4207
      %v4209 = vrot.slane %v4204, %v4208
      %v4212 = vsel %vm797, %v4196, 0
      %v4215 = vsel %vm797, %v4197, 0
      %4217 = vmatprep.subr.mxu0 0.0
      %4218 = vmatpush1.msra.mxu0 0.0
      %4219 = vmatprep.subr.mxu0 0.0
      %4220 = vmatpush1.msra.mxu0 0.0
      %4221 = vmatprep.subr.mxu0 0.0
      %4222 = vmatpush1.msra.mxu0 0.0
      %4223 = vmatprep.subr.mxu0 0.0
      %4224 = vmatpush1.msra.mxu0 0.0
      %4225 = vmatprep.subr.mxu0 0.0
      %4226 = vmatpush1.msra.mxu0 0.0
      %4227 = vmatprep.subr.mxu0 0.0
      %4228 = vmatpush1.msra.mxu0 0.0
      %4229 = vmatprep.subr.mxu0 0.0
      %4230 = vmatpush1.msra.mxu0 0.0
      %4231 = vmatprep.subr.mxu0 0.0
      %4232 = vmatpush1.msra.mxu0 0.0
      %4233 = vmatprep.subr.mxu0 0.0
      %4234 = vmatpush1.msra.mxu0 0.0
      %4235 = vmatprep.subr.mxu0 0.0
      %4236 = vmatpush1.msra.mxu0 0.0
      %4237 = vmatprep.subr.mxu0 0.0
      %4238 = vmatpush1.msra.mxu0 0.0
      %4239 = vmatprep.subr.mxu0 0.0
      %4240 = vmatpush1.msra.mxu0 0.0
      %4241 = vmatprep.subr.mxu0 0.0
      %4242 = vmatpush1.msra.mxu0 %v4202
      %4243 = vmatprep.subr.mxu0 0.0
      %4244 = vmatpush1.msra.mxu0 %v4201
      %4245 = vmatprep.subr.mxu0 0.0
      %4246 = vmatpush1.msra.mxu0 %v4200
      %4247 = vmatprep.subr.mxu0 0.0
      %4248 = vmatpush1.msra.mxu0 %v4199
      %4249 = vmatprep.subr.mxu0 0.0
      %4250 = vmatpush2.msra.mxu0 0.0
      %4251 = vmatprep.subr.mxu0 0.0
      %4252 = vmatpush2.msra.mxu0 0.0
      %4253 = vmatprep.subr.mxu0 0.0
      %4254 = vmatpush2.msra.mxu0 0.0
      %4255 = vmatprep.subr.mxu0 0.0
      %4256 = vmatpush2.msra.mxu0 0.0
      %4257 = vmatprep.subr.mxu0 0.0
      %4258 = vmatpush2.msra.mxu0 0.0
      %4259 = vmatprep.subr.mxu0 0.0
      %4260 = vmatpush2.msra.mxu0 0.0
      %4261 = vmatprep.subr.mxu0 0.0
      %4262 = vmatpush2.msra.mxu0 0.0
      %4263 = vmatprep.subr.mxu0 0.0
      %4264 = vmatpush2.msra.mxu0 0.0
      %4265 = vmatprep.subr.mxu0 0.0
      %4266 = vmatpush2.msra.mxu0 0.0
      %4267 = vmatprep.subr.mxu0 0.0
      %4268 = vmatpush2.msra.mxu0 0.0
      %4269 = vmatprep.subr.mxu0 0.0
      %4270 = vmatpush2.msra.mxu0 0.0
      %4271 = vmatprep.subr.mxu0 0.0
      %4272 = vmatpush2.msra.mxu0 0.0
      %4273 = vmatprep.subr.mxu0 0.0
      %4274 = vmatpush2.msra.mxu0 0.0
      %4275 = vmatprep.subr.mxu0 0.0
      %4276 = vmatpush2.msra.mxu0 0.0
      %4277 = vmatprep.subr.mxu0 0.0
      %4278 = vmatpush2.msra.mxu0 0.0
      %4279 = vmatprep.subr.mxu0 0.0
      %4280 = vmatpush2.msra.mxu0 0.0
      %4281 = vmatprep.mubr.f32.mxu0 0.0
      %4282 = vmatmul.mubr.f32.gmra.mxu0 %v4212
      %v4283 = vpop.f32.mrf.mxu0
      %v4284 = vadd.f32 %v4209, %v4283
      %v4285 = vpop.f32.mrf.mxu0
      %4286 = vmatprep.mubr.f32.mxu0 0.0
      %4287 = vmatmul.mubr.f32.gmra.mxu0 %v4215
      %v4288 = vpop.f32.mrf.mxu0
      %v4289 = vadd.f32 %v4209, %v4288
      %v4290 = vpop.f32.mrf.mxu0
      %4291 = vdwg.mxu0
      %v4292 = vmax.f32 %v4284, 0.0
      %v4293 = vmax.f32 %v4289, 0.0
      %s4294 = scalar_lea.vmem %s750, 64
      %v4295 = vld [vmem:[%s4294] sm:$0xff]
      %v4296 = vld [vmem:[%s4294 + $0x8] sm:$0xff]
      %v4297 = vld [vmem:[%s4294 + $0x10] sm:$0xff]
      %v4298 = vld [vmem:[%s4294 + $0x18] sm:$0xff]
      %v4299 = vld [vmem:[%s4294 + $0x20] sm:$0xff]
      %v4300 = vld [vmem:[%s4294 + $0x28] sm:$0xff]
      %v4301 = vld [vmem:[%s4294 + $0x30] sm:$0xff]
      %v4302 = vld [vmem:[%s4294 + $0x38] sm:$0xff]
      %s4303 = scalar_lea.vmem %s754, 1
      %v4304 = vld [vmem:[%s4303] sm:$0x1]
      %v4306 = vlaneseq
      %v4307 = vshrl.u32 %v4306, 7
      %v4308 = vsub.s32 0, %v4307
      %v4309 = vrot.slane %v4304, %v4308
      %v4312 = vsel %vm2482, %v4292, 0
      %v4315 = vsel %vm2482, %v4293, 0
      %4317 = vmatprep.subr.mxu0 0.0
      %4318 = vmatpush1.msra.mxu0 0.0
      %4319 = vmatprep.subr.mxu0 0.0
      %4320 = vmatpush1.msra.mxu0 0.0
      %4321 = vmatprep.subr.mxu0 0.0
      %4322 = vmatpush1.msra.mxu0 0.0
      %4323 = vmatprep.subr.mxu0 0.0
      %4324 = vmatpush1.msra.mxu0 0.0
      %4325 = vmatprep.subr.mxu0 0.0
      %4326 = vmatpush1.msra.mxu0 0.0
      %4327 = vmatprep.subr.mxu0 0.0
      %4328 = vmatpush1.msra.mxu0 0.0
      %4329 = vmatprep.subr.mxu0 0.0
      %4330 = vmatpush1.msra.mxu0 0.0
      %4331 = vmatprep.subr.mxu0 0.0
      %4332 = vmatpush1.msra.mxu0 0.0
      %4333 = vmatprep.subr.mxu0 0.0
      %4334 = vmatpush1.msra.mxu0 %v4302
      %4335 = vmatprep.subr.mxu0 0.0
      %4336 = vmatpush1.msra.mxu0 %v4301
      %4337 = vmatprep.subr.mxu0 0.0
      %4338 = vmatpush1.msra.mxu0 %v4300
      %4339 = vmatprep.subr.mxu0 0.0
      %4340 = vmatpush1.msra.mxu0 %v4299
      %4341 = vmatprep.subr.mxu0 0.0
      %4342 = vmatpush1.msra.mxu0 %v4298
      %4343 = vmatprep.subr.mxu0 0.0
      %4344 = vmatpush1.msra.mxu0 %v4297
      %4345 = vmatprep.subr.mxu0 0.0
      %4346 = vmatpush1.msra.mxu0 %v4296
      %4347 = vmatprep.subr.mxu0 0.0
      %4348 = vmatpush1.msra.mxu0 %v4295
      %4349 = vmatprep.subr.mxu0 0.0
      %4350 = vmatpush2.msra.mxu0 0.0
      %4351 = vmatprep.subr.mxu0 0.0
      %4352 = vmatpush2.msra.mxu0 0.0
      %4353 = vmatprep.subr.mxu0 0.0
      %4354 = vmatpush2.msra.mxu0 0.0
      %4355 = vmatprep.subr.mxu0 0.0
      %4356 = vmatpush2.msra.mxu0 0.0
      %4357 = vmatprep.subr.mxu0 0.0
      %4358 = vmatpush2.msra.mxu0 0.0
      %4359 = vmatprep.subr.mxu0 0.0
      %4360 = vmatpush2.msra.mxu0 0.0
      %4361 = vmatprep.subr.mxu0 0.0
      %4362 = vmatpush2.msra.mxu0 0.0
      %4363 = vmatprep.subr.mxu0 0.0
      %4364 = vmatpush2.msra.mxu0 0.0
      %4365 = vmatprep.subr.mxu0 0.0
      %4366 = vmatpush2.msra.mxu0 0.0
      %4367 = vmatprep.subr.mxu0 0.0
      %4368 = vmatpush2.msra.mxu0 0.0
      %4369 = vmatprep.subr.mxu0 0.0
      %4370 = vmatpush2.msra.mxu0 0.0
      %4371 = vmatprep.subr.mxu0 0.0
      %4372 = vmatpush2.msra.mxu0 0.0
      %4373 = vmatprep.subr.mxu0 0.0
      %4374 = vmatpush2.msra.mxu0 0.0
      %4375 = vmatprep.subr.mxu0 0.0
      %4376 = vmatpush2.msra.mxu0 0.0
      %4377 = vmatprep.subr.mxu0 0.0
      %4378 = vmatpush2.msra.mxu0 0.0
      %4379 = vmatprep.subr.mxu0 0.0
      %4380 = vmatpush2.msra.mxu0 0.0
      %4381 = vmatprep.mubr.f32.mxu0 0.0
      %4382 = vmatmul.mubr.f32.gmra.mxu0 %v4312
      %v4383 = vpop.f32.mrf.mxu0
      %v4384 = vadd.f32 %v4309, %v4383
      %v4385 = vpop.f32.mrf.mxu0
      %4386 = vmatprep.mubr.f32.mxu0 0.0
      %4387 = vmatmul.mubr.f32.gmra.mxu0 %v4315
      %v4388 = vpop.f32.mrf.mxu0
      %v4389 = vadd.f32 %v4309, %v4388
      %v4390 = vpop.f32.mrf.mxu0
      %4391 = vdwg.mxu0
      %v4392 = vadd.f32 %v4196, %v4384
      %v4393 = vadd.f32 %v4197, %v4389
      %s4394 = scalar_lea.vmem %s766, 1
      %v4395 = vld [vmem:[%s4394] sm:$0x1]
      %s4396 = scalar_lea.vmem %s770, 1
      %v4397 = vld [vmem:[%s4396] sm:$0x1]
      %v4398 = vsel %vm797, %v4392, 0.0
      %4399 = vadd.xlane.f32.xlu0 %v4398
      %v4400 = vpop.xlane.xlu0 %4399
      %v4401 = vsel %vm797, %v4393, 0.0
      %4402 = vadd.xlane.f32.xlu0 %v4401
      %v4403 = vpop.xlane.xlu0 %4402
      %v4404 = vmul.f32 %v4400, %v2336
      %v4405 = vmul.f32 %v4403, %v2336
      %v4406 = vsub.f32 %v4392, %v4404
      %v4407 = vsub.f32 %v4393, %v4405
      %v4408 = vmul.f32 %v4406, %v4406
      %v4409 = vmul.f32 %v4407, %v4407
      %v4410 = vsel %vm797, %v4408, 0.0
      %4411 = vadd.xlane.f32.xlu0 %v4410
      %v4412 = vpop.xlane.xlu0 %4411
      %v4413 = vsel %vm797, %v4409, 0.0
      %4414 = vadd.xlane.f32.xlu0 %v4413
      %v4415 = vpop.xlane.xlu0 %4414
      %v4416 = vmul.f32 %v4412, %v2336
      %v4417 = vmul.f32 %v4415, %v2336
      %v4418 = vadd.f32 %v4416, 1e-05
      %v4419 = vadd.f32 %v4417, 1e-05
      %v4420 = vrsqrt.pop %v4418
      %v4421 = vrsqrt.pop %v4419
      %v4422 = vmul.f32 %v4406, %v4420
      %v4423 = vmul.f32 %v4407, %v4421
      %v4425 = vlaneseq
      %v4426 = vshrl.u32 %v4425, 7
      %v4427 = vsub.s32 0, %v4426
      %v4428 = vrot.slane %v4395, %v4427
      %v4430 = vmul.f32 %v4422, %v4428
      %v4431 = vmul.f32 %v4423, %v4428
      %v4433 = vlaneseq
      %v4434 = vshrl.u32 %v4433, 7
      %v4435 = vsub.s32 0, %v4434
      %v4436 = vrot.slane %v4397, %v4435
      %v4438 = vadd.f32 %v4430, %v4436
      %v4439 = vadd.f32 %v4431, %v4436
      %v4440 = vld [vmem:[%s773] sm:$0x1]
      %v4441 = vld [vmem:[%s776] sm:$0x1]
      %v4442 = vsel %vm797, %v4438, 0.0
      %4443 = vadd.xlane.f32.xlu0 %v4442
      %v4444 = vpop.xlane.xlu0 %4443
      %v4445 = vsel %vm797, %v4439, 0.0
      %4446 = vadd.xlane.f32.xlu0 %v4445
      %v4447 = vpop.xlane.xlu0 %4446
      %v4448 = vmul.f32 %v4444, %v2336
      %v4449 = vmul.f32 %v4447, %v2336
      %v4450 = vsub.f32 %v4438, %v4448
      %v4451 = vsub.f32 %v4439, %v4449
      %v4452 = vmul.f32 %v4450, %v4450
      %v4453 = vmul.f32 %v4451, %v4451
      %v4454 = vsel %vm797, %v4452, 0.0
      %4455 = vadd.xlane.f32.xlu0 %v4454
      %v4456 = vpop.xlane.xlu0 %4455
      %v4457 = vsel %vm797, %v4453, 0.0
      %4458 = vadd.xlane.f32.xlu0 %v4457
      %v4459 = vpop.xlane.xlu0 %4458
      %v4460 = vmul.f32 %v4456, %v2336
      %v4461 = vmul.f32 %v4459, %v2336
      %v4462 = vadd.f32 %v4460, 1e-05
      %v4463 = vadd.f32 %v4461, 1e-05
      %v4464 = vrsqrt.pop %v4462
      %v4465 = vrsqrt.pop %v4463
      %v4466 = vmul.f32 %v4450, %v4464
      %v4467 = vmul.f32 %v4451, %v4465
      %v4469 = vlaneseq
      %v4470 = vshrl.u32 %v4469, 7
      %v4471 = vsub.s32 0, %v4470
      %v4472 = vrot.slane %v4440, %v4471
      %v4474 = vmul.f32 %v4466, %v4472
      %v4475 = vmul.f32 %v4467, %v4472
      %v4477 = vlaneseq
      %v4478 = vshrl.u32 %v4477, 7
      %v4479 = vsub.s32 0, %v4478
      %v4480 = vrot.slane %v4441, %v4479
      %v4482 = vadd.f32 %v4474, %v4480
      %v4483 = vadd.f32 %v4475, %v4480
      %v4484 = vmul.f32 %v4482, %v4482
      %v4485 = vmul.f32 %v4483, %v4483
      %v4488 = vrot.slane %v4485, 7
      %vm4489 = vcmask 1045509
      %v4490 = vsel %vm4489, %v4488, %v4484
      %vm4492 = vcmask 259076
      %v4493 = vsel %vm4492, %v4490, 0.0
      %4494 = vadd.xlane.f32.xlu0 %v4493
      %v4495 = vpop.xlane.xlu0 %4494
      %v4496 = vmax.f32 %v4495, 1e-24
      %v4497 = vrsqrt.pop %v4496
      %v4499 = vrot.slane %v4497, 1
      %v4502 = vmul.f32 %v4482, %v4497
      %v4503 = vmul.f32 %v4483, %v4499
      %v4506 = vrot.slane %v4503, 7
      %v4507 = vsel %vm4489, %v4506, %v4502
      %4509 = vst.msk [vmem:[%s780 - $0x4] sm:$0x30] %vm4492, %v4507
      %p4510 = scmp.lt.s32.totalorder %s27, 1
      %s4511 = scalar_select %p4510, %s27, 1
      %s4512 = smul.addr %s4511, 2
      %s4513 = scalar_lea.vmem %s16, %s4512
      // Predicated region
      $region85: #{contra_forward.1} parent=83 // pred_check
        %p4514 = pneg %p461
      $region86: #{contra_forward.1} parent=83 // pred_check_branch
        %4516 = sbr.rel (%p4514) target = $region88
      $region87: #{contra_forward.1} parent=83 // pred_region
        _
      $region88: #{contra_forward.1} parent=83 // pred_fallthru
        _
    $region84: #{contra_forward.1} parent=5 // pred_fallthru
      _
    %p4517 = scmp.le.s32.totalorder 2, %s22
    // Predicated region
    $region89: #{contra_forward.1} parent=5 // pred_check
      %p4518 = pneg %p4517
    $region90: #{contra_forward.1} parent=5 // pred_check_branch
      %4520 = sbr.rel (%p4518) target = $region92
    $region91: #{contra_forward.1} parent=5 // pred_region
      %s4521 = ssub.s32 %s22, 2
      // Predicated region
      $region93: #{contra_forward.1} parent=91 // pred_check
        %p4522 = pneg %p467
      $region94: #{contra_forward.1} parent=91 // pred_check_branch
        %4524 = sbr.rel (%p4522) target = $region96
      $region95: #{contra_forward.1} parent=91 // pred_region
        %p4525 = scmp.lt.s32.totalorder %s28, 1
        %s4526 = scalar_select %p4525, %s28, 1
        %s4527 = smul.addr %s4526, 2
        %s4528 = scalar_lea.vmem %s16, %s4527
      $region96: #{contra_forward.1} parent=91 // pred_fallthru
        _
    $region92: #{contra_forward.1} parent=5 // pred_fallthru
      _
  $region6: #{contra_forward.1} parent=0 // loop_footer
    %s26 = sadd.s32 1, %s22
  $region7: #{contra_forward.1} parent=0 // loop_footer_branch
    %21 = sbr.rel target = $region3
  $region8: #{contra_forward.1} parent=0 // loop_exit
    _

</llo_original>
